<compile_context>
chip_gen: v5e
topology: v5e:2x2
jax: 0.10.0
libtpu: 0.0.40
codegen_flags: <defaults>
</compile_context>

<pallas_src>
import math

import jax
import jax.numpy as jnp
from jax import lax
from jax.experimental import pallas as pl
from jax.experimental.pallas import tpu as pltpu


# ----------------------------- in-kernel helpers -----------------------------

def _pool_rows(y, hout):
    """(2*hout, L) -> (hout, L): max over consecutive row pairs (static slices only)."""
    rows = [jnp.maximum(y[2 * i:2 * i + 1, :], y[2 * i + 1:2 * i + 2, :])
            for i in range(hout)]
    return jnp.concatenate(rows, axis=0)


def _pool_cols(y, wout, c):
    """(H, 2*wout*c) with lanes ordered (w, c) -> (H, wout*c): max over w pairs."""
    cols = [jnp.maximum(y[:, (2 * w) * c:(2 * w + 1) * c],
                        y[:, (2 * w + 1) * c:(2 * w + 2) * c])
            for w in range(wout)]
    return jnp.concatenate(cols, axis=1)


# ------------------------------- fused kernel --------------------------------

def _cnn_fused_kernel(x_ref, w1_ref, b1_ref, w2_ref, b2_ref, w3_ref, b3_ref,
                      logits_ref, feat_ref, xpad, p1pad):
    f32 = jnp.float32

    # ---------------- stage 1: conv1 (5x5, pad 2) + ReLU + 2x2 maxpool ----------------
    # zero-padded input slab: rows = padded h (32), lanes = padded w (32)
    xpad[...] = jnp.zeros_like(xpad)
    xpad[2:30, 2:30] = x_ref[...]

    # xslab[h, kh*32 + j] = xpad[h+kh, j]                      -> (28, 160)
    xslab = jnp.concatenate([xpad[kh:kh + 28, :] for kh in range(5)], axis=1)

    # banded conv-as-matmul: y1[h, w*16 + co]                  -> (28, 448) lane dense
    y1 = jnp.dot(xslab, w1_ref[...], preferred_element_type=f32) + b1_ref[...]
    y1 = jnp.maximum(y1, 0.0)

    h1 = _pool_rows(y1, 14)            # (14, 448)  max over h pairs
    p1 = _pool_cols(h1, 14, 16)        # (14, 224)  max over w pairs; cols = wp*16 + ci

    # ---------------- stage 2: conv2 (5x5, pad 2) + ReLU + 2x2 maxpool ----------------
    # zero-padded slab: rows = padded h (18), lanes = (padded w, ci) = 18*16 = 288
    p1pad[...] = jnp.zeros_like(p1pad)
    p1pad[2:16, 32:256] = p1

    # xslab2[h, kh*288 + j*16 + ci] = p1pad[h+kh, j*16 + ci]   -> (14, 1440)
    xslab2 = jnp.concatenate([p1pad[kh:kh + 14, :] for kh in range(5)], axis=1)

    y2 = jnp.dot(xslab2, w2_ref[...], preferred_element_type=f32) + b2_ref[...]
    y2 = jnp.maximum(y2, 0.0)          # (14, 448), cols = w*32 + co

    h2 = _pool_rows(y2, 7)             # (7, 448)
    p2 = _pool_cols(h2, 7, 32)         # (7, 224)   cols = wp*32 + co

    feat_ref[...] = p2                 # slab order (hp, wp, co); reordered in wrapper

    # ---------------- linear head: logits = flat @ w3_slab + b3 ----------------
    acc = b3_ref[...]                  # (1, 10)
    for hp in range(7):
        acc = acc + jnp.dot(p2[hp:hp + 1, :],
                            w3_ref[hp * 224:(hp + 1) * 224, :],
                            preferred_element_type=f32)
    logits_ref[...] = acc


# --------------------------- weight repacking (host) --------------------------

def _banded_conv_weight(w_oihw, w_pad, w_out):
    """Repack conv weight (Cout,Cin,KH,KW) into a banded matmul weight.

    Result shape (KH*w_pad*Cin, w_out*Cout) with
      W[kh*w_pad*Cin + j*Cin + ci, w*Cout + co] = w_oihw[co, ci, kh, j - w]
    when 0 <= j - w < KW, else 0.  Matches the in-kernel (h, kh*w_pad*Cin) slab.
    """
    Cout, Cin, KH, KW = w_oihw.shape
    j = jnp.arange(w_pad)
    w = jnp.arange(w_out)
    diff = j[:, None] - w[None, :]                                  # (w_pad, w_out)
    valid = ((diff >= 0) & (diff < KW)).astype(w_oihw.dtype)
    kw = jnp.clip(diff, 0, KW - 1)
    wt = jnp.transpose(w_oihw, (2, 3, 1, 0))                        # (KH, KW, Cin, Cout)
    big = wt[:, kw, :, :] * valid[None, :, :, None, None]           # (KH, w_pad, w_out, Cin, Cout)
    big = jnp.transpose(big, (0, 1, 3, 2, 4))                       # (KH, w_pad, Cin, w_out, Cout)
    return big.reshape(KH * w_pad * Cin, w_out * Cout)


def prepare_params(params):
    """One-time repack of the torch-layout parameters (call OUTSIDE the jitted forward)."""
    return {
        "w1b": _banded_conv_weight(params["w1"], 32, 28),            # (160, 448)
        "b1b": jnp.tile(params["b1"], 28).reshape(1, 28 * 16),       # (1, 448)
        "w2b": _banded_conv_weight(params["w2"], 18, 14),            # (1440, 448)
        "b2b": jnp.tile(params["b2"], 14).reshape(1, 14 * 32),       # (1, 448)
        # rows ordered (hp, wp, co) to match the in-kernel feature slab
        "w3s": jnp.transpose(params["w3"].reshape(10, 32, 7, 7),
                             (2, 3, 1, 0)).reshape(32 * 7 * 7, 10),  # (1568, 10)
        "b3r": params["b3"].reshape(1, 10),
    }


# --------------------------------- forward -----------------------------------

def cnn_forward(x_nchw, prepped):
    """Mirrors CNN.forward: returns (logits (B,10), flattened features (B,1568))."""
    B = x_nchw.shape[0]
    x = x_nchw.reshape(B, 28, 28).astype(jnp.float32)

    const = lambda b: (0, 0)
    logits3, feat = pl.pallas_call(
        _cnn_fused_kernel,
        out_shape=(jax.ShapeDtypeStruct((B, 1, 10), jnp.float32),
                   jax.ShapeDtypeStruct((B, 7, 224), jnp.float32)),
        grid=(B,),
        in_specs=[
            pl.BlockSpec((None, 28, 28), lambda b: (b, 0, 0)),   # x, one image per step
            pl.BlockSpec((160, 448), const),                     # w1 (banded)
            pl.BlockSpec((1, 448), const),                       # b1 (tiled)
            pl.BlockSpec((1440, 448), const),                    # w2 (banded)
            pl.BlockSpec((1, 448), const),                       # b2 (tiled)
            pl.BlockSpec((1568, 10), const),                     # w3 (slab-ordered)
            pl.BlockSpec((1, 10), const),                        # b3
        ],
        out_specs=(
            pl.BlockSpec((None, 1, 10), lambda b: (b, 0, 0)),    # logits
            pl.BlockSpec((None, 7, 224), lambda b: (b, 0, 0)),   # feature slab
        ),
        scratch_shapes=[
            pltpu.VMEM((32, 32), jnp.float32),                   # padded conv1 input
            pltpu.VMEM((18, 288), jnp.float32),                  # padded conv2 input
        ],
        compiler_params=pltpu.CompilerParams(
            dimension_semantics=("parallel",)),
    )(x, prepped["w1b"], prepped["b1b"], prepped["w2b"], prepped["b2b"],
      prepped["w3s"], prepped["b3r"])

    logits = logits3[:, 0, :]
    # one tiny XLA transpose to present the features in torch's NCHW .view(B,-1) order
    flat = feat.reshape(B, 7, 7, 32).transpose(0, 3, 1, 2).reshape(B, -1)
    return logits, flat


# ------------------------------ parameter init --------------------------------

def init_params(key):
    ks = jax.random.split(key, 6)

    def u(k, shape, fan_in):
        bound = 1.0 / math.sqrt(fan_in)
        return jax.random.uniform(k, shape, jnp.float32, -bound, bound)

    return {
        "w1": u(ks[0], (16, 1, 5, 5), 1 * 5 * 5),
        "b1": u(ks[1], (16,), 1 * 5 * 5),
        "w2": u(ks[2], (32, 16, 5, 5), 16 * 5 * 5),
        "b2": u(ks[3], (32,), 16 * 5 * 5),
        "w3": u(ks[4], (10, 32 * 7 * 7), 32 * 7 * 7),
        "b3": u(ks[5], (10,), 32 * 7 * 7),
    }


# --------------------------- pure-JAX reference ------------------------------

def _reference_forward(x_nchw, p):
    def conv(x, w, b):
        y = lax.conv_general_dilated(x, w, (1, 1), ((2, 2), (2, 2)),
                                     dimension_numbers=("NCHW", "OIHW", "NCHW"))
        return jnp.maximum(y + b[None, :, None, None], 0.0)

    def pool(x):
        return lax.reduce_window(x, -jnp.inf, lax.max,
                                 (1, 1, 2, 2), (1, 1, 2, 2), "VALID")

    h = pool(conv(x_nchw, p["w1"], p["b1"]))
    h = pool(conv(h, p["w2"], p["b2"]))
    flat = h.reshape(x_nchw.shape[0], -1)
    return flat @ p["w3"].T + p["b3"], flat


# ----------------------------------- main ------------------------------------

if __name__ == "__main__":
    key = jax.random.PRNGKey(0)
    x = jax.random.normal(key, (2, 1, 28, 28), jnp.float32)
    params = init_params(jax.random.PRNGKey(42))

    # one-time weight repack, outside the jitted forward
    prepped = prepare_params(params)

    fwd = jax.jit(cnn_forward)
    logits, flat = fwd(x, prepped)
    jax.block_until_ready((logits, flat))

    assert logits.shape == (2, 10) and logits.dtype == jnp.float32
    assert flat.shape == (2, 32 * 7 * 7) and flat.dtype == jnp.float32

    ref_logits, ref_flat = _reference_forward(x, params)
    assert jnp.allclose(flat, ref_flat, rtol=1e-2, atol=1e-2), \
        float(jnp.max(jnp.abs(flat - ref_flat)))
    assert jnp.allclose(logits, ref_logits, rtol=1e-2, atol=1e-2), \
        float(jnp.max(jnp.abs(logits - ref_logits)))

    print("KERNEL_OK")
</pallas_src>

<mosaic_0001>
module attributes {stable_mosaic.version = 11 : i64} {
  func.func @_cnn_fused_kernel(%arg0: i32, %arg1: memref<1x28x28xf32, #tpu.memory_space<vmem>>, %arg2: memref<160x448xf32, #tpu.memory_space<vmem>>, %arg3: memref<1x448xf32, #tpu.memory_space<vmem>>, %arg4: memref<1440x448xf32, #tpu.memory_space<vmem>>, %arg5: memref<1x448xf32, #tpu.memory_space<vmem>>, %arg6: memref<1568x10xf32, #tpu.memory_space<vmem>>, %arg7: memref<1x10xf32, #tpu.memory_space<vmem>>, %arg8: memref<1x1x10xf32, #tpu.memory_space<vmem>>, %arg9: memref<1x7x224xf32, #tpu.memory_space<vmem>>, %arg10: memref<32x32xf32, #tpu.memory_space<vmem>>, %arg11: memref<18x288xf32, #tpu.memory_space<vmem>>) attributes {dimension_semantics = [#tpu.dimension_semantics<parallel>], iteration_bounds = array<i64: 2>, scalar_prefetch = 0 : i64, scratch_operands = 2 : i64, tpu.core_type = #tpu.core_type<tc>, window_params = [{transform_indices = @transform_0, window_bounds = array<i64: 1, 28, 28>}, {pipeline_mode = #tpu.pipeline_mode<synchronous>, transform_indices = @transform_1, window_bounds = array<i64: 160, 448>}, {pipeline_mode = #tpu.pipeline_mode<synchronous>, transform_indices = @transform_2, window_bounds = array<i64: 1, 448>}, {pipeline_mode = #tpu.pipeline_mode<synchronous>, transform_indices = @transform_3, window_bounds = array<i64: 1440, 448>}, {pipeline_mode = #tpu.pipeline_mode<synchronous>, transform_indices = @transform_4, window_bounds = array<i64: 1, 448>}, {pipeline_mode = #tpu.pipeline_mode<synchronous>, transform_indices = @transform_5, window_bounds = array<i64: 1568, 10>}, {pipeline_mode = #tpu.pipeline_mode<synchronous>, transform_indices = @transform_6, window_bounds = array<i64: 1, 10>}, {transform_indices = @transform_7, window_bounds = array<i64: 1, 1, 10>}, {transform_indices = @transform_8, window_bounds = array<i64: 1, 7, 224>}]} {
    %cst = arith.constant 0.000000e+00 : f32
    %0 = vector.broadcast %cst : f32 to vector<32x32xf32>
    %c0 = arith.constant 0 : index
    %c0_0 = arith.constant 0 : index
    %1 = vector.load %arg10[%c0, %c0_0] : memref<32x32xf32, #tpu.memory_space<vmem>>, vector<32x32xf32>
    tpu.vector_store %arg10[%c0, %c0_0], %0 {strides = array<i32>} : memref<32x32xf32, #tpu.memory_space<vmem>>, vector<32x32xf32>,
    %c0_1 = arith.constant 0 : index
    %c0_2 = arith.constant 0 : index
    %c0_3 = arith.constant 0 : index
    %2 = vector.load %arg1[%c0_1, %c0_2, %c0_3] : memref<1x28x28xf32, #tpu.memory_space<vmem>>, vector<1x28x28xf32>
    %3 = vector.shape_cast %2 : vector<1x28x28xf32> to vector<28x28xf32>
    %c2 = arith.constant 2 : index
    %c2_4 = arith.constant 2 : index
    %4 = vector.load %arg10[%c2, %c2_4] : memref<32x32xf32, #tpu.memory_space<vmem>>, vector<28x28xf32>
    tpu.vector_store %arg10[%c2, %c2_4], %3 {strides = array<i32>} : memref<32x32xf32, #tpu.memory_space<vmem>>, vector<28x28xf32>,
    %c0_5 = arith.constant 0 : index
    %c0_6 = arith.constant 0 : index
    %5 = vector.load %arg10[%c0_5, %c0_6] : memref<32x32xf32, #tpu.memory_space<vmem>>, vector<28x32xf32>
    %c1 = arith.constant 1 : index
    %c0_7 = arith.constant 0 : index
    %6 = vector.load %arg10[%c1, %c0_7] : memref<32x32xf32, #tpu.memory_space<vmem>>, vector<28x32xf32>
    %c2_8 = arith.constant 2 : index
    %c0_9 = arith.constant 0 : index
    %7 = vector.load %arg10[%c2_8, %c0_9] : memref<32x32xf32, #tpu.memory_space<vmem>>, vector<28x32xf32>
    %c3 = arith.constant 3 : index
    %c0_10 = arith.constant 0 : index
    %8 = vector.load %arg10[%c3, %c0_10] : memref<32x32xf32, #tpu.memory_space<vmem>>, vector<28x32xf32>
    %c4 = arith.constant 4 : index
    %c0_11 = arith.constant 0 : index
    %9 = vector.load %arg10[%c4, %c0_11] : memref<32x32xf32, #tpu.memory_space<vmem>>, vector<28x32xf32>
    %10 = tpu.concatenate %5, %6, %7, %8, %9 in 1 : vector<28x32xf32>, vector<28x32xf32>, vector<28x32xf32>, vector<28x32xf32>, vector<28x32xf32> -> vector<28x160xf32>
    %c0_12 = arith.constant 0 : index
    %c0_13 = arith.constant 0 : index
    %11 = vector.load %arg2[%c0_12, %c0_13] : memref<160x448xf32, #tpu.memory_space<vmem>>, vector<160x448xf32>
    %cst_14 = arith.constant dense<0.000000e+00> : vector<28x448xf32>
    %12 = tpu.matmul %10, %11, %cst_14 {dimension_numbers = #tpu.dot_dimension_numbers<[1], [0], [0], [1], [0, 0, 1, 1], [], []>} : vector<28x160xf32>, vector<160x448xf32>, vector<28x448xf32> -> vector<28x448xf32>
    %c0_15 = arith.constant 0 : index
    %c0_16 = arith.constant 0 : index
    %13 = vector.load %arg3[%c0_15, %c0_16] : memref<1x448xf32, #tpu.memory_space<vmem>>, vector<1x448xf32>
    %14 = vector.broadcast %13 : vector<1x448xf32> to vector<28x448xf32>
    %15 = arith.addf %12, %14 : vector<28x448xf32>
    %cst_17 = arith.constant 0.000000e+00 : f32
    %16 = vector.broadcast %cst_17 : f32 to vector<28x448xf32>
    %17 = arith.maximumf %15, %16 : vector<28x448xf32>
    %18 = vector.extract_strided_slice %17 {offsets = [0, 0], sizes = [1, 448], strides = [1, 1]} : vector<28x448xf32> to vector<1x448xf32>
    %19 = vector.extract_strided_slice %17 {offsets = [1, 0], sizes = [1, 448], strides = [1, 1]} : vector<28x448xf32> to vector<1x448xf32>
    %20 = arith.maximumf %18, %19 : vector<1x448xf32>
    %21 = vector.extract_strided_slice %17 {offsets = [2, 0], sizes = [1, 448], strides = [1, 1]} : vector<28x448xf32> to vector<1x448xf32>
    %22 = vector.extract_strided_slice %17 {offsets = [3, 0], sizes = [1, 448], strides = [1, 1]} : vector<28x448xf32> to vector<1x448xf32>
    %23 = arith.maximumf %21, %22 : vector<1x448xf32>
    %24 = vector.extract_strided_slice %17 {offsets = [4, 0], sizes = [1, 448], strides = [1, 1]} : vector<28x448xf32> to vector<1x448xf32>
    %25 = vector.extract_strided_slice %17 {offsets = [5, 0], sizes = [1, 448], strides = [1, 1]} : vector<28x448xf32> to vector<1x448xf32>
    %26 = arith.maximumf %24, %25 : vector<1x448xf32>
    %27 = vector.extract_strided_slice %17 {offsets = [6, 0], sizes = [1, 448], strides = [1, 1]} : vector<28x448xf32> to vector<1x448xf32>
    %28 = vector.extract_strided_slice %17 {offsets = [7, 0], sizes = [1, 448], strides = [1, 1]} : vector<28x448xf32> to vector<1x448xf32>
    %29 = arith.maximumf %27, %28 : vector<1x448xf32>
    %30 = vector.extract_strided_slice %17 {offsets = [8, 0], sizes = [1, 448], strides = [1, 1]} : vector<28x448xf32> to vector<1x448xf32>
    %31 = vector.extract_strided_slice %17 {offsets = [9, 0], sizes = [1, 448], strides = [1, 1]} : vector<28x448xf32> to vector<1x448xf32>
    %32 = arith.maximumf %30, %31 : vector<1x448xf32>
    %33 = vector.extract_strided_slice %17 {offsets = [10, 0], sizes = [1, 448], strides = [1, 1]} : vector<28x448xf32> to vector<1x448xf32>
    %34 = vector.extract_strided_slice %17 {offsets = [11, 0], sizes = [1, 448], strides = [1, 1]} : vector<28x448xf32> to vector<1x448xf32>
    %35 = arith.maximumf %33, %34 : vector<1x448xf32>
    %36 = vector.extract_strided_slice %17 {offsets = [12, 0], sizes = [1, 448], strides = [1, 1]} : vector<28x448xf32> to vector<1x448xf32>
    %37 = vector.extract_strided_slice %17 {offsets = [13, 0], sizes = [1, 448], strides = [1, 1]} : vector<28x448xf32> to vector<1x448xf32>
    %38 = arith.maximumf %36, %37 : vector<1x448xf32>
    %39 = vector.extract_strided_slice %17 {offsets = [14, 0], sizes = [1, 448], strides = [1, 1]} : vector<28x448xf32> to vector<1x448xf32>
    %40 = vector.extract_strided_slice %17 {offsets = [15, 0], sizes = [1, 448], strides = [1, 1]} : vector<28x448xf32> to vector<1x448xf32>
    %41 = arith.maximumf %39, %40 : vector<1x448xf32>
    %42 = vector.extract_strided_slice %17 {offsets = [16, 0], sizes = [1, 448], strides = [1, 1]} : vector<28x448xf32> to vector<1x448xf32>
    %43 = vector.extract_strided_slice %17 {offsets = [17, 0], sizes = [1, 448], strides = [1, 1]} : vector<28x448xf32> to vector<1x448xf32>
    %44 = arith.maximumf %42, %43 : vector<1x448xf32>
    %45 = vector.extract_strided_slice %17 {offsets = [18, 0], sizes = [1, 448], strides = [1, 1]} : vector<28x448xf32> to vector<1x448xf32>
    %46 = vector.extract_strided_slice %17 {offsets = [19, 0], sizes = [1, 448], strides = [1, 1]} : vector<28x448xf32> to vector<1x448xf32>
    %47 = arith.maximumf %45, %46 : vector<1x448xf32>
    %48 = vector.extract_strided_slice %17 {offsets = [20, 0], sizes = [1, 448], strides = [1, 1]} : vector<28x448xf32> to vector<1x448xf32>
    %49 = vector.extract_strided_slice %17 {offsets = [21, 0], sizes = [1, 448], strides = [1, 1]} : vector<28x448xf32> to vector<1x448xf32>
    %50 = arith.maximumf %48, %49 : vector<1x448xf32>
    %51 = vector.extract_strided_slice %17 {offsets = [22, 0], sizes = [1, 448], strides = [1, 1]} : vector<28x448xf32> to vector<1x448xf32>
    %52 = vector.extract_strided_slice %17 {offsets = [23, 0], sizes = [1, 448], strides = [1, 1]} : vector<28x448xf32> to vector<1x448xf32>
    %53 = arith.maximumf %51, %52 : vector<1x448xf32>
    %54 = vector.extract_strided_slice %17 {offsets = [24, 0], sizes = [1, 448], strides = [1, 1]} : vector<28x448xf32> to vector<1x448xf32>
    %55 = vector.extract_strided_slice %17 {offsets = [25, 0], sizes = [1, 448], strides = [1, 1]} : vector<28x448xf32> to vector<1x448xf32>
    %56 = arith.maximumf %54, %55 : vector<1x448xf32>
    %57 = vector.extract_strided_slice %17 {offsets = [26, 0], sizes = [1, 448], strides = [1, 1]} : vector<28x448xf32> to vector<1x448xf32>
    %58 = vector.extract_strided_slice %17 {offsets = [27, 0], sizes = [1, 448], strides = [1, 1]} : vector<28x448xf32> to vector<1x448xf32>
    %59 = arith.maximumf %57, %58 : vector<1x448xf32>
    %60 = tpu.concatenate %20, %23, %26, %29, %32, %35, %38, %41, %44, %47, %50, %53, %56, %59 in 0 : vector<1x448xf32>, vector<1x448xf32>, vector<1x448xf32>, vector<1x448xf32>, vector<1x448xf32>, vector<1x448xf32>, vector<1x448xf32>, vector<1x448xf32>, vector<1x448xf32>, vector<1x448xf32>, vector<1x448xf32>, vector<1x448xf32>, vector<1x448xf32>, vector<1x448xf32> -> vector<14x448xf32>
    %61 = vector.extract_strided_slice %60 {offsets = [0, 0], sizes = [14, 16], strides = [1, 1]} : vector<14x448xf32> to vector<14x16xf32>
    %62 = vector.extract_strided_slice %60 {offsets = [0, 16], sizes = [14, 16], strides = [1, 1]} : vector<14x448xf32> to vector<14x16xf32>
    %63 = arith.maximumf %61, %62 : vector<14x16xf32>
    %64 = vector.extract_strided_slice %60 {offsets = [0, 32], sizes = [14, 16], strides = [1, 1]} : vector<14x448xf32> to vector<14x16xf32>
    %65 = vector.extract_strided_slice %60 {offsets = [0, 48], sizes = [14, 16], strides = [1, 1]} : vector<14x448xf32> to vector<14x16xf32>
    %66 = arith.maximumf %64, %65 : vector<14x16xf32>
    %67 = vector.extract_strided_slice %60 {offsets = [0, 64], sizes = [14, 16], strides = [1, 1]} : vector<14x448xf32> to vector<14x16xf32>
    %68 = vector.extract_strided_slice %60 {offsets = [0, 80], sizes = [14, 16], strides = [1, 1]} : vector<14x448xf32> to vector<14x16xf32>
    %69 = arith.maximumf %67, %68 : vector<14x16xf32>
    %70 = vector.extract_strided_slice %60 {offsets = [0, 96], sizes = [14, 16], strides = [1, 1]} : vector<14x448xf32> to vector<14x16xf32>
    %71 = vector.extract_strided_slice %60 {offsets = [0, 112], sizes = [14, 16], strides = [1, 1]} : vector<14x448xf32> to vector<14x16xf32>
    %72 = arith.maximumf %70, %71 : vector<14x16xf32>
    %73 = vector.extract_strided_slice %60 {offsets = [0, 128], sizes = [14, 16], strides = [1, 1]} : vector<14x448xf32> to vector<14x16xf32>
    %74 = vector.extract_strided_slice %60 {offsets = [0, 144], sizes = [14, 16], strides = [1, 1]} : vector<14x448xf32> to vector<14x16xf32>
    %75 = arith.maximumf %73, %74 : vector<14x16xf32>
    %76 = vector.extract_strided_slice %60 {offsets = [0, 160], sizes = [14, 16], strides = [1, 1]} : vector<14x448xf32> to vector<14x16xf32>
    %77 = vector.extract_strided_slice %60 {offsets = [0, 176], sizes = [14, 16], strides = [1, 1]} : vector<14x448xf32> to vector<14x16xf32>
    %78 = arith.maximumf %76, %77 : vector<14x16xf32>
    %79 = vector.extract_strided_slice %60 {offsets = [0, 192], sizes = [14, 16], strides = [1, 1]} : vector<14x448xf32> to vector<14x16xf32>
    %80 = vector.extract_strided_slice %60 {offsets = [0, 208], sizes = [14, 16], strides = [1, 1]} : vector<14x448xf32> to vector<14x16xf32>
    %81 = arith.maximumf %79, %80 : vector<14x16xf32>
    %82 = vector.extract_strided_slice %60 {offsets = [0, 224], sizes = [14, 16], strides = [1, 1]} : vector<14x448xf32> to vector<14x16xf32>
    %83 = vector.extract_strided_slice %60 {offsets = [0, 240], sizes = [14, 16], strides = [1, 1]} : vector<14x448xf32> to vector<14x16xf32>
    %84 = arith.maximumf %82, %83 : vector<14x16xf32>
    %85 = vector.extract_strided_slice %60 {offsets = [0, 256], sizes = [14, 16], strides = [1, 1]} : vector<14x448xf32> to vector<14x16xf32>
    %86 = vector.extract_strided_slice %60 {offsets = [0, 272], sizes = [14, 16], strides = [1, 1]} : vector<14x448xf32> to vector<14x16xf32>
    %87 = arith.maximumf %85, %86 : vector<14x16xf32>
    %88 = vector.extract_strided_slice %60 {offsets = [0, 288], sizes = [14, 16], strides = [1, 1]} : vector<14x448xf32> to vector<14x16xf32>
    %89 = vector.extract_strided_slice %60 {offsets = [0, 304], sizes = [14, 16], strides = [1, 1]} : vector<14x448xf32> to vector<14x16xf32>
    %90 = arith.maximumf %88, %89 : vector<14x16xf32>
    %91 = vector.extract_strided_slice %60 {offsets = [0, 320], sizes = [14, 16], strides = [1, 1]} : vector<14x448xf32> to vector<14x16xf32>
    %92 = vector.extract_strided_slice %60 {offsets = [0, 336], sizes = [14, 16], strides = [1, 1]} : vector<14x448xf32> to vector<14x16xf32>
    %93 = arith.maximumf %91, %92 : vector<14x16xf32>
    %94 = vector.extract_strided_slice %60 {offsets = [0, 352], sizes = [14, 16], strides = [1, 1]} : vector<14x448xf32> to vector<14x16xf32>
    %95 = vector.extract_strided_slice %60 {offsets = [0, 368], sizes = [14, 16], strides = [1, 1]} : vector<14x448xf32> to vector<14x16xf32>
    %96 = arith.maximumf %94, %95 : vector<14x16xf32>
    %97 = vector.extract_strided_slice %60 {offsets = [0, 384], sizes = [14, 16], strides = [1, 1]} : vector<14x448xf32> to vector<14x16xf32>
    %98 = vector.extract_strided_slice %60 {offsets = [0, 400], sizes = [14, 16], strides = [1, 1]} : vector<14x448xf32> to vector<14x16xf32>
    %99 = arith.maximumf %97, %98 : vector<14x16xf32>
    %100 = vector.extract_strided_slice %60 {offsets = [0, 416], sizes = [14, 16], strides = [1, 1]} : vector<14x448xf32> to vector<14x16xf32>
    %101 = vector.extract_strided_slice %60 {offsets = [0, 432], sizes = [14, 16], strides = [1, 1]} : vector<14x448xf32> to vector<14x16xf32>
    %102 = arith.maximumf %100, %101 : vector<14x16xf32>
    %103 = tpu.concatenate %63, %66, %69, %72, %75, %78, %81, %84, %87, %90, %93, %96, %99, %102 in 1 : vector<14x16xf32>, vector<14x16xf32>, vector<14x16xf32>, vector<14x16xf32>, vector<14x16xf32>, vector<14x16xf32>, vector<14x16xf32>, vector<14x16xf32>, vector<14x16xf32>, vector<14x16xf32>, vector<14x16xf32>, vector<14x16xf32>, vector<14x16xf32>, vector<14x16xf32> -> vector<14x224xf32>
    %cst_18 = arith.constant 0.000000e+00 : f32
    %104 = vector.broadcast %cst_18 : f32 to vector<18x288xf32>
    %c0_19 = arith.constant 0 : index
    %c0_20 = arith.constant 0 : index
    %105 = vector.load %arg11[%c0_19, %c0_20] : memref<18x288xf32, #tpu.memory_space<vmem>>, vector<18x288xf32>
    tpu.vector_store %arg11[%c0_19, %c0_20], %104 {strides = array<i32>} : memref<18x288xf32, #tpu.memory_space<vmem>>, vector<18x288xf32>,
    %c2_21 = arith.constant 2 : index
    %c32 = arith.constant 32 : index
    %106 = vector.load %arg11[%c2_21, %c32] : memref<18x288xf32, #tpu.memory_space<vmem>>, vector<14x224xf32>
    tpu.vector_store %arg11[%c2_21, %c32], %103 {strides = array<i32>} : memref<18x288xf32, #tpu.memory_space<vmem>>, vector<14x224xf32>,
    %c0_22 = arith.constant 0 : index
    %c0_23 = arith.constant 0 : index
    %107 = vector.load %arg11[%c0_22, %c0_23] : memref<18x288xf32, #tpu.memory_space<vmem>>, vector<14x288xf32>
    %c1_24 = arith.constant 1 : index
    %c0_25 = arith.constant 0 : index
    %108 = vector.load %arg11[%c1_24, %c0_25] : memref<18x288xf32, #tpu.memory_space<vmem>>, vector<14x288xf32>
    %c2_26 = arith.constant 2 : index
    %c0_27 = arith.constant 0 : index
    %109 = vector.load %arg11[%c2_26, %c0_27] : memref<18x288xf32, #tpu.memory_space<vmem>>, vector<14x288xf32>
    %c3_28 = arith.constant 3 : index
    %c0_29 = arith.constant 0 : index
    %110 = vector.load %arg11[%c3_28, %c0_29] : memref<18x288xf32, #tpu.memory_space<vmem>>, vector<14x288xf32>
    %c4_30 = arith.constant 4 : index
    %c0_31 = arith.constant 0 : index
    %111 = vector.load %arg11[%c4_30, %c0_31] : memref<18x288xf32, #tpu.memory_space<vmem>>, vector<14x288xf32>
    %112 = tpu.concatenate %107, %108, %109, %110, %111 in 1 : vector<14x288xf32>, vector<14x288xf32>, vector<14x288xf32>, vector<14x288xf32>, vector<14x288xf32> -> vector<14x1440xf32>
    %c0_32 = arith.constant 0 : index
    %c0_33 = arith.constant 0 : index
    %113 = vector.load %arg4[%c0_32, %c0_33] : memref<1440x448xf32, #tpu.memory_space<vmem>>, vector<1440x448xf32>
    %cst_34 = arith.constant dense<0.000000e+00> : vector<14x448xf32>
    %114 = tpu.matmul %112, %113, %cst_34 {dimension_numbers = #tpu.dot_dimension_numbers<[1], [0], [0], [1], [0, 0, 1, 1], [], []>} : vector<14x1440xf32>, vector<1440x448xf32>, vector<14x448xf32> -> vector<14x448xf32>
    %c0_35 = arith.constant 0 : index
    %c0_36 = arith.constant 0 : index
    %115 = vector.load %arg5[%c0_35, %c0_36] : memref<1x448xf32, #tpu.memory_space<vmem>>, vector<1x448xf32>
    %116 = vector.broadcast %115 : vector<1x448xf32> to vector<14x448xf32>
    %117 = arith.addf %114, %116 : vector<14x448xf32>
    %cst_37 = arith.constant 0.000000e+00 : f32
    %118 = vector.broadcast %cst_37 : f32 to vector<14x448xf32>
    %119 = arith.maximumf %117, %118 : vector<14x448xf32>
    %120 = vector.extract_strided_slice %119 {offsets = [0, 0], sizes = [1, 448], strides = [1, 1]} : vector<14x448xf32> to vector<1x448xf32>
    %121 = vector.extract_strided_slice %119 {offsets = [1, 0], sizes = [1, 448], strides = [1, 1]} : vector<14x448xf32> to vector<1x448xf32>
    %122 = arith.maximumf %120, %121 : vector<1x448xf32>
    %123 = vector.extract_strided_slice %119 {offsets = [2, 0], sizes = [1, 448], strides = [1, 1]} : vector<14x448xf32> to vector<1x448xf32>
    %124 = vector.extract_strided_slice %119 {offsets = [3, 0], sizes = [1, 448], strides = [1, 1]} : vector<14x448xf32> to vector<1x448xf32>
    %125 = arith.maximumf %123, %124 : vector<1x448xf32>
    %126 = vector.extract_strided_slice %119 {offsets = [4, 0], sizes = [1, 448], strides = [1, 1]} : vector<14x448xf32> to vector<1x448xf32>
    %127 = vector.extract_strided_slice %119 {offsets = [5, 0], sizes = [1, 448], strides = [1, 1]} : vector<14x448xf32> to vector<1x448xf32>
    %128 = arith.maximumf %126, %127 : vector<1x448xf32>
    %129 = vector.extract_strided_slice %119 {offsets = [6, 0], sizes = [1, 448], strides = [1, 1]} : vector<14x448xf32> to vector<1x448xf32>
    %130 = vector.extract_strided_slice %119 {offsets = [7, 0], sizes = [1, 448], strides = [1, 1]} : vector<14x448xf32> to vector<1x448xf32>
    %131 = arith.maximumf %129, %130 : vector<1x448xf32>
    %132 = vector.extract_strided_slice %119 {offsets = [8, 0], sizes = [1, 448], strides = [1, 1]} : vector<14x448xf32> to vector<1x448xf32>
    %133 = vector.extract_strided_slice %119 {offsets = [9, 0], sizes = [1, 448], strides = [1, 1]} : vector<14x448xf32> to vector<1x448xf32>
    %134 = arith.maximumf %132, %133 : vector<1x448xf32>
    %135 = vector.extract_strided_slice %119 {offsets = [10, 0], sizes = [1, 448], strides = [1, 1]} : vector<14x448xf32> to vector<1x448xf32>
    %136 = vector.extract_strided_slice %119 {offsets = [11, 0], sizes = [1, 448], strides = [1, 1]} : vector<14x448xf32> to vector<1x448xf32>
    %137 = arith.maximumf %135, %136 : vector<1x448xf32>
    %138 = vector.extract_strided_slice %119 {offsets = [12, 0], sizes = [1, 448], strides = [1, 1]} : vector<14x448xf32> to vector<1x448xf32>
    %139 = vector.extract_strided_slice %119 {offsets = [13, 0], sizes = [1, 448], strides = [1, 1]} : vector<14x448xf32> to vector<1x448xf32>
    %140 = arith.maximumf %138, %139 : vector<1x448xf32>
    %141 = tpu.concatenate %122, %125, %128, %131, %134, %137, %140 in 0 : vector<1x448xf32>, vector<1x448xf32>, vector<1x448xf32>, vector<1x448xf32>, vector<1x448xf32>, vector<1x448xf32>, vector<1x448xf32> -> vector<7x448xf32>
    %142 = vector.extract_strided_slice %141 {offsets = [0, 0], sizes = [7, 32], strides = [1, 1]} : vector<7x448xf32> to vector<7x32xf32>
    %143 = vector.extract_strided_slice %141 {offsets = [0, 32], sizes = [7, 32], strides = [1, 1]} : vector<7x448xf32> to vector<7x32xf32>
    %144 = arith.maximumf %142, %143 : vector<7x32xf32>
    %145 = vector.extract_strided_slice %141 {offsets = [0, 64], sizes = [7, 32], strides = [1, 1]} : vector<7x448xf32> to vector<7x32xf32>
    %146 = vector.extract_strided_slice %141 {offsets = [0, 96], sizes = [7, 32], strides = [1, 1]} : vector<7x448xf32> to vector<7x32xf32>
    %147 = arith.maximumf %145, %146 : vector<7x32xf32>
    %148 = vector.extract_strided_slice %141 {offsets = [0, 128], sizes = [7, 32], strides = [1, 1]} : vector<7x448xf32> to vector<7x32xf32>
    %149 = vector.extract_strided_slice %141 {offsets = [0, 160], sizes = [7, 32], strides = [1, 1]} : vector<7x448xf32> to vector<7x32xf32>
    %150 = arith.maximumf %148, %149 : vector<7x32xf32>
    %151 = vector.extract_strided_slice %141 {offsets = [0, 192], sizes = [7, 32], strides = [1, 1]} : vector<7x448xf32> to vector<7x32xf32>
    %152 = vector.extract_strided_slice %141 {offsets = [0, 224], sizes = [7, 32], strides = [1, 1]} : vector<7x448xf32> to vector<7x32xf32>
    %153 = arith.maximumf %151, %152 : vector<7x32xf32>
    %154 = vector.extract_strided_slice %141 {offsets = [0, 256], sizes = [7, 32], strides = [1, 1]} : vector<7x448xf32> to vector<7x32xf32>
    %155 = vector.extract_strided_slice %141 {offsets = [0, 288], sizes = [7, 32], strides = [1, 1]} : vector<7x448xf32> to vector<7x32xf32>
    %156 = arith.maximumf %154, %155 : vector<7x32xf32>
    %157 = vector.extract_strided_slice %141 {offsets = [0, 320], sizes = [7, 32], strides = [1, 1]} : vector<7x448xf32> to vector<7x32xf32>
    %158 = vector.extract_strided_slice %141 {offsets = [0, 352], sizes = [7, 32], strides = [1, 1]} : vector<7x448xf32> to vector<7x32xf32>
    %159 = arith.maximumf %157, %158 : vector<7x32xf32>
    %160 = vector.extract_strided_slice %141 {offsets = [0, 384], sizes = [7, 32], strides = [1, 1]} : vector<7x448xf32> to vector<7x32xf32>
    %161 = vector.extract_strided_slice %141 {offsets = [0, 416], sizes = [7, 32], strides = [1, 1]} : vector<7x448xf32> to vector<7x32xf32>
    %162 = arith.maximumf %160, %161 : vector<7x32xf32>
    %163 = tpu.concatenate %144, %147, %150, %153, %156, %159, %162 in 1 : vector<7x32xf32>, vector<7x32xf32>, vector<7x32xf32>, vector<7x32xf32>, vector<7x32xf32>, vector<7x32xf32>, vector<7x32xf32> -> vector<7x224xf32>
    %c0_38 = arith.constant 0 : index
    %c0_39 = arith.constant 0 : index
    %c0_40 = arith.constant 0 : index
    %164 = vector.load %arg9[%c0_38, %c0_39, %c0_40] : memref<1x7x224xf32, #tpu.memory_space<vmem>>, vector<1x7x224xf32>
    %165 = vector.shape_cast %164 : vector<1x7x224xf32> to vector<7x224xf32>
    %166 = vector.shape_cast %163 : vector<7x224xf32> to vector<1x7x224xf32>
    tpu.vector_store %arg9[%c0_38, %c0_39, %c0_40], %166 {strides = array<i32>} : memref<1x7x224xf32, #tpu.memory_space<vmem>>, vector<1x7x224xf32>,
    %c0_41 = arith.constant 0 : index
    %c0_42 = arith.constant 0 : index
    %167 = vector.load %arg7[%c0_41, %c0_42] : memref<1x10xf32, #tpu.memory_space<vmem>>, vector<1x10xf32>
    %168 = vector.extract_strided_slice %163 {offsets = [0, 0], sizes = [1, 224], strides = [1, 1]} : vector<7x224xf32> to vector<1x224xf32>
    %c0_43 = arith.constant 0 : index
    %c0_44 = arith.constant 0 : index
    %169 = vector.load %arg6[%c0_43, %c0_44] : memref<1568x10xf32, #tpu.memory_space<vmem>>, vector<224x10xf32>
    %cst_45 = arith.constant dense<0.000000e+00> : vector<1x10xf32>
    %170 = tpu.matmul %168, %169, %cst_45 {dimension_numbers = #tpu.dot_dimension_numbers<[1], [0], [0], [1], [0, 0, 1, 1], [], []>} : vector<1x224xf32>, vector<224x10xf32>, vector<1x10xf32> -> vector<1x10xf32>
    %171 = arith.addf %167, %170 : vector<1x10xf32>
    %172 = vector.extract_strided_slice %163 {offsets = [1, 0], sizes = [1, 224], strides = [1, 1]} : vector<7x224xf32> to vector<1x224xf32>
    %c224 = arith.constant 224 : index
    %c0_46 = arith.constant 0 : index
    %173 = vector.load %arg6[%c224, %c0_46] : memref<1568x10xf32, #tpu.memory_space<vmem>>, vector<224x10xf32>
    %cst_47 = arith.constant dense<0.000000e+00> : vector<1x10xf32>
    %174 = tpu.matmul %172, %173, %cst_47 {dimension_numbers = #tpu.dot_dimension_numbers<[1], [0], [0], [1], [0, 0, 1, 1], [], []>} : vector<1x224xf32>, vector<224x10xf32>, vector<1x10xf32> -> vector<1x10xf32>
    %175 = arith.addf %171, %174 : vector<1x10xf32>
    %176 = vector.extract_strided_slice %163 {offsets = [2, 0], sizes = [1, 224], strides = [1, 1]} : vector<7x224xf32> to vector<1x224xf32>
    %c448 = arith.constant 448 : index
    %c0_48 = arith.constant 0 : index
    %177 = vector.load %arg6[%c448, %c0_48] : memref<1568x10xf32, #tpu.memory_space<vmem>>, vector<224x10xf32>
    %cst_49 = arith.constant dense<0.000000e+00> : vector<1x10xf32>
    %178 = tpu.matmul %176, %177, %cst_49 {dimension_numbers = #tpu.dot_dimension_numbers<[1], [0], [0], [1], [0, 0, 1, 1], [], []>} : vector<1x224xf32>, vector<224x10xf32>, vector<1x10xf32> -> vector<1x10xf32>
    %179 = arith.addf %175, %178 : vector<1x10xf32>
    %180 = vector.extract_strided_slice %163 {offsets = [3, 0], sizes = [1, 224], strides = [1, 1]} : vector<7x224xf32> to vector<1x224xf32>
    %c672 = arith.constant 672 : index
    %c0_50 = arith.constant 0 : index
    %181 = vector.load %arg6[%c672, %c0_50] : memref<1568x10xf32, #tpu.memory_space<vmem>>, vector<224x10xf32>
    %cst_51 = arith.constant dense<0.000000e+00> : vector<1x10xf32>
    %182 = tpu.matmul %180, %181, %cst_51 {dimension_numbers = #tpu.dot_dimension_numbers<[1], [0], [0], [1], [0, 0, 1, 1], [], []>} : vector<1x224xf32>, vector<224x10xf32>, vector<1x10xf32> -> vector<1x10xf32>
    %183 = arith.addf %179, %182 : vector<1x10xf32>
    %184 = vector.extract_strided_slice %163 {offsets = [4, 0], sizes = [1, 224], strides = [1, 1]} : vector<7x224xf32> to vector<1x224xf32>
    %c896 = arith.constant 896 : index
    %c0_52 = arith.constant 0 : index
    %185 = vector.load %arg6[%c896, %c0_52] : memref<1568x10xf32, #tpu.memory_space<vmem>>, vector<224x10xf32>
    %cst_53 = arith.constant dense<0.000000e+00> : vector<1x10xf32>
    %186 = tpu.matmul %184, %185, %cst_53 {dimension_numbers = #tpu.dot_dimension_numbers<[1], [0], [0], [1], [0, 0, 1, 1], [], []>} : vector<1x224xf32>, vector<224x10xf32>, vector<1x10xf32> -> vector<1x10xf32>
    %187 = arith.addf %183, %186 : vector<1x10xf32>
    %188 = vector.extract_strided_slice %163 {offsets = [5, 0], sizes = [1, 224], strides = [1, 1]} : vector<7x224xf32> to vector<1x224xf32>
    %c1120 = arith.constant 1120 : index
    %c0_54 = arith.constant 0 : index
    %189 = vector.load %arg6[%c1120, %c0_54] : memref<1568x10xf32, #tpu.memory_space<vmem>>, vector<224x10xf32>
    %cst_55 = arith.constant dense<0.000000e+00> : vector<1x10xf32>
    %190 = tpu.matmul %188, %189, %cst_55 {dimension_numbers = #tpu.dot_dimension_numbers<[1], [0], [0], [1], [0, 0, 1, 1], [], []>} : vector<1x224xf32>, vector<224x10xf32>, vector<1x10xf32> -> vector<1x10xf32>
    %191 = arith.addf %187, %190 : vector<1x10xf32>
    %192 = vector.extract_strided_slice %163 {offsets = [6, 0], sizes = [1, 224], strides = [1, 1]} : vector<7x224xf32> to vector<1x224xf32>
    %c1344 = arith.constant 1344 : index
    %c0_56 = arith.constant 0 : index
    %193 = vector.load %arg6[%c1344, %c0_56] : memref<1568x10xf32, #tpu.memory_space<vmem>>, vector<224x10xf32>
    %cst_57 = arith.constant dense<0.000000e+00> : vector<1x10xf32>
    %194 = tpu.matmul %192, %193, %cst_57 {dimension_numbers = #tpu.dot_dimension_numbers<[1], [0], [0], [1], [0, 0, 1, 1], [], []>} : vector<1x224xf32>, vector<224x10xf32>, vector<1x10xf32> -> vector<1x10xf32>
    %195 = arith.addf %191, %194 : vector<1x10xf32>
    %c0_58 = arith.constant 0 : index
    %c0_59 = arith.constant 0 : index
    %c0_60 = arith.constant 0 : index
    %196 = vector.load %arg8[%c0_58, %c0_59, %c0_60] : memref<1x1x10xf32, #tpu.memory_space<vmem>>, vector<1x1x10xf32>
    %197 = vector.shape_cast %196 : vector<1x1x10xf32> to vector<1x10xf32>
    %198 = vector.shape_cast %195 : vector<1x10xf32> to vector<1x1x10xf32>
    tpu.vector_store %arg8[%c0_58, %c0_59, %c0_60], %198 {strides = array<i32>} : memref<1x1x10xf32, #tpu.memory_space<vmem>>, vector<1x1x10xf32>,
    return
  }
  func.func @transform_0(%arg0: i32) -> (i32, i32, i32) {
    %c0_i32 = arith.constant 0 : i32
    %c0_i32_0 = arith.constant 0 : i32
    %c0_i32_1 = arith.constant 0 : i32
    return %arg0, %c0_i32, %c0_i32_0 : i32, i32, i32
  }
  func.func @transform_1(%arg0: i32) -> (i32, i32) {
    %c0_i32 = arith.constant 0 : i32
    %c0_i32_0 = arith.constant 0 : i32
    %c0_i32_1 = arith.constant 0 : i32
    return %c0_i32, %c0_i32_0 : i32, i32
  }
  func.func @transform_2(%arg0: i32) -> (i32, i32) {
    %c0_i32 = arith.constant 0 : i32
    %c0_i32_0 = arith.constant 0 : i32
    %c0_i32_1 = arith.constant 0 : i32
    return %c0_i32, %c0_i32_0 : i32, i32
  }
  func.func @transform_3(%arg0: i32) -> (i32, i32) {
    %c0_i32 = arith.constant 0 : i32
    %c0_i32_0 = arith.constant 0 : i32
    %c0_i32_1 = arith.constant 0 : i32
    return %c0_i32, %c0_i32_0 : i32, i32
  }
  func.func @transform_4(%arg0: i32) -> (i32, i32) {
    %c0_i32 = arith.constant 0 : i32
    %c0_i32_0 = arith.constant 0 : i32
    %c0_i32_1 = arith.constant 0 : i32
    return %c0_i32, %c0_i32_0 : i32, i32
  }
  func.func @transform_5(%arg0: i32) -> (i32, i32) {
    %c0_i32 = arith.constant 0 : i32
    %c0_i32_0 = arith.constant 0 : i32
    %c0_i32_1 = arith.constant 0 : i32
    return %c0_i32, %c0_i32_0 : i32, i32
  }
  func.func @transform_6(%arg0: i32) -> (i32, i32) {
    %c0_i32 = arith.constant 0 : i32
    %c0_i32_0 = arith.constant 0 : i32
    %c0_i32_1 = arith.constant 0 : i32
    return %c0_i32, %c0_i32_0 : i32, i32
  }
  func.func @transform_7(%arg0: i32) -> (i32, i32, i32) {
    %c0_i32 = arith.constant 0 : i32
    %c0_i32_0 = arith.constant 0 : i32
    %c0_i32_1 = arith.constant 0 : i32
    return %arg0, %c0_i32, %c0_i32_0 : i32, i32, i32
  }
  func.func @transform_8(%arg0: i32) -> (i32, i32, i32) {
    %c0_i32 = arith.constant 0 : i32
    %c0_i32_0 = arith.constant 0 : i32
    %c0_i32_1 = arith.constant 0 : i32
    return %arg0, %c0_i32, %c0_i32_0 : i32, i32, i32
  }
}

</mosaic_0001>

<llo_original>
// kernel: cnn_forward.1
$region0: #{cnn_forward.1}
  #allocation0 [shape = 'u32[]', space=smem, size = 0x4, offset = 0x4, fixed_abs, tag = 'smem constant byte address 0x4 - core index']
  #allocation1 [shape = 'u32[72,128]{1,0:T(1,128)}', space=vmem, size = 0x9000, scoped, tag = 'internal scratch']
  #allocation2 [shape = 'f32[32,32]{1,0:T(8,128)}', space=vmem, size = 0x4000, scoped, tag = 'scratch operand']
  #allocation3 [shape = 'f32[18,288]{1,0:T(8,128)}', space=vmem, size = 0x9000, scoped, tag = 'scratch operand']
  %s0 = inlined_call_operand.vmem [shape: f32[2,28,28], index: 0, kind: input, shape index: {}]
  %s1 = inlined_call_operand.vmem [shape: f32[160,448], index: 1, kind: input, shape index: {}]
  %s2 = inlined_call_operand.vmem [shape: f32[1,448], index: 2, kind: input, shape index: {}]
  %s3 = inlined_call_operand.vmem [shape: f32[1440,448], index: 3, kind: input, shape index: {}]
  %s4 = inlined_call_operand.vmem [shape: f32[1,448], index: 4, kind: input, shape index: {}]
  %s5 = inlined_call_operand.vmem [shape: f32[1568,10], index: 5, kind: input, shape index: {}]
  %s6 = inlined_call_operand.vmem [shape: f32[1,10], index: 6, kind: input, shape index: {}]
  %s7 = inlined_call_operand.hbm [shape: f32[2,1,10], index: 7, kind: output, shape index: {0}]
  %s8 = inlined_call_operand.vmem [shape: f32[2,7,224], index: 8, kind: output, shape index: {1}]
  %9 = xla_tuple %s7, %s8
  %s10 = sld [smem:[#allocation0]]
  $region69: #{cnn_forward.1} parent=0
    _
  %s12 = ssub.s32 1, %s10
  %s13 = scalar_select 0, %s12, %s10
  $region1: #{cnn_forward.1} parent=0
    #allocation4 [shape = 'u8[1024]{0}', space=vmem, size = 0x400, scoped, tag = 'output window, operand 0']
    #allocation5 [shape = 's32[2]{0}', space=sflag, size = 0x8, scoped, tag = 'scoped memory for cnn_forward.1']
    %14 = vsyncpa [#allocation5], 0
    %s15 = scalar_lea.sflag [#allocation5], 1
    %16 = vsyncpa %s15, 0
    loop: start=0, step=1, limit=4
    $region2: #{cnn_forward.1} parent=1 // loop_pre_header
      _
    $region3: #{cnn_forward.1} parent=1 // loop_header
      %s18 = sphi 0, %s22
      %p19 = scmp.ge.s32.totalorder %s18, 4
      %s28 = sphi 0, %s30
      %s31 = sphi 0, %s28
      %s32 = sphi 0, %s31
      %s48 = sphi 0, %s32
      %s52 = sphi 0, %s52
      %s54 = sphi 0, %s52
      %s55 = sphi 0, %s54
      %s69 = sphi 0, %s55
      %s73 = sphi 0, %s73
      %s75 = sphi 0, %s73
      %s76 = sphi 0, %s75
      %s90 = sphi 0, %s76
      %s94 = sphi 0, %s94
      %s96 = sphi 0, %s94
      %s97 = sphi 0, %s96
      %s111 = sphi 0, %s97
      %s115 = sphi 0, %s115
      %s117 = sphi 0, %s115
      %s118 = sphi 0, %s117
      %s132 = sphi 0, %s118
      %s136 = sphi 0, %s136
      %s138 = sphi 0, %s136
      %s139 = sphi 0, %s138
      %s153 = sphi 0, %s139
      %s157 = sphi 0, %s157
      %s159 = sphi 0, %s157
      %s160 = sphi 0, %s159
      %s174 = sphi 0, %s160
      %s180 = sphi 0, %s182
      %s183 = sphi 0, %s180
      %s184 = sphi 0, %s183
      %s200 = sphi 0, %s184
      %s206 = sphi 0, %s208
      %s209 = sphi 0, %s206
      %s210 = sphi 0, %s209
      %s226 = sphi 0, %s210
    $region4: #{cnn_forward.1} parent=1 // loop_header_branch
      %21 = sbr.rel (%p19) target = $region8
    $region5: #{cnn_forward.1} parent=1 // loop_body
      %s23 = ssub.s32 %s18, 1
      %s24 = ssub.s32 %s18, 2
      %s25 = sadd.s32 %s18, 1
      %s26 = ssub.s32 %s18, %s25
      %p27 = scmp.eq.s32.totalorder %s26, 0
      %s29 = sadd.s32 %s28, 1
      %s30 = scalar_select %p27, %s28, %s29
      %p33 = pneg %p27
      %p34 = scmp.eq.s32.totalorder %s18, 1
      %p35 = por %p33, %p34
      %p36 = scmp.ne.s32.totalorder %s28, %s31
      %p37 = scmp.eq.s32.totalorder %s18, 0
      %p38 = por %p36, %p37
      %p39 = scmp.ne.s32.totalorder %s28, %s31
      %p40 = scmp.eq.s32.totalorder %s23, 1
      %p41 = por %p39, %p40
      %p42 = scmp.ne.s32.totalorder %s31, %s32
      %p43 = scmp.eq.s32.totalorder %s23, 0
      %p44 = por %p42, %p43
      %p45 = scmp.ne.s32.totalorder %s31, %s32
      %p46 = scmp.eq.s32.totalorder %s24, 1
      %p47 = por %p45, %p46
      %p49 = scmp.ne.s32.totalorder %s32, %s48
      %p50 = scmp.eq.s32.totalorder %s24, 0
      %p51 = por %p49, %p50
      %s53 = sadd.s32 %s52, 1
      %p56 = scmp.eq.s32.totalorder %s18, 1
      %p57 = scmp.ne.s32.totalorder %s52, %s54
      %p58 = scmp.eq.s32.totalorder %s18, 0
      %p59 = por %p57, %p58
      %p60 = scmp.ne.s32.totalorder %s52, %s54
      %p61 = scmp.eq.s32.totalorder %s23, 1
      %p62 = por %p60, %p61
      %p63 = scmp.ne.s32.totalorder %s54, %s55
      %p64 = scmp.eq.s32.totalorder %s23, 0
      %p65 = por %p63, %p64
      %p66 = scmp.ne.s32.totalorder %s54, %s55
      %p67 = scmp.eq.s32.totalorder %s24, 1
      %p68 = por %p66, %p67
      %p70 = scmp.ne.s32.totalorder %s55, %s69
      %p71 = scmp.eq.s32.totalorder %s24, 0
      %p72 = por %p70, %p71
      %s74 = sadd.s32 %s73, 1
      %p77 = scmp.eq.s32.totalorder %s18, 1
      %p78 = scmp.ne.s32.totalorder %s73, %s75
      %p79 = scmp.eq.s32.totalorder %s18, 0
      %p80 = por %p78, %p79
      %p81 = scmp.ne.s32.totalorder %s73, %s75
      %p82 = scmp.eq.s32.totalorder %s23, 1
      %p83 = por %p81, %p82
      %p84 = scmp.ne.s32.totalorder %s75, %s76
      %p85 = scmp.eq.s32.totalorder %s23, 0
      %p86 = por %p84, %p85
      %p87 = scmp.ne.s32.totalorder %s75, %s76
      %p88 = scmp.eq.s32.totalorder %s24, 1
      %p89 = por %p87, %p88
      %p91 = scmp.ne.s32.totalorder %s76, %s90
      %p92 = scmp.eq.s32.totalorder %s24, 0
      %p93 = por %p91, %p92
      %s95 = sadd.s32 %s94, 1
      %p98 = scmp.eq.s32.totalorder %s18, 1
      %p99 = scmp.ne.s32.totalorder %s94, %s96
      %p100 = scmp.eq.s32.totalorder %s18, 0
      %p101 = por %p99, %p100
      %p102 = scmp.ne.s32.totalorder %s94, %s96
      %p103 = scmp.eq.s32.totalorder %s23, 1
      %p104 = por %p102, %p103
      %p105 = scmp.ne.s32.totalorder %s96, %s97
      %p106 = scmp.eq.s32.totalorder %s23, 0
      %p107 = por %p105, %p106
      %p108 = scmp.ne.s32.totalorder %s96, %s97
      %p109 = scmp.eq.s32.totalorder %s24, 1
      %p110 = por %p108, %p109
      %p112 = scmp.ne.s32.totalorder %s97, %s111
      %p113 = scmp.eq.s32.totalorder %s24, 0
      %p114 = por %p112, %p113
      %s116 = sadd.s32 %s115, 1
      %p119 = scmp.eq.s32.totalorder %s18, 1
      %p120 = scmp.ne.s32.totalorder %s115, %s117
      %p121 = scmp.eq.s32.totalorder %s18, 0
      %p122 = por %p120, %p121
      %p123 = scmp.ne.s32.totalorder %s115, %s117
      %p124 = scmp.eq.s32.totalorder %s23, 1
      %p125 = por %p123, %p124
      %p126 = scmp.ne.s32.totalorder %s117, %s118
      %p127 = scmp.eq.s32.totalorder %s23, 0
      %p128 = por %p126, %p127
      %p129 = scmp.ne.s32.totalorder %s117, %s118
      %p130 = scmp.eq.s32.totalorder %s24, 1
      %p131 = por %p129, %p130
      %p133 = scmp.ne.s32.totalorder %s118, %s132
      %p134 = scmp.eq.s32.totalorder %s24, 0
      %p135 = por %p133, %p134
      %s137 = sadd.s32 %s136, 1
      %p140 = scmp.eq.s32.totalorder %s18, 1
      %p141 = scmp.ne.s32.totalorder %s136, %s138
      %p142 = scmp.eq.s32.totalorder %s18, 0
      %p143 = por %p141, %p142
      %p144 = scmp.ne.s32.totalorder %s136, %s138
      %p145 = scmp.eq.s32.totalorder %s23, 1
      %p146 = por %p144, %p145
      %p147 = scmp.ne.s32.totalorder %s138, %s139
      %p148 = scmp.eq.s32.totalorder %s23, 0
      %p149 = por %p147, %p148
      %p150 = scmp.ne.s32.totalorder %s138, %s139
      %p151 = scmp.eq.s32.totalorder %s24, 1
      %p152 = por %p150, %p151
      %p154 = scmp.ne.s32.totalorder %s139, %s153
      %p155 = scmp.eq.s32.totalorder %s24, 0
      %p156 = por %p154, %p155
      %s158 = sadd.s32 %s157, 1
      %p161 = scmp.eq.s32.totalorder %s18, 1
      %p162 = scmp.ne.s32.totalorder %s157, %s159
      %p163 = scmp.eq.s32.totalorder %s18, 0
      %p164 = por %p162, %p163
      %p165 = scmp.ne.s32.totalorder %s157, %s159
      %p166 = scmp.eq.s32.totalorder %s23, 1
      %p167 = por %p165, %p166
      %p168 = scmp.ne.s32.totalorder %s159, %s160
      %p169 = scmp.eq.s32.totalorder %s23, 0
      %p170 = por %p168, %p169
      %p171 = scmp.ne.s32.totalorder %s159, %s160
      %p172 = scmp.eq.s32.totalorder %s24, 1
      %p173 = por %p171, %p172
      %p175 = scmp.ne.s32.totalorder %s160, %s174
      %p176 = scmp.eq.s32.totalorder %s24, 0
      %p177 = por %p175, %p176
      %s178 = ssub.s32 %s18, %s25
      %p179 = scmp.eq.s32.totalorder %s178, 0
      %s181 = sadd.s32 %s180, 1
      %s182 = scalar_select %p179, %s180, %s181
      %p185 = pneg %p179
      %p186 = scmp.eq.s32.totalorder %s18, 1
      %p187 = por %p185, %p186
      %p188 = scmp.ne.s32.totalorder %s180, %s183
      %p189 = scmp.eq.s32.totalorder %s18, 0
      %p190 = por %p188, %p189
      %p191 = scmp.ne.s32.totalorder %s180, %s183
      %p192 = scmp.eq.s32.totalorder %s23, 1
      %p193 = por %p191, %p192
      %p194 = scmp.ne.s32.totalorder %s183, %s184
      %p195 = scmp.eq.s32.totalorder %s23, 0
      %p196 = por %p194, %p195
      %p197 = scmp.ne.s32.totalorder %s183, %s184
      %p198 = scmp.eq.s32.totalorder %s24, 1
      %p199 = por %p197, %p198
      %p201 = scmp.ne.s32.totalorder %s184, %s200
      %p202 = scmp.eq.s32.totalorder %s24, 0
      %p203 = por %p201, %p202
      %s204 = ssub.s32 %s18, %s25
      %p205 = scmp.eq.s32.totalorder %s204, 0
      %s207 = sadd.s32 %s206, 1
      %s208 = scalar_select %p205, %s206, %s207
      %p211 = pneg %p205
      %p212 = scmp.eq.s32.totalorder %s18, 1
      %p213 = por %p211, %p212
      %p214 = scmp.ne.s32.totalorder %s206, %s209
      %p215 = scmp.eq.s32.totalorder %s18, 0
      %p216 = por %p214, %p215
      %p217 = scmp.ne.s32.totalorder %s206, %s209
      %p218 = scmp.eq.s32.totalorder %s23, 1
      %p219 = por %p217, %p218
      %p220 = scmp.ne.s32.totalorder %s209, %s210
      %p221 = scmp.eq.s32.totalorder %s23, 0
      %p222 = por %p220, %p221
      %p223 = scmp.ne.s32.totalorder %s209, %s210
      %p224 = scmp.eq.s32.totalorder %s24, 1
      %p225 = por %p223, %p224
      %p227 = scmp.ne.s32.totalorder %s210, %s226
      %p228 = scmp.eq.s32.totalorder %s24, 0
      %p229 = por %p227, %p228
      %p230 = scmp.le.s32.totalorder 1, %s18
      %p231 = scmp.lt.s32.totalorder %s18, 3
      %p232 = pnand %p230, %p231
      %p233 = pneg %p232
      // Predicated region
      $region9: #{cnn_forward.1} parent=5 // pred_check
        _
      $region10: #{cnn_forward.1} parent=5 // pred_check_branch
        %235 = sbr.rel (%p232) target = $region12
      $region11: #{cnn_forward.1} parent=5 // pred_region
        %s236 = ssub.s32 %s18, 1
        // Predicated region
        $region13: #{cnn_forward.1} parent=11 // pred_check
          %p237 = pneg %p65
        $region14: #{cnn_forward.1} parent=11 // pred_check_branch
          %239 = sbr.rel (%p237) target = $region16
        $region15: #{cnn_forward.1} parent=11 // pred_region
          _
        $region16: #{cnn_forward.1} parent=11 // pred_fallthru
          _
        // Predicated region
        $region17: #{cnn_forward.1} parent=11 // pred_check
          %p240 = pneg %p86
        $region18: #{cnn_forward.1} parent=11 // pred_check_branch
          %242 = sbr.rel (%p240) target = $region20
        $region19: #{cnn_forward.1} parent=11 // pred_region
          _
        $region20: #{cnn_forward.1} parent=11 // pred_fallthru
          _
        // Predicated region
        $region21: #{cnn_forward.1} parent=11 // pred_check
          %p243 = pneg %p107
        $region22: #{cnn_forward.1} parent=11 // pred_check_branch
          %245 = sbr.rel (%p243) target = $region24
        $region23: #{cnn_forward.1} parent=11 // pred_region
          _
        $region24: #{cnn_forward.1} parent=11 // pred_fallthru
          _
        // Predicated region
        $region25: #{cnn_forward.1} parent=11 // pred_check
          %p246 = pneg %p128
        $region26: #{cnn_forward.1} parent=11 // pred_check_branch
          %248 = sbr.rel (%p246) target = $region28
        $region27: #{cnn_forward.1} parent=11 // pred_region
          _
        $region28: #{cnn_forward.1} parent=11 // pred_fallthru
          _
        // Predicated region
        $region29: #{cnn_forward.1} parent=11 // pred_check
          %p249 = pneg %p149
        $region30: #{cnn_forward.1} parent=11 // pred_check_branch
          %251 = sbr.rel (%p249) target = $region32
        $region31: #{cnn_forward.1} parent=11 // pred_region
          _
        $region32: #{cnn_forward.1} parent=11 // pred_fallthru
          _
        // Predicated region
        $region33: #{cnn_forward.1} parent=11 // pred_check
          %p252 = pneg %p170
        $region34: #{cnn_forward.1} parent=11 // pred_check_branch
          %254 = sbr.rel (%p252) target = $region36
        $region35: #{cnn_forward.1} parent=11 // pred_region
          _
        $region36: #{cnn_forward.1} parent=11 // pred_fallthru
          _
      $region12: #{cnn_forward.1} parent=5 // pred_fallthru
        _
      %p255 = scmp.lt.s32.totalorder %s18, 2
      // Predicated region
      $region37: #{cnn_forward.1} parent=5 // pred_check
        %p256 = pneg %p255
      $region38: #{cnn_forward.1} parent=5 // pred_check_branch
        %258 = sbr.rel (%p256) target = $region40
      $region39: #{cnn_forward.1} parent=5 // pred_region
        // Predicated region
        $region41: #{cnn_forward.1} parent=39 // pred_check
          %p259 = pneg %p38
        $region42: #{cnn_forward.1} parent=39 // pred_check_branch
          %261 = sbr.rel (%p259) target = $region44
        $region43: #{cnn_forward.1} parent=39 // pred_region
          %p262 = scmp.lt.s32.totalorder %s18, 1
          %s263 = scalar_select %p262, %s18, 1
          %s264 = smul.addr %s263, 4
          %s265 = smul.addr %s264, 8
          %s266 = scalar_lea.vmem %s0, %s265
        $region44: #{cnn_forward.1} parent=39 // pred_fallthru
          _
      $region40: #{cnn_forward.1} parent=5 // pred_fallthru
        _
      %p267 = scmp.le.s32.totalorder 1, %s18
      %p268 = scmp.lt.s32.totalorder %s18, 3
      %p269 = pnand %p267, %p268
      %p270 = pneg %p269
      // Predicated region
      $region45: #{cnn_forward.1} parent=5 // pred_check
        _
      $region46: #{cnn_forward.1} parent=5 // pred_check_branch
        %272 = sbr.rel (%p269) target = $region48
      $region47: #{cnn_forward.1} parent=5 // pred_region
        %s273 = ssub.s32 %s18, 1
        %p274 = scmp.lt.s32.totalorder %s23, 1
        %s275 = scalar_select %p274, %s23, 1
        %s276 = smul.addr %s275, 4
        %s277 = smul.addr %s276, 8
        %s278 = scalar_lea.vmem %s0, %s277
        %p279 = pneg %p44
        %p280 = pneg %p41
        %p281 = pneg %p65
        %p282 = pneg %p62
        %p283 = pneg %p86
        %p284 = pneg %p83
        %p285 = pneg %p107
        %p286 = pneg %p104
        %p287 = pneg %p128
        %p288 = pneg %p125
        %p289 = pneg %p149
        %p290 = pneg %p146
        %p291 = pneg %p170
        %p292 = pneg %p167
        %p293 = pneg %p196
        %p294 = pneg %p193
        %s295 = sand.u32 %s183, 1
        %s296 = scalar_lea.sflag [#allocation5], %s295
        %s297 = sand.u32 %s183, 1
        %s298 = scalar_lea.vmem [#allocation4], %s297
        %p299 = pneg %p222
        %p300 = pneg %p219
        %p301 = scmp.lt.s32.totalorder %s23, 1
        %s302 = scalar_select %p301, %s23, 1
        %s303 = smul.addr %s302, 2
        %s304 = smul.addr %s303, 8
        %s305 = scalar_lea.vmem %s8, %s304
        %p306 = scmp.lt.s32.totalorder %s23, 1
        %s307 = scalar_select %p306, %s23, 1
        %s308 = smul.addr %s307, 4
        %s309 = smul.addr %s308, 8
        %s310 = scalar_lea.vmem %s0, %s309
        %p311 = scmp.lt.s32.totalorder %s23, 1
        %s312 = scalar_select %p311, %s23, 1
        %s313 = smul.addr %s312, 2
        %s314 = smul.addr %s313, 8
        %s315 = scalar_lea.vmem %s8, %s314
        %vm316 = vcmask 261120
        %317 = vst.msk [vmem:[#allocation2] sm:$0xff] %vm316, 0.0
        %318 = vst.msk [vmem:[#allocation2 + $0x8] sm:$0xff] %vm316, 0.0
        %319 = vst.msk [vmem:[#allocation2 + $0x10] sm:$0xff] %vm316, 0.0
        %320 = vst.msk [vmem:[#allocation2 + $0x18] sm:$0xff] %vm316, 0.0
        %v321 = vld [vmem:[%s310] sm:$0xff]
        %v322 = vld [vmem:[%s310 + $0x8] sm:$0xff]
        %v323 = vld [vmem:[%s310 + $0x10] sm:$0xff]
        %v324 = vld [vmem:[%s310 + $0x18] sm:$0xf]
        %329 = vrot.lane.b32.xlu0 %v321, 2
        %v330 = vpop.permute.xlu0 %329
        %331 = vrot.lane.b32.xlu0 %v322, 2
        %v332 = vpop.permute.xlu0 %331
        %333 = vrot.lane.b32.xlu0 %v323, 2
        %v334 = vpop.permute.xlu0 %333
        %335 = vrot.lane.b32.xlu0 %v324, 2
        %v336 = vpop.permute.xlu0 %335
        %vm341 = vcmask 244752
        %342 = vst.msk [vmem:[#allocation2 + $0x2] sm:$0xff] %vm341, %v330
        %343 = vst.msk [vmem:[#allocation2 + $0xa] sm:$0xff] %vm341, %v332
        %344 = vst.msk [vmem:[#allocation2 + $0x12] sm:$0xff] %vm341, %v334
        %vm345 = vcmask 240656
        %346 = vst.msk [vmem:[#allocation2 + $0x1a] sm:$0xf] %vm345, %v336
        %v347 = vld [vmem:[#allocation2] sm:$0xff]
        %v348 = vld [vmem:[#allocation2 + $0x8] sm:$0xff]
        %v349 = vld [vmem:[#allocation2 + $0x10] sm:$0xff]
        %v350 = vld [vmem:[#allocation2 + $0x18] sm:$0xf]
        %v351 = vld [vmem:[#allocation2 + $0x1] sm:$0xff]
        %v352 = vld [vmem:[#allocation2 + $0x9] sm:$0xff]
        %v353 = vld [vmem:[#allocation2 + $0x11] sm:$0xff]
        %v354 = vld [vmem:[#allocation2 + $0x19] sm:$0xf]
        %v355 = vld [vmem:[#allocation2 + $0x2] sm:$0xff]
        %v356 = vld [vmem:[#allocation2 + $0xa] sm:$0xff]
        %v357 = vld [vmem:[#allocation2 + $0x12] sm:$0xff]
        %v358 = vld [vmem:[#allocation2 + $0x1a] sm:$0xf]
        %v359 = vld [vmem:[#allocation2 + $0x3] sm:$0xff]
        %v360 = vld [vmem:[#allocation2 + $0xb] sm:$0xff]
        %v361 = vld [vmem:[#allocation2 + $0x13] sm:$0xff]
        %v362 = vld [vmem:[#allocation2 + $0x1b] sm:$0xf]
        %v363 = vld [vmem:[#allocation2 + $0x4] sm:$0xff]
        %v364 = vld [vmem:[#allocation2 + $0xc] sm:$0xff]
        %v365 = vld [vmem:[#allocation2 + $0x14] sm:$0xff]
        %v366 = vld [vmem:[#allocation2 + $0x1c] sm:$0xf]
        %371 = vrot.lane.b32.xlu0 %v351, 32
        %v372 = vpop.permute.xlu0 %371
        %373 = vrot.lane.b32.xlu0 %v352, 32
        %v374 = vpop.permute.xlu0 %373
        %375 = vrot.lane.b32.xlu0 %v353, 32
        %v376 = vpop.permute.xlu0 %375
        %377 = vrot.lane.b32.xlu0 %v354, 32
        %v378 = vpop.permute.xlu0 %377
        %387 = vrot.lane.b32.xlu0 %v355, 64
        %v388 = vpop.permute.xlu0 %387
        %389 = vrot.lane.b32.xlu0 %v356, 64
        %v390 = vpop.permute.xlu0 %389
        %391 = vrot.lane.b32.xlu0 %v357, 64
        %v392 = vpop.permute.xlu0 %391
        %393 = vrot.lane.b32.xlu0 %v358, 64
        %v394 = vpop.permute.xlu0 %393
        %403 = vrot.lane.b32.xlu0 %v359, 96
        %v404 = vpop.permute.xlu0 %403
        %405 = vrot.lane.b32.xlu0 %v360, 96
        %v406 = vpop.permute.xlu0 %405
        %407 = vrot.lane.b32.xlu0 %v361, 96
        %v408 = vpop.permute.xlu0 %407
        %409 = vrot.lane.b32.xlu0 %v362, 96
        %v410 = vpop.permute.xlu0 %409
        %v415 = vsel %vm316, %v347, %v372
        %v416 = vsel %vm316, %v348, %v374
        %v417 = vsel %vm316, %v349, %v376
        %v418 = vsel %vm316, %v350, %v378
        %vm419 = vcmask 523264
        %v420 = vsel %vm419, %v415, %v388
        %v421 = vsel %vm419, %v416, %v390
        %v422 = vsel %vm419, %v417, %v392
        %v423 = vsel %vm419, %v418, %v394
        %vm424 = vcmask 785408
        %v425 = vsel %vm424, %v420, %v404
        %v426 = vsel %vm424, %v421, %v406
        %v427 = vsel %vm424, %v422, %v408
        %v428 = vsel %vm424, %v423, %v410
        %v429 = vld [vmem:[%s1] sm:$0xff]
        %v430 = vld [vmem:[%s1 + $0x8] sm:$0xff]
        %v431 = vld [vmem:[%s1 + $0x10] sm:$0xff]
        %v432 = vld [vmem:[%s1 + $0x18] sm:$0xff]
        %v433 = vld [vmem:[%s1 + $0x20] sm:$0xff]
        %v434 = vld [vmem:[%s1 + $0x28] sm:$0xff]
        %v435 = vld [vmem:[%s1 + $0x30] sm:$0xff]
        %v436 = vld [vmem:[%s1 + $0x38] sm:$0xff]
        %v437 = vld [vmem:[%s1 + $0x40] sm:$0xff]
        %v438 = vld [vmem:[%s1 + $0x48] sm:$0xff]
        %v439 = vld [vmem:[%s1 + $0x50] sm:$0xff]
        %v440 = vld [vmem:[%s1 + $0x58] sm:$0xff]
        %v441 = vld [vmem:[%s1 + $0x60] sm:$0xff]
        %v442 = vld [vmem:[%s1 + $0x68] sm:$0xff]
        %v443 = vld [vmem:[%s1 + $0x70] sm:$0xff]
        %v444 = vld [vmem:[%s1 + $0x78] sm:$0xff]
        %v445 = vld [vmem:[%s1 + $0x80] sm:$0xff]
        %v446 = vld [vmem:[%s1 + $0x88] sm:$0xff]
        %v447 = vld [vmem:[%s1 + $0x90] sm:$0xff]
        %v448 = vld [vmem:[%s1 + $0x98] sm:$0xff]
        %v449 = vld [vmem:[%s1 + $0xa0] sm:$0xff]
        %v450 = vld [vmem:[%s1 + $0xa8] sm:$0xff]
        %v451 = vld [vmem:[%s1 + $0xb0] sm:$0xff]
        %v452 = vld [vmem:[%s1 + $0xb8] sm:$0xff]
        %v453 = vld [vmem:[%s1 + $0xc0] sm:$0xff]
        %v454 = vld [vmem:[%s1 + $0xc8] sm:$0xff]
        %v455 = vld [vmem:[%s1 + $0xd0] sm:$0xff]
        %v456 = vld [vmem:[%s1 + $0xd8] sm:$0xff]
        %v457 = vld [vmem:[%s1 + $0xe0] sm:$0xff]
        %v458 = vld [vmem:[%s1 + $0xe8] sm:$0xff]
        %v459 = vld [vmem:[%s1 + $0xf0] sm:$0xff]
        %v460 = vld [vmem:[%s1 + $0xf8] sm:$0xff]
        %v461 = vld [vmem:[%s1 + $0x100] sm:$0xff]
        %v462 = vld [vmem:[%s1 + $0x108] sm:$0xff]
        %v463 = vld [vmem:[%s1 + $0x110] sm:$0xff]
        %v464 = vld [vmem:[%s1 + $0x118] sm:$0xff]
        %v465 = vld [vmem:[%s1 + $0x120] sm:$0xff]
        %v466 = vld [vmem:[%s1 + $0x128] sm:$0xff]
        %v467 = vld [vmem:[%s1 + $0x130] sm:$0xff]
        %v468 = vld [vmem:[%s1 + $0x138] sm:$0xff]
        %v469 = vld [vmem:[%s1 + $0x140] sm:$0xff]
        %v470 = vld [vmem:[%s1 + $0x148] sm:$0xff]
        %v471 = vld [vmem:[%s1 + $0x150] sm:$0xff]
        %v472 = vld [vmem:[%s1 + $0x158] sm:$0xff]
        %v473 = vld [vmem:[%s1 + $0x160] sm:$0xff]
        %v474 = vld [vmem:[%s1 + $0x168] sm:$0xff]
        %v475 = vld [vmem:[%s1 + $0x170] sm:$0xff]
        %v476 = vld [vmem:[%s1 + $0x178] sm:$0xff]
        %v477 = vld [vmem:[%s1 + $0x180] sm:$0xff]
        %v478 = vld [vmem:[%s1 + $0x188] sm:$0xff]
        %v479 = vld [vmem:[%s1 + $0x190] sm:$0xff]
        %v480 = vld [vmem:[%s1 + $0x198] sm:$0xff]
        %v481 = vld [vmem:[%s1 + $0x1a0] sm:$0xff]
        %v482 = vld [vmem:[%s1 + $0x1a8] sm:$0xff]
        %v483 = vld [vmem:[%s1 + $0x1b0] sm:$0xff]
        %v484 = vld [vmem:[%s1 + $0x1b8] sm:$0xff]
        %v485 = vld [vmem:[%s1 + $0x1c0] sm:$0xff]
        %v486 = vld [vmem:[%s1 + $0x1c8] sm:$0xff]
        %v487 = vld [vmem:[%s1 + $0x1d0] sm:$0xff]
        %v488 = vld [vmem:[%s1 + $0x1d8] sm:$0xff]
        %v489 = vld [vmem:[%s1 + $0x1e0] sm:$0xff]
        %v490 = vld [vmem:[%s1 + $0x1e8] sm:$0xff]
        %v491 = vld [vmem:[%s1 + $0x1f0] sm:$0xff]
        %v492 = vld [vmem:[%s1 + $0x1f8] sm:$0xff]
        %v493 = vld [vmem:[%s1 + $0x200] sm:$0xff]
        %v494 = vld [vmem:[%s1 + $0x208] sm:$0xff]
        %v495 = vld [vmem:[%s1 + $0x210] sm:$0xff]
        %v496 = vld [vmem:[%s1 + $0x218] sm:$0xff]
        %v497 = vld [vmem:[%s1 + $0x220] sm:$0xff]
        %v498 = vld [vmem:[%s1 + $0x228] sm:$0xff]
        %v499 = vld [vmem:[%s1 + $0x230] sm:$0xff]
        %v500 = vld [vmem:[%s1 + $0x238] sm:$0xff]
        %v501 = vld [vmem:[%s1 + $0x240] sm:$0xff]
        %v502 = vld [vmem:[%s1 + $0x248] sm:$0xff]
        %v503 = vld [vmem:[%s1 + $0x250] sm:$0xff]
        %v504 = vld [vmem:[%s1 + $0x258] sm:$0xff]
        %v505 = vld [vmem:[%s1 + $0x260] sm:$0xff]
        %v506 = vld [vmem:[%s1 + $0x268] sm:$0xff]
        %v507 = vld [vmem:[%s1 + $0x270] sm:$0xff]
        %v508 = vld [vmem:[%s1 + $0x278] sm:$0xff]
        %v509 = vld [vmem:[%s2] sm:$0xf]
        %v511 = vperm.slane %v509, 0
        %v512 = vperm.slane %v509, 1
        %v513 = vperm.slane %v509, 2
        %v514 = vperm.slane %v509, 3
        %v520 = vsel %vm316, %v363, 0
        %v523 = vsel %vm316, %v364, 0
        %v526 = vsel %vm316, %v365, 0
        %v529 = vsel %vm316, %v366, 0
        %531 = vmatpush.msra.mxu0 %v489
        %532 = vmatpush.msra.mxu0 %v485
        %533 = vmatpush.msra.mxu0 %v481
        %534 = vmatpush.msra.mxu0 %v477
        %535 = vmatpush.msra.mxu0 %v473
        %536 = vmatpush.msra.mxu0 %v469
        %537 = vmatpush.msra.mxu0 %v465
        %538 = vmatpush.msra.mxu0 %v461
        %539 = vmatpush.msra.mxu0 %v457
        %540 = vmatpush.msra.mxu0 %v453
        %541 = vmatpush.msra.mxu0 %v449
        %542 = vmatpush.msra.mxu0 %v445
        %543 = vmatpush.msra.mxu0 %v441
        %544 = vmatpush.msra.mxu0 %v437
        %545 = vmatpush.msra.mxu0 %v433
        %546 = vmatpush.msra.mxu0 %v429
        %547 = vmatmul.f32.gmra.mxu0 %v425
        %v548 = vpop.f32.mrf.mxu0
        %v549 = vadd.f32 %v511, %v548
        %550 = vmatmul.f32.gmra.mxu0 %v426
        %v551 = vpop.f32.mrf.mxu0
        %v552 = vadd.f32 %v511, %v551
        %553 = vmatmul.f32.gmra.mxu0 %v427
        %v554 = vpop.f32.mrf.mxu0
        %v555 = vadd.f32 %v511, %v554
        %556 = vmatmul.f32.gmra.mxu0 %v428
        %v557 = vpop.f32.mrf.mxu0
        %v558 = vadd.f32 %v511, %v557
        %559 = vdwg.mxu0
        %560 = vmatpush.msra.mxu0 0.0
        %561 = vmatpush.msra.mxu0 0.0
        %562 = vmatpush.msra.mxu0 0.0
        %563 = vmatpush.msra.mxu0 0.0
        %564 = vmatpush.msra.mxu0 0.0
        %565 = vmatpush.msra.mxu0 0.0
        %566 = vmatpush.msra.mxu0 0.0
        %567 = vmatpush.msra.mxu0 0.0
        %568 = vmatpush.msra.mxu0 0.0
        %569 = vmatpush.msra.mxu0 0.0
        %570 = vmatpush.msra.mxu0 0.0
        %571 = vmatpush.msra.mxu0 0.0
        %572 = vmatpush.msra.mxu0 %v505
        %573 = vmatpush.msra.mxu0 %v501
        %574 = vmatpush.msra.mxu0 %v497
        %575 = vmatpush.msra.mxu0 %v493
        %576 = vmatmul.f32.gmra.mxu0 %v520
        %v577 = vpop.f32.mrf.mxu0
        %v578 = vadd.f32 %v549, %v577
        %579 = vmatmul.f32.gmra.mxu0 %v523
        %v580 = vpop.f32.mrf.mxu0
        %v581 = vadd.f32 %v552, %v580
        %582 = vmatmul.f32.gmra.mxu0 %v526
        %v583 = vpop.f32.mrf.mxu0
        %v584 = vadd.f32 %v555, %v583
        %585 = vmatmul.f32.gmra.mxu0 %v529
        %v586 = vpop.f32.mrf.mxu0
        %v587 = vadd.f32 %v558, %v586
        %588 = vdwg.mxu0
        %589 = vmatpush.msra.mxu0 %v490
        %590 = vmatpush.msra.mxu0 %v486
        %591 = vmatpush.msra.mxu0 %v482
        %592 = vmatpush.msra.mxu0 %v478
        %593 = vmatpush.msra.mxu0 %v474
        %594 = vmatpush.msra.mxu0 %v470
        %595 = vmatpush.msra.mxu0 %v466
        %596 = vmatpush.msra.mxu0 %v462
        %597 = vmatpush.msra.mxu0 %v458
        %598 = vmatpush.msra.mxu0 %v454
        %599 = vmatpush.msra.mxu0 %v450
        %600 = vmatpush.msra.mxu0 %v446
        %601 = vmatpush.msra.mxu0 %v442
        %602 = vmatpush.msra.mxu0 %v438
        %603 = vmatpush.msra.mxu0 %v434
        %604 = vmatpush.msra.mxu0 %v430
        %605 = vmatmul.f32.gmra.mxu0 %v425
        %v606 = vpop.f32.mrf.mxu0
        %v607 = vadd.f32 %v512, %v606
        %608 = vmatmul.f32.gmra.mxu0 %v426
        %v609 = vpop.f32.mrf.mxu0
        %v610 = vadd.f32 %v512, %v609
        %611 = vmatmul.f32.gmra.mxu0 %v427
        %v612 = vpop.f32.mrf.mxu0
        %v613 = vadd.f32 %v512, %v612
        %614 = vmatmul.f32.gmra.mxu0 %v428
        %v615 = vpop.f32.mrf.mxu0
        %v616 = vadd.f32 %v512, %v615
        %617 = vdwg.mxu0
        %618 = vmatpush.msra.mxu0 0.0
        %619 = vmatpush.msra.mxu0 0.0
        %620 = vmatpush.msra.mxu0 0.0
        %621 = vmatpush.msra.mxu0 0.0
        %622 = vmatpush.msra.mxu0 0.0
        %623 = vmatpush.msra.mxu0 0.0
        %624 = vmatpush.msra.mxu0 0.0
        %625 = vmatpush.msra.mxu0 0.0
        %626 = vmatpush.msra.mxu0 0.0
        %627 = vmatpush.msra.mxu0 0.0
        %628 = vmatpush.msra.mxu0 0.0
        %629 = vmatpush.msra.mxu0 0.0
        %630 = vmatpush.msra.mxu0 %v506
        %631 = vmatpush.msra.mxu0 %v502
        %632 = vmatpush.msra.mxu0 %v498
        %633 = vmatpush.msra.mxu0 %v494
        %634 = vmatmul.f32.gmra.mxu0 %v520
        %v635 = vpop.f32.mrf.mxu0
        %v636 = vadd.f32 %v607, %v635
        %637 = vmatmul.f32.gmra.mxu0 %v523
        %v638 = vpop.f32.mrf.mxu0
        %v639 = vadd.f32 %v610, %v638
        %640 = vmatmul.f32.gmra.mxu0 %v526
        %v641 = vpop.f32.mrf.mxu0
        %v642 = vadd.f32 %v613, %v641
        %643 = vmatmul.f32.gmra.mxu0 %v529
        %v644 = vpop.f32.mrf.mxu0
        %v645 = vadd.f32 %v616, %v644
        %646 = vdwg.mxu0
        %647 = vmatpush.msra.mxu0 %v491
        %648 = vmatpush.msra.mxu0 %v487
        %649 = vmatpush.msra.mxu0 %v483
        %650 = vmatpush.msra.mxu0 %v479
        %651 = vmatpush.msra.mxu0 %v475
        %652 = vmatpush.msra.mxu0 %v471
        %653 = vmatpush.msra.mxu0 %v467
        %654 = vmatpush.msra.mxu0 %v463
        %655 = vmatpush.msra.mxu0 %v459
        %656 = vmatpush.msra.mxu0 %v455
        %657 = vmatpush.msra.mxu0 %v451
        %658 = vmatpush.msra.mxu0 %v447
        %659 = vmatpush.msra.mxu0 %v443
        %660 = vmatpush.msra.mxu0 %v439
        %661 = vmatpush.msra.mxu0 %v435
        %662 = vmatpush.msra.mxu0 %v431
        %663 = vmatmul.f32.gmra.mxu0 %v425
        %v664 = vpop.f32.mrf.mxu0
        %v665 = vadd.f32 %v513, %v664
        %666 = vmatmul.f32.gmra.mxu0 %v426
        %v667 = vpop.f32.mrf.mxu0
        %v668 = vadd.f32 %v513, %v667
        %669 = vmatmul.f32.gmra.mxu0 %v427
        %v670 = vpop.f32.mrf.mxu0
        %v671 = vadd.f32 %v513, %v670
        %672 = vmatmul.f32.gmra.mxu0 %v428
        %v673 = vpop.f32.mrf.mxu0
        %v674 = vadd.f32 %v513, %v673
        %675 = vdwg.mxu0
        %676 = vmatpush.msra.mxu0 0.0
        %677 = vmatpush.msra.mxu0 0.0
        %678 = vmatpush.msra.mxu0 0.0
        %679 = vmatpush.msra.mxu0 0.0
        %680 = vmatpush.msra.mxu0 0.0
        %681 = vmatpush.msra.mxu0 0.0
        %682 = vmatpush.msra.mxu0 0.0
        %683 = vmatpush.msra.mxu0 0.0
        %684 = vmatpush.msra.mxu0 0.0
        %685 = vmatpush.msra.mxu0 0.0
        %686 = vmatpush.msra.mxu0 0.0
        %687 = vmatpush.msra.mxu0 0.0
        %688 = vmatpush.msra.mxu0 %v507
        %689 = vmatpush.msra.mxu0 %v503
        %690 = vmatpush.msra.mxu0 %v499
        %691 = vmatpush.msra.mxu0 %v495
        %692 = vmatmul.f32.gmra.mxu0 %v520
        %v693 = vpop.f32.mrf.mxu0
        %v694 = vadd.f32 %v665, %v693
        %695 = vmatmul.f32.gmra.mxu0 %v523
        %v696 = vpop.f32.mrf.mxu0
        %v697 = vadd.f32 %v668, %v696
        %698 = vmatmul.f32.gmra.mxu0 %v526
        %v699 = vpop.f32.mrf.mxu0
        %v700 = vadd.f32 %v671, %v699
        %701 = vmatmul.f32.gmra.mxu0 %v529
        %v702 = vpop.f32.mrf.mxu0
        %v703 = vadd.f32 %v674, %v702
        %704 = vdwg.mxu0
        %705 = vmatpush.msra.mxu0 %v492
        %706 = vmatpush.msra.mxu0 %v488
        %707 = vmatpush.msra.mxu0 %v484
        %708 = vmatpush.msra.mxu0 %v480
        %709 = vmatpush.msra.mxu0 %v476
        %710 = vmatpush.msra.mxu0 %v472
        %711 = vmatpush.msra.mxu0 %v468
        %712 = vmatpush.msra.mxu0 %v464
        %713 = vmatpush.msra.mxu0 %v460
        %714 = vmatpush.msra.mxu0 %v456
        %715 = vmatpush.msra.mxu0 %v452
        %716 = vmatpush.msra.mxu0 %v448
        %717 = vmatpush.msra.mxu0 %v444
        %718 = vmatpush.msra.mxu0 %v440
        %719 = vmatpush.msra.mxu0 %v436
        %720 = vmatpush.msra.mxu0 %v432
        %721 = vmatmul.f32.gmra.mxu0 %v425
        %v722 = vpop.f32.mrf.mxu0
        %v723 = vadd.f32 %v514, %v722
        %724 = vmatmul.f32.gmra.mxu0 %v426
        %v725 = vpop.f32.mrf.mxu0
        %v726 = vadd.f32 %v514, %v725
        %727 = vmatmul.f32.gmra.mxu0 %v427
        %v728 = vpop.f32.mrf.mxu0
        %v729 = vadd.f32 %v514, %v728
        %730 = vmatmul.f32.gmra.mxu0 %v428
        %v731 = vpop.f32.mrf.mxu0
        %v732 = vadd.f32 %v514, %v731
        %733 = vdwg.mxu0
        %734 = vmatpush.msra.mxu0 0.0
        %735 = vmatpush.msra.mxu0 0.0
        %736 = vmatpush.msra.mxu0 0.0
        %737 = vmatpush.msra.mxu0 0.0
        %738 = vmatpush.msra.mxu0 0.0
        %739 = vmatpush.msra.mxu0 0.0
        %740 = vmatpush.msra.mxu0 0.0
        %741 = vmatpush.msra.mxu0 0.0
        %742 = vmatpush.msra.mxu0 0.0
        %743 = vmatpush.msra.mxu0 0.0
        %744 = vmatpush.msra.mxu0 0.0
        %745 = vmatpush.msra.mxu0 0.0
        %746 = vmatpush.msra.mxu0 %v508
        %747 = vmatpush.msra.mxu0 %v504
        %748 = vmatpush.msra.mxu0 %v500
        %749 = vmatpush.msra.mxu0 %v496
        %750 = vmatmul.f32.gmra.mxu0 %v520
        %v751 = vpop.f32.mrf.mxu0
        %v752 = vadd.f32 %v723, %v751
        %753 = vmatmul.f32.gmra.mxu0 %v523
        %v754 = vpop.f32.mrf.mxu0
        %v755 = vadd.f32 %v726, %v754
        %756 = vmatmul.f32.gmra.mxu0 %v526
        %v757 = vpop.f32.mrf.mxu0
        %v758 = vadd.f32 %v729, %v757
        %759 = vmatmul.f32.gmra.mxu0 %v529
        %v760 = vpop.f32.mrf.mxu0
        %v761 = vadd.f32 %v732, %v760
        %762 = vdwg.mxu0
        %v763 = vmax.f32 %v578, 0.0
        %v764 = vmax.f32 %v636, 0.0
        %v765 = vmax.f32 %v694, 0.0
        %v766 = vmax.f32 %v752, 0.0
        %v767 = vmax.f32 %v581, 0.0
        %v768 = vmax.f32 %v639, 0.0
        %v769 = vmax.f32 %v697, 0.0
        %v770 = vmax.f32 %v755, 0.0
        %v771 = vmax.f32 %v584, 0.0
        %v772 = vmax.f32 %v642, 0.0
        %v773 = vmax.f32 %v700, 0.0
        %v774 = vmax.f32 %v758, 0.0
        %v775 = vmax.f32 %v587, 0.0
        %v776 = vmax.f32 %v645, 0.0
        %v777 = vmax.f32 %v703, 0.0
        %v778 = vmax.f32 %v761, 0.0
        %v783 = vrot.slane %v763, 1
        %v784 = vrot.slane %v764, 1
        %v785 = vrot.slane %v765, 1
        %v786 = vrot.slane %v766, 1
        %v791 = vmax.f32 %v763, %v783
        %v792 = vmax.f32 %v764, %v784
        %v793 = vmax.f32 %v765, %v785
        %v794 = vmax.f32 %v766, %v786
        %v799 = vrot.slane %v767, 1
        %v800 = vrot.slane %v768, 1
        %v801 = vrot.slane %v769, 1
        %v802 = vrot.slane %v770, 1
        %v807 = vmax.f32 %v767, %v799
        %v808 = vmax.f32 %v768, %v800
        %v809 = vmax.f32 %v769, %v801
        %v810 = vmax.f32 %v770, %v802
        %v815 = vrot.slane %v771, 1
        %v816 = vrot.slane %v772, 1
        %v817 = vrot.slane %v773, 1
        %v818 = vrot.slane %v774, 1
        %v823 = vmax.f32 %v771, %v815
        %v824 = vmax.f32 %v772, %v816
        %v825 = vmax.f32 %v773, %v817
        %v826 = vmax.f32 %v774, %v818
        %v831 = vrot.slane %v775, 1
        %v832 = vrot.slane %v776, 1
        %v833 = vrot.slane %v777, 1
        %v834 = vrot.slane %v778, 1
        %v839 = vmax.f32 %v775, %v831
        %v840 = vmax.f32 %v776, %v832
        %v841 = vmax.f32 %v777, %v833
        %v842 = vmax.f32 %v778, %v834
        %v847 = vrot.slane %v791, 1
        %v848 = vrot.slane %v792, 1
        %v849 = vrot.slane %v793, 1
        %v850 = vrot.slane %v794, 1
        %v855 = vrot.slane %v791, 2
        %v856 = vrot.slane %v792, 2
        %v857 = vrot.slane %v793, 2
        %v858 = vrot.slane %v794, 2
        %v863 = vrot.slane %v791, 3
        %v864 = vrot.slane %v792, 3
        %v865 = vrot.slane %v793, 3
        %v866 = vrot.slane %v794, 3
        %v875 = vrot.slane %v807, 4
        %v876 = vrot.slane %v808, 4
        %v877 = vrot.slane %v809, 4
        %v878 = vrot.slane %v810, 4
        %v883 = vrot.slane %v807, 5
        %v884 = vrot.slane %v808, 5
        %v885 = vrot.slane %v809, 5
        %v886 = vrot.slane %v810, 5
        %v891 = vrot.slane %v807, 6
        %v892 = vrot.slane %v808, 6
        %v893 = vrot.slane %v809, 6
        %v894 = vrot.slane %v810, 6
        %v899 = vrot.slane %v807, 7
        %v900 = vrot.slane %v808, 7
        %v901 = vrot.slane %v809, 7
        %v902 = vrot.slane %v810, 7
        %v911 = vrot.slane %v823, 1
        %v912 = vrot.slane %v824, 1
        %v913 = vrot.slane %v825, 1
        %v914 = vrot.slane %v826, 1
        %v919 = vrot.slane %v823, 2
        %v920 = vrot.slane %v824, 2
        %v921 = vrot.slane %v825, 2
        %v922 = vrot.slane %v826, 2
        %v927 = vrot.slane %v823, 3
        %v928 = vrot.slane %v824, 3
        %v929 = vrot.slane %v825, 3
        %v930 = vrot.slane %v826, 3
        %v939 = vrot.slane %v839, 4
        %v940 = vrot.slane %v840, 4
        %v941 = vrot.slane %v841, 4
        %v942 = vrot.slane %v842, 4
        %v947 = vrot.slane %v839, 5
        %v948 = vrot.slane %v840, 5
        %v949 = vrot.slane %v841, 5
        %v950 = vrot.slane %v842, 5
        %vm955 = vcmask 1040384
        %v956 = vsel %vm955, %v791, %v847
        %v957 = vsel %vm955, %v792, %v848
        %v958 = vsel %vm955, %v793, %v849
        %v959 = vsel %vm955, %v794, %v850
        %vm960 = vcmask 1041408
        %v961 = vsel %vm960, %v956, %v855
        %v962 = vsel %vm960, %v957, %v856
        %v963 = vsel %vm960, %v958, %v857
        %v964 = vsel %vm960, %v959, %v858
        %vm965 = vcmask 1042432
        %v966 = vsel %vm965, %v961, %v863
        %v967 = vsel %vm965, %v962, %v864
        %v968 = vsel %vm965, %v963, %v865
        %v969 = vsel %vm965, %v964, %v866
        %vm970 = vcmask 1043456
        %v971 = vsel %vm970, %v966, %v875
        %v972 = vsel %vm970, %v967, %v876
        %v973 = vsel %vm970, %v968, %v877
        %v974 = vsel %vm970, %v969, %v878
        %vm975 = vcmask 1044480
        %v976 = vsel %vm975, %v971, %v883
        %v977 = vsel %vm975, %v972, %v884
        %v978 = vsel %vm975, %v973, %v885
        %v979 = vsel %vm975, %v974, %v886
        %vm980 = vcmask 1045504
        %v981 = vsel %vm980, %v976, %v891
        %v982 = vsel %vm980, %v977, %v892
        %v983 = vsel %vm980, %v978, %v893
        %v984 = vsel %vm980, %v979, %v894
        %vm985 = vcmask 1046528
        %v986 = vsel %vm985, %v981, %v899
        %v987 = vsel %vm985, %v982, %v900
        %v988 = vsel %vm985, %v983, %v901
        %v989 = vsel %vm985, %v984, %v902
        %v990 = vsel %vm955, %v823, %v911
        %v991 = vsel %vm955, %v824, %v912
        %v992 = vsel %vm955, %v825, %v913
        %v993 = vsel %vm955, %v826, %v914
        %v994 = vsel %vm960, %v990, %v919
        %v995 = vsel %vm960, %v991, %v920
        %v996 = vsel %vm960, %v992, %v921
        %v997 = vsel %vm960, %v993, %v922
        %v998 = vsel %vm965, %v994, %v927
        %v999 = vsel %vm965, %v995, %v928
        %v1000 = vsel %vm965, %v996, %v929
        %v1001 = vsel %vm965, %v997, %v930
        %v1002 = vsel %vm970, %v998, %v939
        %v1003 = vsel %vm970, %v999, %v940
        %v1004 = vsel %vm970, %v1000, %v941
        %v1005 = vsel %vm970, %v1001, %v942
        %v1006 = vsel %vm975, %v1002, %v947
        %v1007 = vsel %vm975, %v1003, %v948
        %v1008 = vsel %vm975, %v1004, %v949
        %v1009 = vsel %vm975, %v1005, %v950
        %1012 = vrot.lane.b32.xlu0 %v986, 112
        %v1013 = vpop.permute.xlu0 %1012
        %1014 = vrot.lane.b32.xlu0 %v1006, 112
        %v1015 = vpop.permute.xlu0 %1014
        %v1018 = vmax.f32 %v986, %v1013
        %v1019 = vmax.f32 %v1006, %v1015
        %1022 = vrot.lane.b32.xlu0 %v987, 112
        %v1023 = vpop.permute.xlu0 %1022
        %1024 = vrot.lane.b32.xlu0 %v1007, 112
        %v1025 = vpop.permute.xlu0 %1024
        %v1028 = vmax.f32 %v987, %v1023
        %v1029 = vmax.f32 %v1007, %v1025
        %1032 = vrot.lane.b32.xlu0 %v988, 112
        %v1033 = vpop.permute.xlu0 %1032
        %1034 = vrot.lane.b32.xlu0 %v1008, 112
        %v1035 = vpop.permute.xlu0 %1034
        %v1038 = vmax.f32 %v988, %v1033
        %v1039 = vmax.f32 %v1008, %v1035
        %1042 = vrot.lane.b32.xlu0 %v989, 112
        %v1043 = vpop.permute.xlu0 %1042
        %1044 = vrot.lane.b32.xlu0 %v1009, 112
        %v1045 = vpop.permute.xlu0 %1044
        %v1048 = vmax.f32 %v989, %v1043
        %v1049 = vmax.f32 %v1009, %v1045
        %1052 = vrot.lane.b32.xlu0 %v1018, 112
        %v1053 = vpop.permute.xlu0 %1052
        %1054 = vrot.lane.b32.xlu0 %v1019, 112
        %v1055 = vpop.permute.xlu0 %1054
        %1058 = vrot.lane.b32.xlu0 %v1018, 96
        %v1059 = vpop.permute.xlu0 %1058
        %1060 = vrot.lane.b32.xlu0 %v1019, 96
        %v1061 = vpop.permute.xlu0 %1060
        %1064 = vrot.lane.b32.xlu0 %v1018, 80
        %v1065 = vpop.permute.xlu0 %1064
        %1066 = vrot.lane.b32.xlu0 %v1019, 80
        %v1067 = vpop.permute.xlu0 %1066
        %1072 = vrot.lane.b32.xlu0 %v1028, 64
        %v1073 = vpop.permute.xlu0 %1072
        %1074 = vrot.lane.b32.xlu0 %v1029, 64
        %v1075 = vpop.permute.xlu0 %1074
        %1078 = vrot.lane.b32.xlu0 %v1028, 48
        %v1079 = vpop.permute.xlu0 %1078
        %1080 = vrot.lane.b32.xlu0 %v1029, 48
        %v1081 = vpop.permute.xlu0 %1080
        %1084 = vrot.lane.b32.xlu0 %v1028, 32
        %v1085 = vpop.permute.xlu0 %1084
        %1086 = vrot.lane.b32.xlu0 %v1029, 32
        %v1087 = vpop.permute.xlu0 %1086
        %1090 = vrot.lane.b32.xlu0 %v1028, 16
        %v1091 = vpop.permute.xlu0 %1090
        %1092 = vrot.lane.b32.xlu0 %v1029, 16
        %v1093 = vpop.permute.xlu0 %1092
        %1098 = vrot.lane.b32.xlu0 %v1038, 112
        %v1099 = vpop.permute.xlu0 %1098
        %1100 = vrot.lane.b32.xlu0 %v1039, 112
        %v1101 = vpop.permute.xlu0 %1100
        %1104 = vrot.lane.b32.xlu0 %v1038, 96
        %v1105 = vpop.permute.xlu0 %1104
        %1106 = vrot.lane.b32.xlu0 %v1039, 96
        %v1107 = vpop.permute.xlu0 %1106
        %1110 = vrot.lane.b32.xlu0 %v1038, 80
        %v1111 = vpop.permute.xlu0 %1110
        %1112 = vrot.lane.b32.xlu0 %v1039, 80
        %v1113 = vpop.permute.xlu0 %1112
        %1118 = vrot.lane.b32.xlu0 %v1048, 64
        %v1119 = vpop.permute.xlu0 %1118
        %1120 = vrot.lane.b32.xlu0 %v1049, 64
        %v1121 = vpop.permute.xlu0 %1120
        %1124 = vrot.lane.b32.xlu0 %v1048, 48
        %v1125 = vpop.permute.xlu0 %1124
        %1126 = vrot.lane.b32.xlu0 %v1049, 48
        %v1127 = vpop.permute.xlu0 %1126
        %vm1130 = vcmask 130048
        %v1131 = vsel %vm1130, %v1018, %v1053
        %v1132 = vsel %vm1130, %v1019, %v1055
        %v1133 = vsel %vm316, %v1131, %v1059
        %v1134 = vsel %vm316, %v1132, %v1061
        %vm1135 = vcmask 392192
        %v1136 = vsel %vm1135, %v1133, %v1065
        %v1137 = vsel %vm1135, %v1134, %v1067
        %v1138 = vsel %vm419, %v1136, %v1073
        %v1139 = vsel %vm419, %v1137, %v1075
        %vm1140 = vcmask 654336
        %v1141 = vsel %vm1140, %v1138, %v1079
        %v1142 = vsel %vm1140, %v1139, %v1081
        %v1143 = vsel %vm424, %v1141, %v1085
        %v1144 = vsel %vm424, %v1142, %v1087
        %vm1145 = vcmask 916480
        %v1146 = vsel %vm1145, %v1143, %v1091
        %v1147 = vsel %vm1145, %v1144, %v1093
        %v1148 = vsel %vm1130, %v1038, %v1099
        %v1149 = vsel %vm1130, %v1039, %v1101
        %v1150 = vsel %vm316, %v1148, %v1105
        %v1151 = vsel %vm316, %v1149, %v1107
        %v1152 = vsel %vm1135, %v1150, %v1111
        %v1153 = vsel %vm1135, %v1151, %v1113
        %v1154 = vsel %vm419, %v1152, %v1119
        %v1155 = vsel %vm419, %v1153, %v1121
        %v1156 = vsel %vm1140, %v1154, %v1125
        %v1157 = vsel %vm1140, %v1155, %v1127
        %1158 = vst [vmem:[#allocation3] sm:$0xff] 0.0
        %1159 = vst [vmem:[#allocation3 + $0x8] sm:$0xff] 0.0
        %1160 = vst.msk [vmem:[#allocation3 + $0x10] sm:$0xff] %vm316, 0.0
        %1161 = vst [vmem:[#allocation3 + $0x18] sm:$0xff] 0.0
        %1162 = vst [vmem:[#allocation3 + $0x20] sm:$0xff] 0.0
        %1163 = vst.msk [vmem:[#allocation3 + $0x28] sm:$0xff] %vm316, 0.0
        %1164 = vst [vmem:[#allocation3 + $0x30] sm:$0x3] 0.0
        %1165 = vst [vmem:[#allocation3 + $0x38] sm:$0x3] 0.0
        %vm1166 = vcmask 254976
        %1167 = vst.msk [vmem:[#allocation3 + $0x40] sm:$0x3] %vm1166, 0.0
        %v1172 = vrot.slane %v1146, 6
        %v1173 = vrot.slane %v1156, 6
        %v1174 = vrot.slane %v1147, 6
        %v1175 = vsel %vm960, %v1172, %v1174
        %v1176 = vrot.slane %v1157, 6
        %v1177 = vsel %vm960, %v1173, %v1176
        %1178 = vrot.lane.b32.xlu0 %v1172, 32
        %v1179 = vpop.permute.xlu0 %1178
        %1180 = vrot.lane.b32.xlu0 %v1173, 32
        %v1181 = vpop.permute.xlu0 %1180
        %1182 = vrot.lane.b32.xlu0 %v1175, 32
        %v1183 = vpop.permute.xlu0 %1182
        %1184 = vrot.lane.b32.xlu0 %v1177, 32
        %v1185 = vpop.permute.xlu0 %1184
        %v1186 = vsel %vm316, %v1179, %v1181
        %v1187 = vsel %vm316, %v1183, %v1185
        %vm1192 = vcmask 1047810
        %1193 = vst.msk [vmem:[#allocation3] sm:$0xfc] %vm1192, %v1179
        %1194 = vst [vmem:[#allocation3 + $0x8] sm:$0xfc] %v1186
        %vm1195 = vcmask 1047808
        %1196 = vst.msk [vmem:[#allocation3 + $0x18] sm:$0xff] %vm1195, %v1183
        %1197 = vst [vmem:[#allocation3 + $0x20] sm:$0xff] %v1187
        %v1198 = vld [vmem:[#allocation3] sm:$0xff]
        %v1199 = vld [vmem:[#allocation3 + $0x8] sm:$0xff]
        %v1200 = vld [vmem:[#allocation3 + $0x10] sm:$0xff]
        %v1201 = vld [vmem:[#allocation3 + $0x18] sm:$0x3f]
        %v1202 = vld [vmem:[#allocation3 + $0x20] sm:$0x3f]
        %v1203 = vld [vmem:[#allocation3 + $0x28] sm:$0x3f]
        %v1204 = vld [vmem:[#allocation3] sm:$0xfe]
        %v1205 = vld [vmem:[#allocation3 + $0x8] sm:$0xfe]
        %v1206 = vld [vmem:[#allocation3 + $0x10] sm:$0xfe]
        %v1207 = vld [vmem:[#allocation3 + $0x18] sm:$0x7f]
        %v1208 = vld [vmem:[#allocation3 + $0x20] sm:$0x7f]
        %v1209 = vld [vmem:[#allocation3 + $0x28] sm:$0x7f]
        %v1210 = vld [vmem:[#allocation3] sm:$0xfc]
        %v1211 = vld [vmem:[#allocation3 + $0x8] sm:$0xfc]
        %v1212 = vld [vmem:[#allocation3 + $0x10] sm:$0xfc]
        %v1213 = vld [vmem:[#allocation3 + $0x18] sm:$0xff]
        %v1214 = vld [vmem:[#allocation3 + $0x20] sm:$0xff]
        %v1215 = vld [vmem:[#allocation3 + $0x28] sm:$0xff]
        %v1216 = vld [vmem:[#allocation3] sm:$0xf8]
        %v1217 = vld [vmem:[#allocation3 + $0x8] sm:$0xf8]
        %v1218 = vld [vmem:[#allocation3 + $0x10] sm:$0xf8]
        %v1219 = vld [vmem:[#allocation3 + $0x30] sm:$0x1]
        %v1220 = vld [vmem:[#allocation3 + $0x38] sm:$0x1]
        %v1221 = vld [vmem:[#allocation3 + $0x40] sm:$0x1]
        %v1222 = vld [vmem:[#allocation3] sm:$0xf0]
        %v1223 = vld [vmem:[#allocation3 + $0x8] sm:$0xf0]
        %v1224 = vld [vmem:[#allocation3 + $0x10] sm:$0xf0]
        %v1225 = vld [vmem:[#allocation3 + $0x30] sm:$0x3]
        %v1226 = vld [vmem:[#allocation3 + $0x38] sm:$0x3]
        %v1227 = vld [vmem:[#allocation3 + $0x40] sm:$0x3]
        %v1234 = vrot.slane %v1204, 1
        %v1235 = vrot.slane %v1207, 1
        %v1236 = vsel %vm985, %v1234, %v1235
        %v1237 = vrot.slane %v1205, 1
        %v1238 = vrot.slane %v1208, 1
        %v1239 = vsel %vm985, %v1237, %v1238
        %v1240 = vrot.slane %v1206, 1
        %v1241 = vrot.slane %v1209, 1
        %v1242 = vsel %vm985, %v1240, %v1241
        %1243 = vrot.lane.b32.xlu0 %v1236, 32
        %v1244 = vpop.permute.xlu0 %1243
        %1245 = vrot.lane.b32.xlu0 %v1239, 32
        %v1246 = vpop.permute.xlu0 %1245
        %1247 = vrot.lane.b32.xlu0 %v1242, 32
        %v1248 = vpop.permute.xlu0 %1247
        %1249 = vrot.lane.b32.xlu0 %v1235, 32
        %v1250 = vpop.permute.xlu0 %1249
        %1251 = vrot.lane.b32.xlu0 %v1238, 32
        %v1252 = vpop.permute.xlu0 %1251
        %1253 = vrot.lane.b32.xlu0 %v1241, 32
        %v1254 = vpop.permute.xlu0 %1253
        %v1255 = vsel %vm316, %v1244, %v1246
        %v1256 = vsel %vm316, %v1246, %v1248
        %v1257 = vsel %vm316, %v1250, %v1252
        %v1258 = vsel %vm316, %v1252, %v1254
        %v1271 = vrot.slane %v1210, 2
        %v1272 = vrot.slane %v1213, 2
        %v1273 = vsel %vm980, %v1271, %v1272
        %v1274 = vrot.slane %v1211, 2
        %v1275 = vrot.slane %v1214, 2
        %v1276 = vsel %vm980, %v1274, %v1275
        %v1277 = vrot.slane %v1212, 2
        %v1278 = vrot.slane %v1215, 2
        %v1279 = vsel %vm980, %v1277, %v1278
        %1280 = vrot.lane.b32.xlu0 %v1273, 64
        %v1281 = vpop.permute.xlu0 %1280
        %1282 = vrot.lane.b32.xlu0 %v1276, 64
        %v1283 = vpop.permute.xlu0 %1282
        %1284 = vrot.lane.b32.xlu0 %v1279, 64
        %v1285 = vpop.permute.xlu0 %1284
        %1286 = vrot.lane.b32.xlu0 %v1272, 64
        %v1287 = vpop.permute.xlu0 %1286
        %1288 = vrot.lane.b32.xlu0 %v1275, 64
        %v1289 = vpop.permute.xlu0 %1288
        %1290 = vrot.lane.b32.xlu0 %v1278, 64
        %v1291 = vpop.permute.xlu0 %1290
        %v1292 = vsel %vm419, %v1281, %v1283
        %v1293 = vsel %vm419, %v1283, %v1285
        %v1294 = vsel %vm419, %v1287, %v1289
        %v1295 = vsel %vm419, %v1289, %v1291
        %v1308 = vrot.slane %v1216, 3
        %v1309 = vrot.slane %v1213, 3
        %v1310 = vsel %vm975, %v1308, %v1309
        %v1311 = vrot.slane %v1217, 3
        %v1312 = vrot.slane %v1214, 3
        %v1313 = vsel %vm975, %v1311, %v1312
        %v1314 = vrot.slane %v1218, 3
        %v1315 = vrot.slane %v1215, 3
        %v1316 = vsel %vm975, %v1314, %v1315
        %v1317 = vrot.slane %v1219, 3
        %v1318 = vsel %vm975, %v1309, %v1317
        %v1319 = vrot.slane %v1220, 3
        %v1320 = vsel %vm975, %v1312, %v1319
        %v1321 = vrot.slane %v1221, 3
        %v1322 = vsel %vm975, %v1315, %v1321
        %1323 = vrot.lane.b32.xlu0 %v1310, 96
        %v1324 = vpop.permute.xlu0 %1323
        %1325 = vrot.lane.b32.xlu0 %v1313, 96
        %v1326 = vpop.permute.xlu0 %1325
        %1327 = vrot.lane.b32.xlu0 %v1316, 96
        %v1328 = vpop.permute.xlu0 %1327
        %1329 = vrot.lane.b32.xlu0 %v1318, 96
        %v1330 = vpop.permute.xlu0 %1329
        %1331 = vrot.lane.b32.xlu0 %v1320, 96
        %v1332 = vpop.permute.xlu0 %1331
        %1333 = vrot.lane.b32.xlu0 %v1322, 96
        %v1334 = vpop.permute.xlu0 %1333
        %v1335 = vsel %vm424, %v1324, %v1326
        %v1336 = vsel %vm424, %v1326, %v1328
        %v1337 = vsel %vm424, %v1330, %v1332
        %v1338 = vsel %vm424, %v1332, %v1334
        %v1351 = vrot.slane %v1222, 4
        %v1352 = vrot.slane %v1213, 4
        %v1353 = vsel %vm970, %v1351, %v1352
        %v1354 = vrot.slane %v1223, 4
        %v1355 = vrot.slane %v1214, 4
        %v1356 = vsel %vm970, %v1354, %v1355
        %v1357 = vrot.slane %v1224, 4
        %v1358 = vrot.slane %v1215, 4
        %v1359 = vsel %vm970, %v1357, %v1358
        %v1360 = vrot.slane %v1225, 4
        %v1361 = vsel %vm970, %v1352, %v1360
        %v1362 = vrot.slane %v1226, 4
        %v1363 = vsel %vm970, %v1355, %v1362
        %v1364 = vrot.slane %v1227, 4
        %v1365 = vsel %vm970, %v1358, %v1364
        %v1370 = vsel %vm316, %v1200, %v1244
        %v1371 = vsel %vm316, %v1203, %v1250
        %v1372 = vsel %vm419, %v1256, %v1281
        %v1373 = vsel %vm419, %v1258, %v1287
        %v1374 = vsel %vm424, %v1293, %v1324
        %v1375 = vsel %vm424, %v1295, %v1330
        %v1376 = vld [vmem:[%s3] sm:$0xff]
        %v1377 = vld [vmem:[%s3 + $0x8] sm:$0xff]
        %v1378 = vld [vmem:[%s3 + $0x10] sm:$0xff]
        %v1379 = vld [vmem:[%s3 + $0x18] sm:$0xff]
        %v1380 = vld [vmem:[%s3 + $0x20] sm:$0xff]
        %v1381 = vld [vmem:[%s3 + $0x28] sm:$0xff]
        %v1382 = vld [vmem:[%s3 + $0x30] sm:$0xff]
        %v1383 = vld [vmem:[%s3 + $0x38] sm:$0xff]
        %v1384 = vld [vmem:[%s3 + $0x40] sm:$0xff]
        %v1385 = vld [vmem:[%s3 + $0x48] sm:$0xff]
        %v1386 = vld [vmem:[%s3 + $0x50] sm:$0xff]
        %v1387 = vld [vmem:[%s3 + $0x58] sm:$0xff]
        %v1388 = vld [vmem:[%s3 + $0x60] sm:$0xff]
        %v1389 = vld [vmem:[%s3 + $0x68] sm:$0xff]
        %v1390 = vld [vmem:[%s3 + $0x70] sm:$0xff]
        %v1391 = vld [vmem:[%s3 + $0x78] sm:$0xff]
        %v1392 = vld [vmem:[%s3 + $0x80] sm:$0xff]
        %v1393 = vld [vmem:[%s3 + $0x88] sm:$0xff]
        %v1394 = vld [vmem:[%s3 + $0x90] sm:$0xff]
        %v1395 = vld [vmem:[%s3 + $0x98] sm:$0xff]
        %v1396 = vld [vmem:[%s3 + $0xa0] sm:$0xff]
        %v1397 = vld [vmem:[%s3 + $0xa8] sm:$0xff]
        %v1398 = vld [vmem:[%s3 + $0xb0] sm:$0xff]
        %v1399 = vld [vmem:[%s3 + $0xb8] sm:$0xff]
        %v1400 = vld [vmem:[%s3 + $0xc0] sm:$0xff]
        %v1401 = vld [vmem:[%s3 + $0xc8] sm:$0xff]
        %v1402 = vld [vmem:[%s3 + $0xd0] sm:$0xff]
        %v1403 = vld [vmem:[%s3 + $0xd8] sm:$0xff]
        %v1404 = vld [vmem:[%s3 + $0xe0] sm:$0xff]
        %v1405 = vld [vmem:[%s3 + $0xe8] sm:$0xff]
        %v1406 = vld [vmem:[%s3 + $0xf0] sm:$0xff]
        %v1407 = vld [vmem:[%s3 + $0xf8] sm:$0xff]
        %v1408 = vld [vmem:[%s3 + $0x100] sm:$0xff]
        %v1409 = vld [vmem:[%s3 + $0x108] sm:$0xff]
        %v1410 = vld [vmem:[%s3 + $0x110] sm:$0xff]
        %v1411 = vld [vmem:[%s3 + $0x118] sm:$0xff]
        %v1412 = vld [vmem:[%s3 + $0x120] sm:$0xff]
        %v1413 = vld [vmem:[%s3 + $0x128] sm:$0xff]
        %v1414 = vld [vmem:[%s3 + $0x130] sm:$0xff]
        %v1415 = vld [vmem:[%s3 + $0x138] sm:$0xff]
        %v1416 = vld [vmem:[%s3 + $0x140] sm:$0xff]
        %v1417 = vld [vmem:[%s3 + $0x148] sm:$0xff]
        %v1418 = vld [vmem:[%s3 + $0x150] sm:$0xff]
        %v1419 = vld [vmem:[%s3 + $0x158] sm:$0xff]
        %v1420 = vld [vmem:[%s3 + $0x160] sm:$0xff]
        %v1421 = vld [vmem:[%s3 + $0x168] sm:$0xff]
        %v1422 = vld [vmem:[%s3 + $0x170] sm:$0xff]
        %v1423 = vld [vmem:[%s3 + $0x178] sm:$0xff]
        %v1424 = vld [vmem:[%s3 + $0x180] sm:$0xff]
        %v1425 = vld [vmem:[%s3 + $0x188] sm:$0xff]
        %v1426 = vld [vmem:[%s3 + $0x190] sm:$0xff]
        %v1427 = vld [vmem:[%s3 + $0x198] sm:$0xff]
        %v1428 = vld [vmem:[%s3 + $0x1a0] sm:$0xff]
        %v1429 = vld [vmem:[%s3 + $0x1a8] sm:$0xff]
        %v1430 = vld [vmem:[%s3 + $0x1b0] sm:$0xff]
        %v1431 = vld [vmem:[%s3 + $0x1b8] sm:$0xff]
        %v1432 = vld [vmem:[%s3 + $0x1c0] sm:$0xff]
        %v1433 = vld [vmem:[%s3 + $0x1c8] sm:$0xff]
        %v1434 = vld [vmem:[%s3 + $0x1d0] sm:$0xff]
        %v1435 = vld [vmem:[%s3 + $0x1d8] sm:$0xff]
        %v1436 = vld [vmem:[%s3 + $0x1e0] sm:$0xff]
        %v1437 = vld [vmem:[%s3 + $0x1e8] sm:$0xff]
        %v1438 = vld [vmem:[%s3 + $0x1f0] sm:$0xff]
        %v1439 = vld [vmem:[%s3 + $0x1f8] sm:$0xff]
        %v1440 = vld [vmem:[%s3 + $0x200] sm:$0xff]
        %v1441 = vld [vmem:[%s3 + $0x208] sm:$0xff]
        %v1442 = vld [vmem:[%s3 + $0x210] sm:$0xff]
        %v1443 = vld [vmem:[%s3 + $0x218] sm:$0xff]
        %v1444 = vld [vmem:[%s3 + $0x220] sm:$0xff]
        %v1445 = vld [vmem:[%s3 + $0x228] sm:$0xff]
        %v1446 = vld [vmem:[%s3 + $0x230] sm:$0xff]
        %v1447 = vld [vmem:[%s3 + $0x238] sm:$0xff]
        %v1448 = vld [vmem:[%s3 + $0x240] sm:$0xff]
        %v1449 = vld [vmem:[%s3 + $0x248] sm:$0xff]
        %v1450 = vld [vmem:[%s3 + $0x250] sm:$0xff]
        %v1451 = vld [vmem:[%s3 + $0x258] sm:$0xff]
        %v1452 = vld [vmem:[%s3 + $0x260] sm:$0xff]
        %v1453 = vld [vmem:[%s3 + $0x268] sm:$0xff]
        %v1454 = vld [vmem:[%s3 + $0x270] sm:$0xff]
        %v1455 = vld [vmem:[%s3 + $0x278] sm:$0xff]
        %v1456 = vld [vmem:[%s3 + $0x280] sm:$0xff]
        %v1457 = vld [vmem:[%s3 + $0x288] sm:$0xff]
        %v1458 = vld [vmem:[%s3 + $0x290] sm:$0xff]
        %v1459 = vld [vmem:[%s3 + $0x298] sm:$0xff]
        %v1460 = vld [vmem:[%s3 + $0x2a0] sm:$0xff]
        %v1461 = vld [vmem:[%s3 + $0x2a8] sm:$0xff]
        %v1462 = vld [vmem:[%s3 + $0x2b0] sm:$0xff]
        %v1463 = vld [vmem:[%s3 + $0x2b8] sm:$0xff]
        %v1464 = vld [vmem:[%s3 + $0x2c0] sm:$0xff]
        %v1465 = vld [vmem:[%s3 + $0x2c8] sm:$0xff]
        %v1466 = vld [vmem:[%s3 + $0x2d0] sm:$0xff]
        %v1467 = vld [vmem:[%s3 + $0x2d8] sm:$0xff]
        %v1468 = vld [vmem:[%s3 + $0x2e0] sm:$0xff]
        %v1469 = vld [vmem:[%s3 + $0x2e8] sm:$0xff]
        %v1470 = vld [vmem:[%s3 + $0x2f0] sm:$0xff]
        %v1471 = vld [vmem:[%s3 + $0x2f8] sm:$0xff]
        %v1472 = vld [vmem:[%s3 + $0x300] sm:$0xff]
        %v1473 = vld [vmem:[%s3 + $0x308] sm:$0xff]
        %v1474 = vld [vmem:[%s3 + $0x310] sm:$0xff]
        %v1475 = vld [vmem:[%s3 + $0x318] sm:$0xff]
        %v1476 = vld [vmem:[%s3 + $0x320] sm:$0xff]
        %v1477 = vld [vmem:[%s3 + $0x328] sm:$0xff]
        %v1478 = vld [vmem:[%s3 + $0x330] sm:$0xff]
        %v1479 = vld [vmem:[%s3 + $0x338] sm:$0xff]
        %v1480 = vld [vmem:[%s3 + $0x340] sm:$0xff]
        %v1481 = vld [vmem:[%s3 + $0x348] sm:$0xff]
        %v1482 = vld [vmem:[%s3 + $0x350] sm:$0xff]
        %v1483 = vld [vmem:[%s3 + $0x358] sm:$0xff]
        %v1484 = vld [vmem:[%s3 + $0x360] sm:$0xff]
        %v1485 = vld [vmem:[%s3 + $0x368] sm:$0xff]
        %v1486 = vld [vmem:[%s3 + $0x370] sm:$0xff]
        %v1487 = vld [vmem:[%s3 + $0x378] sm:$0xff]
        %v1488 = vld [vmem:[%s3 + $0x380] sm:$0xff]
        %v1489 = vld [vmem:[%s3 + $0x388] sm:$0xff]
        %v1490 = vld [vmem:[%s3 + $0x390] sm:$0xff]
        %v1491 = vld [vmem:[%s3 + $0x398] sm:$0xff]
        %v1492 = vld [vmem:[%s3 + $0x3a0] sm:$0xff]
        %v1493 = vld [vmem:[%s3 + $0x3a8] sm:$0xff]
        %v1494 = vld [vmem:[%s3 + $0x3b0] sm:$0xff]
        %v1495 = vld [vmem:[%s3 + $0x3b8] sm:$0xff]
        %v1496 = vld [vmem:[%s3 + $0x3c0] sm:$0xff]
        %v1497 = vld [vmem:[%s3 + $0x3c8] sm:$0xff]
        %v1498 = vld [vmem:[%s3 + $0x3d0] sm:$0xff]
        %v1499 = vld [vmem:[%s3 + $0x3d8] sm:$0xff]
        %v1500 = vld [vmem:[%s3 + $0x3e0] sm:$0xff]
        %v1501 = vld [vmem:[%s3 + $0x3e8] sm:$0xff]
        %v1502 = vld [vmem:[%s3 + $0x3f0] sm:$0xff]
        %v1503 = vld [vmem:[%s3 + $0x3f8] sm:$0xff]
        %v1504 = vld [vmem:[%s3 + $0x400] sm:$0xff]
        %v1505 = vld [vmem:[%s3 + $0x408] sm:$0xff]
        %v1506 = vld [vmem:[%s3 + $0x410] sm:$0xff]
        %v1507 = vld [vmem:[%s3 + $0x418] sm:$0xff]
        %v1508 = vld [vmem:[%s3 + $0x420] sm:$0xff]
        %v1509 = vld [vmem:[%s3 + $0x428] sm:$0xff]
        %v1510 = vld [vmem:[%s3 + $0x430] sm:$0xff]
        %v1511 = vld [vmem:[%s3 + $0x438] sm:$0xff]
        %v1512 = vld [vmem:[%s3 + $0x440] sm:$0xff]
        %v1513 = vld [vmem:[%s3 + $0x448] sm:$0xff]
        %v1514 = vld [vmem:[%s3 + $0x450] sm:$0xff]
        %v1515 = vld [vmem:[%s3 + $0x458] sm:$0xff]
        %v1516 = vld [vmem:[%s3 + $0x460] sm:$0xff]
        %v1517 = vld [vmem:[%s3 + $0x468] sm:$0xff]
        %v1518 = vld [vmem:[%s3 + $0x470] sm:$0xff]
        %v1519 = vld [vmem:[%s3 + $0x478] sm:$0xff]
        %v1520 = vld [vmem:[%s3 + $0x480] sm:$0xff]
        %v1521 = vld [vmem:[%s3 + $0x488] sm:$0xff]
        %v1522 = vld [vmem:[%s3 + $0x490] sm:$0xff]
        %v1523 = vld [vmem:[%s3 + $0x498] sm:$0xff]
        %v1524 = vld [vmem:[%s3 + $0x4a0] sm:$0xff]
        %v1525 = vld [vmem:[%s3 + $0x4a8] sm:$0xff]
        %v1526 = vld [vmem:[%s3 + $0x4b0] sm:$0xff]
        %v1527 = vld [vmem:[%s3 + $0x4b8] sm:$0xff]
        %v1528 = vld [vmem:[%s3 + $0x4c0] sm:$0xff]
        %v1529 = vld [vmem:[%s3 + $0x4c8] sm:$0xff]
        %v1530 = vld [vmem:[%s3 + $0x4d0] sm:$0xff]
        %v1531 = vld [vmem:[%s3 + $0x4d8] sm:$0xff]
        %v1532 = vld [vmem:[%s3 + $0x4e0] sm:$0xff]
        %v1533 = vld [vmem:[%s3 + $0x4e8] sm:$0xff]
        %v1534 = vld [vmem:[%s3 + $0x4f0] sm:$0xff]
        %v1535 = vld [vmem:[%s3 + $0x4f8] sm:$0xff]
        %v1536 = vld [vmem:[%s3 + $0x500] sm:$0xff]
        %v1537 = vld [vmem:[%s3 + $0x508] sm:$0xff]
        %v1538 = vld [vmem:[%s3 + $0x510] sm:$0xff]
        %v1539 = vld [vmem:[%s3 + $0x518] sm:$0xff]
        %v1540 = vld [vmem:[%s3 + $0x520] sm:$0xff]
        %v1541 = vld [vmem:[%s3 + $0x528] sm:$0xff]
        %v1542 = vld [vmem:[%s3 + $0x530] sm:$0xff]
        %v1543 = vld [vmem:[%s3 + $0x538] sm:$0xff]
        %v1544 = vld [vmem:[%s3 + $0x540] sm:$0xff]
        %v1545 = vld [vmem:[%s3 + $0x548] sm:$0xff]
        %v1546 = vld [vmem:[%s3 + $0x550] sm:$0xff]
        %v1547 = vld [vmem:[%s3 + $0x558] sm:$0xff]
        %v1548 = vld [vmem:[%s3 + $0x560] sm:$0xff]
        %v1549 = vld [vmem:[%s3 + $0x568] sm:$0xff]
        %v1550 = vld [vmem:[%s3 + $0x570] sm:$0xff]
        %v1551 = vld [vmem:[%s3 + $0x578] sm:$0xff]
        %v1552 = vld [vmem:[%s3 + $0x580] sm:$0xff]
        %v1553 = vld [vmem:[%s3 + $0x588] sm:$0xff]
        %v1554 = vld [vmem:[%s3 + $0x590] sm:$0xff]
        %v1555 = vld [vmem:[%s3 + $0x598] sm:$0xff]
        %v1556 = vld [vmem:[%s3 + $0x5a0] sm:$0xff]
        %v1557 = vld [vmem:[%s3 + $0x5a8] sm:$0xff]
        %v1558 = vld [vmem:[%s3 + $0x5b0] sm:$0xff]
        %v1559 = vld [vmem:[%s3 + $0x5b8] sm:$0xff]
        %v1560 = vld [vmem:[%s3 + $0x5c0] sm:$0xff]
        %v1561 = vld [vmem:[%s3 + $0x5c8] sm:$0xff]
        %v1562 = vld [vmem:[%s3 + $0x5d0] sm:$0xff]
        %v1563 = vld [vmem:[%s3 + $0x5d8] sm:$0xff]
        %v1564 = vld [vmem:[%s3 + $0x5e0] sm:$0xff]
        %v1565 = vld [vmem:[%s3 + $0x5e8] sm:$0xff]
        %v1566 = vld [vmem:[%s3 + $0x5f0] sm:$0xff]
        %v1567 = vld [vmem:[%s3 + $0x5f8] sm:$0xff]
        %v1568 = vld [vmem:[%s3 + $0x600] sm:$0xff]
        %v1569 = vld [vmem:[%s3 + $0x608] sm:$0xff]
        %v1570 = vld [vmem:[%s3 + $0x610] sm:$0xff]
        %v1571 = vld [vmem:[%s3 + $0x618] sm:$0xff]
        %v1572 = vld [vmem:[%s3 + $0x620] sm:$0xff]
        %v1573 = vld [vmem:[%s3 + $0x628] sm:$0xff]
        %v1574 = vld [vmem:[%s3 + $0x630] sm:$0xff]
        %v1575 = vld [vmem:[%s3 + $0x638] sm:$0xff]
        %v1576 = vld [vmem:[%s3 + $0x640] sm:$0xff]
        %v1577 = vld [vmem:[%s3 + $0x648] sm:$0xff]
        %v1578 = vld [vmem:[%s3 + $0x650] sm:$0xff]
        %v1579 = vld [vmem:[%s3 + $0x658] sm:$0xff]
        %v1580 = vld [vmem:[%s3 + $0x660] sm:$0xff]
        %v1581 = vld [vmem:[%s3 + $0x668] sm:$0xff]
        %v1582 = vld [vmem:[%s3 + $0x670] sm:$0xff]
        %v1583 = vld [vmem:[%s3 + $0x678] sm:$0xff]
        %v1584 = vld [vmem:[%s3 + $0x680] sm:$0xff]
        %v1585 = vld [vmem:[%s3 + $0x688] sm:$0xff]
        %v1586 = vld [vmem:[%s3 + $0x690] sm:$0xff]
        %v1587 = vld [vmem:[%s3 + $0x698] sm:$0xff]
        %v1588 = vld [vmem:[%s3 + $0x6a0] sm:$0xff]
        %v1589 = vld [vmem:[%s3 + $0x6a8] sm:$0xff]
        %v1590 = vld [vmem:[%s3 + $0x6b0] sm:$0xff]
        %v1591 = vld [vmem:[%s3 + $0x6b8] sm:$0xff]
        %v1592 = vld [vmem:[%s3 + $0x6c0] sm:$0xff]
        %v1593 = vld [vmem:[%s3 + $0x6c8] sm:$0xff]
        %v1594 = vld [vmem:[%s3 + $0x6d0] sm:$0xff]
        %v1595 = vld [vmem:[%s3 + $0x6d8] sm:$0xff]
        %v1596 = vld [vmem:[%s3 + $0x6e0] sm:$0xff]
        %v1597 = vld [vmem:[%s3 + $0x6e8] sm:$0xff]
        %v1598 = vld [vmem:[%s3 + $0x6f0] sm:$0xff]
        %v1599 = vld [vmem:[%s3 + $0x6f8] sm:$0xff]
        %v1600 = vld [vmem:[%s3 + $0x700] sm:$0xff]
        %v1601 = vld [vmem:[%s3 + $0x708] sm:$0xff]
        %v1602 = vld [vmem:[%s3 + $0x710] sm:$0xff]
        %v1603 = vld [vmem:[%s3 + $0x718] sm:$0xff]
        %v1604 = vld [vmem:[%s3 + $0x720] sm:$0xff]
        %v1605 = vld [vmem:[%s3 + $0x728] sm:$0xff]
        %v1606 = vld [vmem:[%s3 + $0x730] sm:$0xff]
        %v1607 = vld [vmem:[%s3 + $0x738] sm:$0xff]
        %v1608 = vld [vmem:[%s3 + $0x740] sm:$0xff]
        %v1609 = vld [vmem:[%s3 + $0x748] sm:$0xff]
        %v1610 = vld [vmem:[%s3 + $0x750] sm:$0xff]
        %v1611 = vld [vmem:[%s3 + $0x758] sm:$0xff]
        %v1612 = vld [vmem:[%s3 + $0x760] sm:$0xff]
        %v1613 = vld [vmem:[%s3 + $0x768] sm:$0xff]
        %v1614 = vld [vmem:[%s3 + $0x770] sm:$0xff]
        %v1615 = vld [vmem:[%s3 + $0x778] sm:$0xff]
        %v1616 = vld [vmem:[%s3 + $0x780] sm:$0xff]
        %v1617 = vld [vmem:[%s3 + $0x788] sm:$0xff]
        %v1618 = vld [vmem:[%s3 + $0x790] sm:$0xff]
        %v1619 = vld [vmem:[%s3 + $0x798] sm:$0xff]
        %v1620 = vld [vmem:[%s3 + $0x7a0] sm:$0xff]
        %v1621 = vld [vmem:[%s3 + $0x7a8] sm:$0xff]
        %v1622 = vld [vmem:[%s3 + $0x7b0] sm:$0xff]
        %v1623 = vld [vmem:[%s3 + $0x7b8] sm:$0xff]
        %v1624 = vld [vmem:[%s3 + $0x7c0] sm:$0xff]
        %v1625 = vld [vmem:[%s3 + $0x7c8] sm:$0xff]
        %v1626 = vld [vmem:[%s3 + $0x7d0] sm:$0xff]
        %v1627 = vld [vmem:[%s3 + $0x7d8] sm:$0xff]
        %v1628 = vld [vmem:[%s3 + $0x7e0] sm:$0xff]
        %v1629 = vld [vmem:[%s3 + $0x7e8] sm:$0xff]
        %v1630 = vld [vmem:[%s3 + $0x7f0] sm:$0xff]
        %v1631 = vld [vmem:[%s3 + $0x7f8] sm:$0xff]
        %v1632 = vld [vmem:[%s3 + $0x800] sm:$0xff]
        %v1633 = vld [vmem:[%s3 + $0x808] sm:$0xff]
        %v1634 = vld [vmem:[%s3 + $0x810] sm:$0xff]
        %v1635 = vld [vmem:[%s3 + $0x818] sm:$0xff]
        %v1636 = vld [vmem:[%s3 + $0x820] sm:$0xff]
        %v1637 = vld [vmem:[%s3 + $0x828] sm:$0xff]
        %v1638 = vld [vmem:[%s3 + $0x830] sm:$0xff]
        %v1639 = vld [vmem:[%s3 + $0x838] sm:$0xff]
        %v1640 = vld [vmem:[%s3 + $0x840] sm:$0xff]
        %v1641 = vld [vmem:[%s3 + $0x848] sm:$0xff]
        %v1642 = vld [vmem:[%s3 + $0x850] sm:$0xff]
        %v1643 = vld [vmem:[%s3 + $0x858] sm:$0xff]
        %v1644 = vld [vmem:[%s3 + $0x860] sm:$0xff]
        %v1645 = vld [vmem:[%s3 + $0x868] sm:$0xff]
        %v1646 = vld [vmem:[%s3 + $0x870] sm:$0xff]
        %v1647 = vld [vmem:[%s3 + $0x878] sm:$0xff]
        %v1648 = vld [vmem:[%s3 + $0x880] sm:$0xff]
        %v1649 = vld [vmem:[%s3 + $0x888] sm:$0xff]
        %v1650 = vld [vmem:[%s3 + $0x890] sm:$0xff]
        %v1651 = vld [vmem:[%s3 + $0x898] sm:$0xff]
        %v1652 = vld [vmem:[%s3 + $0x8a0] sm:$0xff]
        %v1653 = vld [vmem:[%s3 + $0x8a8] sm:$0xff]
        %v1654 = vld [vmem:[%s3 + $0x8b0] sm:$0xff]
        %v1655 = vld [vmem:[%s3 + $0x8b8] sm:$0xff]
        %v1656 = vld [vmem:[%s3 + $0x8c0] sm:$0xff]
        %v1657 = vld [vmem:[%s3 + $0x8c8] sm:$0xff]
        %v1658 = vld [vmem:[%s3 + $0x8d0] sm:$0xff]
        %v1659 = vld [vmem:[%s3 + $0x8d8] sm:$0xff]
        %v1660 = vld [vmem:[%s3 + $0x8e0] sm:$0xff]
        %v1661 = vld [vmem:[%s3 + $0x8e8] sm:$0xff]
        %v1662 = vld [vmem:[%s3 + $0x8f0] sm:$0xff]
        %v1663 = vld [vmem:[%s3 + $0x8f8] sm:$0xff]
        %v1664 = vld [vmem:[%s3 + $0x900] sm:$0xff]
        %v1665 = vld [vmem:[%s3 + $0x908] sm:$0xff]
        %v1666 = vld [vmem:[%s3 + $0x910] sm:$0xff]
        %v1667 = vld [vmem:[%s3 + $0x918] sm:$0xff]
        %v1668 = vld [vmem:[%s3 + $0x920] sm:$0xff]
        %v1669 = vld [vmem:[%s3 + $0x928] sm:$0xff]
        %v1670 = vld [vmem:[%s3 + $0x930] sm:$0xff]
        %v1671 = vld [vmem:[%s3 + $0x938] sm:$0xff]
        %v1672 = vld [vmem:[%s3 + $0x940] sm:$0xff]
        %v1673 = vld [vmem:[%s3 + $0x948] sm:$0xff]
        %v1674 = vld [vmem:[%s3 + $0x950] sm:$0xff]
        %v1675 = vld [vmem:[%s3 + $0x958] sm:$0xff]
        %v1676 = vld [vmem:[%s3 + $0x960] sm:$0xff]
        %v1677 = vld [vmem:[%s3 + $0x968] sm:$0xff]
        %v1678 = vld [vmem:[%s3 + $0x970] sm:$0xff]
        %v1679 = vld [vmem:[%s3 + $0x978] sm:$0xff]
        %v1680 = vld [vmem:[%s3 + $0x980] sm:$0xff]
        %v1681 = vld [vmem:[%s3 + $0x988] sm:$0xff]
        %v1682 = vld [vmem:[%s3 + $0x990] sm:$0xff]
        %v1683 = vld [vmem:[%s3 + $0x998] sm:$0xff]
        %v1684 = vld [vmem:[%s3 + $0x9a0] sm:$0xff]
        %v1685 = vld [vmem:[%s3 + $0x9a8] sm:$0xff]
        %v1686 = vld [vmem:[%s3 + $0x9b0] sm:$0xff]
        %v1687 = vld [vmem:[%s3 + $0x9b8] sm:$0xff]
        %v1688 = vld [vmem:[%s3 + $0x9c0] sm:$0xff]
        %v1689 = vld [vmem:[%s3 + $0x9c8] sm:$0xff]
        %v1690 = vld [vmem:[%s3 + $0x9d0] sm:$0xff]
        %v1691 = vld [vmem:[%s3 + $0x9d8] sm:$0xff]
        %v1692 = vld [vmem:[%s3 + $0x9e0] sm:$0xff]
        %v1693 = vld [vmem:[%s3 + $0x9e8] sm:$0xff]
        %v1694 = vld [vmem:[%s3 + $0x9f0] sm:$0xff]
        %v1695 = vld [vmem:[%s3 + $0x9f8] sm:$0xff]
        %v1696 = vld [vmem:[%s3 + $0xa00] sm:$0xff]
        %v1697 = vld [vmem:[%s3 + $0xa08] sm:$0xff]
        %v1698 = vld [vmem:[%s3 + $0xa10] sm:$0xff]
        %v1699 = vld [vmem:[%s3 + $0xa18] sm:$0xff]
        %v1700 = vld [vmem:[%s3 + $0xa20] sm:$0xff]
        %v1701 = vld [vmem:[%s3 + $0xa28] sm:$0xff]
        %v1702 = vld [vmem:[%s3 + $0xa30] sm:$0xff]
        %v1703 = vld [vmem:[%s3 + $0xa38] sm:$0xff]
        %v1704 = vld [vmem:[%s3 + $0xa40] sm:$0xff]
        %v1705 = vld [vmem:[%s3 + $0xa48] sm:$0xff]
        %v1706 = vld [vmem:[%s3 + $0xa50] sm:$0xff]
        %v1707 = vld [vmem:[%s3 + $0xa58] sm:$0xff]
        %v1708 = vld [vmem:[%s3 + $0xa60] sm:$0xff]
        %v1709 = vld [vmem:[%s3 + $0xa68] sm:$0xff]
        %v1710 = vld [vmem:[%s3 + $0xa70] sm:$0xff]
        %v1711 = vld [vmem:[%s3 + $0xa78] sm:$0xff]
        %v1712 = vld [vmem:[%s3 + $0xa80] sm:$0xff]
        %v1713 = vld [vmem:[%s3 + $0xa88] sm:$0xff]
        %v1714 = vld [vmem:[%s3 + $0xa90] sm:$0xff]
        %v1715 = vld [vmem:[%s3 + $0xa98] sm:$0xff]
        %v1716 = vld [vmem:[%s3 + $0xaa0] sm:$0xff]
        %v1717 = vld [vmem:[%s3 + $0xaa8] sm:$0xff]
        %v1718 = vld [vmem:[%s3 + $0xab0] sm:$0xff]
        %v1719 = vld [vmem:[%s3 + $0xab8] sm:$0xff]
        %v1720 = vld [vmem:[%s3 + $0xac0] sm:$0xff]
        %v1721 = vld [vmem:[%s3 + $0xac8] sm:$0xff]
        %v1722 = vld [vmem:[%s3 + $0xad0] sm:$0xff]
        %v1723 = vld [vmem:[%s3 + $0xad8] sm:$0xff]
        %v1724 = vld [vmem:[%s3 + $0xae0] sm:$0xff]
        %v1725 = vld [vmem:[%s3 + $0xae8] sm:$0xff]
        %v1726 = vld [vmem:[%s3 + $0xaf0] sm:$0xff]
        %v1727 = vld [vmem:[%s3 + $0xaf8] sm:$0xff]
        %v1728 = vld [vmem:[%s3 + $0xb00] sm:$0xff]
        %v1729 = vld [vmem:[%s3 + $0xb08] sm:$0xff]
        %v1730 = vld [vmem:[%s3 + $0xb10] sm:$0xff]
        %v1731 = vld [vmem:[%s3 + $0xb18] sm:$0xff]
        %v1732 = vld [vmem:[%s3 + $0xb20] sm:$0xff]
        %v1733 = vld [vmem:[%s3 + $0xb28] sm:$0xff]
        %v1734 = vld [vmem:[%s3 + $0xb30] sm:$0xff]
        %v1735 = vld [vmem:[%s3 + $0xb38] sm:$0xff]
        %v1736 = vld [vmem:[%s3 + $0xb40] sm:$0xff]
        %v1737 = vld [vmem:[%s3 + $0xb48] sm:$0xff]
        %v1738 = vld [vmem:[%s3 + $0xb50] sm:$0xff]
        %v1739 = vld [vmem:[%s3 + $0xb58] sm:$0xff]
        %v1740 = vld [vmem:[%s3 + $0xb60] sm:$0xff]
        %v1741 = vld [vmem:[%s3 + $0xb68] sm:$0xff]
        %v1742 = vld [vmem:[%s3 + $0xb70] sm:$0xff]
        %v1743 = vld [vmem:[%s3 + $0xb78] sm:$0xff]
        %v1744 = vld [vmem:[%s3 + $0xb80] sm:$0xff]
        %v1745 = vld [vmem:[%s3 + $0xb88] sm:$0xff]
        %v1746 = vld [vmem:[%s3 + $0xb90] sm:$0xff]
        %v1747 = vld [vmem:[%s3 + $0xb98] sm:$0xff]
        %v1748 = vld [vmem:[%s3 + $0xba0] sm:$0xff]
        %v1749 = vld [vmem:[%s3 + $0xba8] sm:$0xff]
        %v1750 = vld [vmem:[%s3 + $0xbb0] sm:$0xff]
        %v1751 = vld [vmem:[%s3 + $0xbb8] sm:$0xff]
        %v1752 = vld [vmem:[%s3 + $0xbc0] sm:$0xff]
        %v1753 = vld [vmem:[%s3 + $0xbc8] sm:$0xff]
        %v1754 = vld [vmem:[%s3 + $0xbd0] sm:$0xff]
        %v1755 = vld [vmem:[%s3 + $0xbd8] sm:$0xff]
        %v1756 = vld [vmem:[%s3 + $0xbe0] sm:$0xff]
        %v1757 = vld [vmem:[%s3 + $0xbe8] sm:$0xff]
        %v1758 = vld [vmem:[%s3 + $0xbf0] sm:$0xff]
        %v1759 = vld [vmem:[%s3 + $0xbf8] sm:$0xff]
        %v1760 = vld [vmem:[%s3 + $0xc00] sm:$0xff]
        %v1761 = vld [vmem:[%s3 + $0xc08] sm:$0xff]
        %v1762 = vld [vmem:[%s3 + $0xc10] sm:$0xff]
        %v1763 = vld [vmem:[%s3 + $0xc18] sm:$0xff]
        %v1764 = vld [vmem:[%s3 + $0xc20] sm:$0xff]
        %v1765 = vld [vmem:[%s3 + $0xc28] sm:$0xff]
        %v1766 = vld [vmem:[%s3 + $0xc30] sm:$0xff]
        %v1767 = vld [vmem:[%s3 + $0xc38] sm:$0xff]
        %v1768 = vld [vmem:[%s3 + $0xc40] sm:$0xff]
        %v1769 = vld [vmem:[%s3 + $0xc48] sm:$0xff]
        %v1770 = vld [vmem:[%s3 + $0xc50] sm:$0xff]
        %v1771 = vld [vmem:[%s3 + $0xc58] sm:$0xff]
        %v1772 = vld [vmem:[%s3 + $0xc60] sm:$0xff]
        %v1773 = vld [vmem:[%s3 + $0xc68] sm:$0xff]
        %v1774 = vld [vmem:[%s3 + $0xc70] sm:$0xff]
        %v1775 = vld [vmem:[%s3 + $0xc78] sm:$0xff]
        %v1776 = vld [vmem:[%s3 + $0xc80] sm:$0xff]
        %v1777 = vld [vmem:[%s3 + $0xc88] sm:$0xff]
        %v1778 = vld [vmem:[%s3 + $0xc90] sm:$0xff]
        %v1779 = vld [vmem:[%s3 + $0xc98] sm:$0xff]
        %v1780 = vld [vmem:[%s3 + $0xca0] sm:$0xff]
        %v1781 = vld [vmem:[%s3 + $0xca8] sm:$0xff]
        %v1782 = vld [vmem:[%s3 + $0xcb0] sm:$0xff]
        %v1783 = vld [vmem:[%s3 + $0xcb8] sm:$0xff]
        %v1784 = vld [vmem:[%s3 + $0xcc0] sm:$0xff]
        %v1785 = vld [vmem:[%s3 + $0xcc8] sm:$0xff]
        %v1786 = vld [vmem:[%s3 + $0xcd0] sm:$0xff]
        %v1787 = vld [vmem:[%s3 + $0xcd8] sm:$0xff]
        %v1788 = vld [vmem:[%s3 + $0xce0] sm:$0xff]
        %v1789 = vld [vmem:[%s3 + $0xce8] sm:$0xff]
        %v1790 = vld [vmem:[%s3 + $0xcf0] sm:$0xff]
        %v1791 = vld [vmem:[%s3 + $0xcf8] sm:$0xff]
        %v1792 = vld [vmem:[%s3 + $0xd00] sm:$0xff]
        %v1793 = vld [vmem:[%s3 + $0xd08] sm:$0xff]
        %v1794 = vld [vmem:[%s3 + $0xd10] sm:$0xff]
        %v1795 = vld [vmem:[%s3 + $0xd18] sm:$0xff]
        %v1796 = vld [vmem:[%s3 + $0xd20] sm:$0xff]
        %v1797 = vld [vmem:[%s3 + $0xd28] sm:$0xff]
        %v1798 = vld [vmem:[%s3 + $0xd30] sm:$0xff]
        %v1799 = vld [vmem:[%s3 + $0xd38] sm:$0xff]
        %v1800 = vld [vmem:[%s3 + $0xd40] sm:$0xff]
        %v1801 = vld [vmem:[%s3 + $0xd48] sm:$0xff]
        %v1802 = vld [vmem:[%s3 + $0xd50] sm:$0xff]
        %v1803 = vld [vmem:[%s3 + $0xd58] sm:$0xff]
        %v1804 = vld [vmem:[%s3 + $0xd60] sm:$0xff]
        %v1805 = vld [vmem:[%s3 + $0xd68] sm:$0xff]
        %v1806 = vld [vmem:[%s3 + $0xd70] sm:$0xff]
        %v1807 = vld [vmem:[%s3 + $0xd78] sm:$0xff]
        %v1808 = vld [vmem:[%s3 + $0xd80] sm:$0xff]
        %v1809 = vld [vmem:[%s3 + $0xd88] sm:$0xff]
        %v1810 = vld [vmem:[%s3 + $0xd90] sm:$0xff]
        %v1811 = vld [vmem:[%s3 + $0xd98] sm:$0xff]
        %v1812 = vld [vmem:[%s3 + $0xda0] sm:$0xff]
        %v1813 = vld [vmem:[%s3 + $0xda8] sm:$0xff]
        %v1814 = vld [vmem:[%s3 + $0xdb0] sm:$0xff]
        %v1815 = vld [vmem:[%s3 + $0xdb8] sm:$0xff]
        %v1816 = vld [vmem:[%s3 + $0xdc0] sm:$0xff]
        %v1817 = vld [vmem:[%s3 + $0xdc8] sm:$0xff]
        %v1818 = vld [vmem:[%s3 + $0xdd0] sm:$0xff]
        %v1819 = vld [vmem:[%s3 + $0xdd8] sm:$0xff]
        %v1820 = vld [vmem:[%s3 + $0xde0] sm:$0xff]
        %v1821 = vld [vmem:[%s3 + $0xde8] sm:$0xff]
        %v1822 = vld [vmem:[%s3 + $0xdf0] sm:$0xff]
        %v1823 = vld [vmem:[%s3 + $0xdf8] sm:$0xff]
        %v1824 = vld [vmem:[%s3 + $0xe00] sm:$0xff]
        %v1825 = vld [vmem:[%s3 + $0xe08] sm:$0xff]
        %v1826 = vld [vmem:[%s3 + $0xe10] sm:$0xff]
        %v1827 = vld [vmem:[%s3 + $0xe18] sm:$0xff]
        %v1828 = vld [vmem:[%s3 + $0xe20] sm:$0xff]
        %v1829 = vld [vmem:[%s3 + $0xe28] sm:$0xff]
        %v1830 = vld [vmem:[%s3 + $0xe30] sm:$0xff]
        %v1831 = vld [vmem:[%s3 + $0xe38] sm:$0xff]
        %v1832 = vld [vmem:[%s3 + $0xe40] sm:$0xff]
        %v1833 = vld [vmem:[%s3 + $0xe48] sm:$0xff]
        %v1834 = vld [vmem:[%s3 + $0xe50] sm:$0xff]
        %v1835 = vld [vmem:[%s3 + $0xe58] sm:$0xff]
        %v1836 = vld [vmem:[%s3 + $0xe60] sm:$0xff]
        %v1837 = vld [vmem:[%s3 + $0xe68] sm:$0xff]
        %v1838 = vld [vmem:[%s3 + $0xe70] sm:$0xff]
        %v1839 = vld [vmem:[%s3 + $0xe78] sm:$0xff]
        %v1840 = vld [vmem:[%s3 + $0xe80] sm:$0xff]
        %v1841 = vld [vmem:[%s3 + $0xe88] sm:$0xff]
        %v1842 = vld [vmem:[%s3 + $0xe90] sm:$0xff]
        %v1843 = vld [vmem:[%s3 + $0xe98] sm:$0xff]
        %v1844 = vld [vmem:[%s3 + $0xea0] sm:$0xff]
        %v1845 = vld [vmem:[%s3 + $0xea8] sm:$0xff]
        %v1846 = vld [vmem:[%s3 + $0xeb0] sm:$0xff]
        %v1847 = vld [vmem:[%s3 + $0xeb8] sm:$0xff]
        %v1848 = vld [vmem:[%s3 + $0xec0] sm:$0xff]
        %v1849 = vld [vmem:[%s3 + $0xec8] sm:$0xff]
        %v1850 = vld [vmem:[%s3 + $0xed0] sm:$0xff]
        %v1851 = vld [vmem:[%s3 + $0xed8] sm:$0xff]
        %v1852 = vld [vmem:[%s3 + $0xee0] sm:$0xff]
        %v1853 = vld [vmem:[%s3 + $0xee8] sm:$0xff]
        %v1854 = vld [vmem:[%s3 + $0xef0] sm:$0xff]
        %v1855 = vld [vmem:[%s3 + $0xef8] sm:$0xff]
        %v1856 = vld [vmem:[%s3 + $0xf00] sm:$0xff]
        %v1857 = vld [vmem:[%s3 + $0xf08] sm:$0xff]
        %v1858 = vld [vmem:[%s3 + $0xf10] sm:$0xff]
        %v1859 = vld [vmem:[%s3 + $0xf18] sm:$0xff]
        %v1860 = vld [vmem:[%s3 + $0xf20] sm:$0xff]
        %v1861 = vld [vmem:[%s3 + $0xf28] sm:$0xff]
        %v1862 = vld [vmem:[%s3 + $0xf30] sm:$0xff]
        %v1863 = vld [vmem:[%s3 + $0xf38] sm:$0xff]
        %v1864 = vld [vmem:[%s3 + $0xf40] sm:$0xff]
        %v1865 = vld [vmem:[%s3 + $0xf48] sm:$0xff]
        %v1866 = vld [vmem:[%s3 + $0xf50] sm:$0xff]
        %v1867 = vld [vmem:[%s3 + $0xf58] sm:$0xff]
        %v1868 = vld [vmem:[%s3 + $0xf60] sm:$0xff]
        %v1869 = vld [vmem:[%s3 + $0xf68] sm:$0xff]
        %v1870 = vld [vmem:[%s3 + $0xf70] sm:$0xff]
        %v1871 = vld [vmem:[%s3 + $0xf78] sm:$0xff]
        %v1872 = vld [vmem:[%s3 + $0xf80] sm:$0xff]
        %v1873 = vld [vmem:[%s3 + $0xf88] sm:$0xff]
        %v1874 = vld [vmem:[%s3 + $0xf90] sm:$0xff]
        %v1875 = vld [vmem:[%s3 + $0xf98] sm:$0xff]
        %v1876 = vld [vmem:[%s3 + $0xfa0] sm:$0xff]
        %v1877 = vld [vmem:[%s3 + $0xfa8] sm:$0xff]
        %v1878 = vld [vmem:[%s3 + $0xfb0] sm:$0xff]
        %v1879 = vld [vmem:[%s3 + $0xfb8] sm:$0xff]
        %v1880 = vld [vmem:[%s3 + $0xfc0] sm:$0xff]
        %v1881 = vld [vmem:[%s3 + $0xfc8] sm:$0xff]
        %v1882 = vld [vmem:[%s3 + $0xfd0] sm:$0xff]
        %v1883 = vld [vmem:[%s3 + $0xfd8] sm:$0xff]
        %v1884 = vld [vmem:[%s3 + $0xfe0] sm:$0xff]
        %v1885 = vld [vmem:[%s3 + $0xfe8] sm:$0xff]
        %v1886 = vld [vmem:[%s3 + $0xff0] sm:$0xff]
        %v1887 = vld [vmem:[%s3 + $0xff8] sm:$0xff]
        %v1888 = vld [vmem:[%s3 + $0x1000] sm:$0xff]
        %v1889 = vld [vmem:[%s3 + $0x1008] sm:$0xff]
        %v1890 = vld [vmem:[%s3 + $0x1010] sm:$0xff]
        %v1891 = vld [vmem:[%s3 + $0x1018] sm:$0xff]
        %v1892 = vld [vmem:[%s3 + $0x1020] sm:$0xff]
        %v1893 = vld [vmem:[%s3 + $0x1028] sm:$0xff]
        %v1894 = vld [vmem:[%s3 + $0x1030] sm:$0xff]
        %v1895 = vld [vmem:[%s3 + $0x1038] sm:$0xff]
        %v1896 = vld [vmem:[%s3 + $0x1040] sm:$0xff]
        %v1897 = vld [vmem:[%s3 + $0x1048] sm:$0xff]
        %v1898 = vld [vmem:[%s3 + $0x1050] sm:$0xff]
        %v1899 = vld [vmem:[%s3 + $0x1058] sm:$0xff]
        %v1900 = vld [vmem:[%s3 + $0x1060] sm:$0xff]
        %v1901 = vld [vmem:[%s3 + $0x1068] sm:$0xff]
        %v1902 = vld [vmem:[%s3 + $0x1070] sm:$0xff]
        %v1903 = vld [vmem:[%s3 + $0x1078] sm:$0xff]
        %v1904 = vld [vmem:[%s3 + $0x1080] sm:$0xff]
        %v1905 = vld [vmem:[%s3 + $0x1088] sm:$0xff]
        %v1906 = vld [vmem:[%s3 + $0x1090] sm:$0xff]
        %v1907 = vld [vmem:[%s3 + $0x1098] sm:$0xff]
        %v1908 = vld [vmem:[%s3 + $0x10a0] sm:$0xff]
        %v1909 = vld [vmem:[%s3 + $0x10a8] sm:$0xff]
        %v1910 = vld [vmem:[%s3 + $0x10b0] sm:$0xff]
        %v1911 = vld [vmem:[%s3 + $0x10b8] sm:$0xff]
        %v1912 = vld [vmem:[%s3 + $0x10c0] sm:$0xff]
        %v1913 = vld [vmem:[%s3 + $0x10c8] sm:$0xff]
        %v1914 = vld [vmem:[%s3 + $0x10d0] sm:$0xff]
        %v1915 = vld [vmem:[%s3 + $0x10d8] sm:$0xff]
        %v1916 = vld [vmem:[%s3 + $0x10e0] sm:$0xff]
        %v1917 = vld [vmem:[%s3 + $0x10e8] sm:$0xff]
        %v1918 = vld [vmem:[%s3 + $0x10f0] sm:$0xff]
        %v1919 = vld [vmem:[%s3 + $0x10f8] sm:$0xff]
        %v1920 = vld [vmem:[%s3 + $0x1100] sm:$0xff]
        %v1921 = vld [vmem:[%s3 + $0x1108] sm:$0xff]
        %v1922 = vld [vmem:[%s3 + $0x1110] sm:$0xff]
        %v1923 = vld [vmem:[%s3 + $0x1118] sm:$0xff]
        %v1924 = vld [vmem:[%s3 + $0x1120] sm:$0xff]
        %v1925 = vld [vmem:[%s3 + $0x1128] sm:$0xff]
        %v1926 = vld [vmem:[%s3 + $0x1130] sm:$0xff]
        %v1927 = vld [vmem:[%s3 + $0x1138] sm:$0xff]
        %v1928 = vld [vmem:[%s3 + $0x1140] sm:$0xff]
        %v1929 = vld [vmem:[%s3 + $0x1148] sm:$0xff]
        %v1930 = vld [vmem:[%s3 + $0x1150] sm:$0xff]
        %v1931 = vld [vmem:[%s3 + $0x1158] sm:$0xff]
        %v1932 = vld [vmem:[%s3 + $0x1160] sm:$0xff]
        %v1933 = vld [vmem:[%s3 + $0x1168] sm:$0xff]
        %v1934 = vld [vmem:[%s3 + $0x1170] sm:$0xff]
        %v1935 = vld [vmem:[%s3 + $0x1178] sm:$0xff]
        %v1936 = vld [vmem:[%s3 + $0x1180] sm:$0xff]
        %v1937 = vld [vmem:[%s3 + $0x1188] sm:$0xff]
        %v1938 = vld [vmem:[%s3 + $0x1190] sm:$0xff]
        %v1939 = vld [vmem:[%s3 + $0x1198] sm:$0xff]
        %v1940 = vld [vmem:[%s3 + $0x11a0] sm:$0xff]
        %v1941 = vld [vmem:[%s3 + $0x11a8] sm:$0xff]
        %v1942 = vld [vmem:[%s3 + $0x11b0] sm:$0xff]
        %v1943 = vld [vmem:[%s3 + $0x11b8] sm:$0xff]
        %v1944 = vld [vmem:[%s3 + $0x11c0] sm:$0xff]
        %v1945 = vld [vmem:[%s3 + $0x11c8] sm:$0xff]
        %v1946 = vld [vmem:[%s3 + $0x11d0] sm:$0xff]
        %v1947 = vld [vmem:[%s3 + $0x11d8] sm:$0xff]
        %v1948 = vld [vmem:[%s3 + $0x11e0] sm:$0xff]
        %v1949 = vld [vmem:[%s3 + $0x11e8] sm:$0xff]
        %v1950 = vld [vmem:[%s3 + $0x11f0] sm:$0xff]
        %v1951 = vld [vmem:[%s3 + $0x11f8] sm:$0xff]
        %v1952 = vld [vmem:[%s3 + $0x1200] sm:$0xff]
        %v1953 = vld [vmem:[%s3 + $0x1208] sm:$0xff]
        %v1954 = vld [vmem:[%s3 + $0x1210] sm:$0xff]
        %v1955 = vld [vmem:[%s3 + $0x1218] sm:$0xff]
        %v1956 = vld [vmem:[%s3 + $0x1220] sm:$0xff]
        %v1957 = vld [vmem:[%s3 + $0x1228] sm:$0xff]
        %v1958 = vld [vmem:[%s3 + $0x1230] sm:$0xff]
        %v1959 = vld [vmem:[%s3 + $0x1238] sm:$0xff]
        %v1960 = vld [vmem:[%s3 + $0x1240] sm:$0xff]
        %v1961 = vld [vmem:[%s3 + $0x1248] sm:$0xff]
        %v1962 = vld [vmem:[%s3 + $0x1250] sm:$0xff]
        %v1963 = vld [vmem:[%s3 + $0x1258] sm:$0xff]
        %v1964 = vld [vmem:[%s3 + $0x1260] sm:$0xff]
        %v1965 = vld [vmem:[%s3 + $0x1268] sm:$0xff]
        %v1966 = vld [vmem:[%s3 + $0x1270] sm:$0xff]
        %v1967 = vld [vmem:[%s3 + $0x1278] sm:$0xff]
        %v1968 = vld [vmem:[%s3 + $0x1280] sm:$0xff]
        %v1969 = vld [vmem:[%s3 + $0x1288] sm:$0xff]
        %v1970 = vld [vmem:[%s3 + $0x1290] sm:$0xff]
        %v1971 = vld [vmem:[%s3 + $0x1298] sm:$0xff]
        %v1972 = vld [vmem:[%s3 + $0x12a0] sm:$0xff]
        %v1973 = vld [vmem:[%s3 + $0x12a8] sm:$0xff]
        %v1974 = vld [vmem:[%s3 + $0x12b0] sm:$0xff]
        %v1975 = vld [vmem:[%s3 + $0x12b8] sm:$0xff]
        %v1976 = vld [vmem:[%s3 + $0x12c0] sm:$0xff]
        %v1977 = vld [vmem:[%s3 + $0x12c8] sm:$0xff]
        %v1978 = vld [vmem:[%s3 + $0x12d0] sm:$0xff]
        %v1979 = vld [vmem:[%s3 + $0x12d8] sm:$0xff]
        %v1980 = vld [vmem:[%s3 + $0x12e0] sm:$0xff]
        %v1981 = vld [vmem:[%s3 + $0x12e8] sm:$0xff]
        %v1982 = vld [vmem:[%s3 + $0x12f0] sm:$0xff]
        %v1983 = vld [vmem:[%s3 + $0x12f8] sm:$0xff]
        %v1984 = vld [vmem:[%s3 + $0x1300] sm:$0xff]
        %v1985 = vld [vmem:[%s3 + $0x1308] sm:$0xff]
        %v1986 = vld [vmem:[%s3 + $0x1310] sm:$0xff]
        %v1987 = vld [vmem:[%s3 + $0x1318] sm:$0xff]
        %v1988 = vld [vmem:[%s3 + $0x1320] sm:$0xff]
        %v1989 = vld [vmem:[%s3 + $0x1328] sm:$0xff]
        %v1990 = vld [vmem:[%s3 + $0x1330] sm:$0xff]
        %v1991 = vld [vmem:[%s3 + $0x1338] sm:$0xff]
        %v1992 = vld [vmem:[%s3 + $0x1340] sm:$0xff]
        %v1993 = vld [vmem:[%s3 + $0x1348] sm:$0xff]
        %v1994 = vld [vmem:[%s3 + $0x1350] sm:$0xff]
        %v1995 = vld [vmem:[%s3 + $0x1358] sm:$0xff]
        %v1996 = vld [vmem:[%s3 + $0x1360] sm:$0xff]
        %v1997 = vld [vmem:[%s3 + $0x1368] sm:$0xff]
        %v1998 = vld [vmem:[%s3 + $0x1370] sm:$0xff]
        %v1999 = vld [vmem:[%s3 + $0x1378] sm:$0xff]
        %v2000 = vld [vmem:[%s3 + $0x1380] sm:$0xff]
        %v2001 = vld [vmem:[%s3 + $0x1388] sm:$0xff]
        %v2002 = vld [vmem:[%s3 + $0x1390] sm:$0xff]
        %v2003 = vld [vmem:[%s3 + $0x1398] sm:$0xff]
        %v2004 = vld [vmem:[%s3 + $0x13a0] sm:$0xff]
        %v2005 = vld [vmem:[%s3 + $0x13a8] sm:$0xff]
        %v2006 = vld [vmem:[%s3 + $0x13b0] sm:$0xff]
        %v2007 = vld [vmem:[%s3 + $0x13b8] sm:$0xff]
        %v2008 = vld [vmem:[%s3 + $0x13c0] sm:$0xff]
        %v2009 = vld [vmem:[%s3 + $0x13c8] sm:$0xff]
        %v2010 = vld [vmem:[%s3 + $0x13d0] sm:$0xff]
        %v2011 = vld [vmem:[%s3 + $0x13d8] sm:$0xff]
        %v2012 = vld [vmem:[%s3 + $0x13e0] sm:$0xff]
        %v2013 = vld [vmem:[%s3 + $0x13e8] sm:$0xff]
        %v2014 = vld [vmem:[%s3 + $0x13f0] sm:$0xff]
        %v2015 = vld [vmem:[%s3 + $0x13f8] sm:$0xff]
        %v2016 = vld [vmem:[%s3 + $0x1400] sm:$0xff]
        %v2017 = vld [vmem:[%s3 + $0x1408] sm:$0xff]
        %v2018 = vld [vmem:[%s3 + $0x1410] sm:$0xff]
        %v2019 = vld [vmem:[%s3 + $0x1418] sm:$0xff]
        %v2020 = vld [vmem:[%s3 + $0x1420] sm:$0xff]
        %v2021 = vld [vmem:[%s3 + $0x1428] sm:$0xff]
        %v2022 = vld [vmem:[%s3 + $0x1430] sm:$0xff]
        %v2023 = vld [vmem:[%s3 + $0x1438] sm:$0xff]
        %v2024 = vld [vmem:[%s3 + $0x1440] sm:$0xff]
        %v2025 = vld [vmem:[%s3 + $0x1448] sm:$0xff]
        %v2026 = vld [vmem:[%s3 + $0x1450] sm:$0xff]
        %v2027 = vld [vmem:[%s3 + $0x1458] sm:$0xff]
        %v2028 = vld [vmem:[%s3 + $0x1460] sm:$0xff]
        %v2029 = vld [vmem:[%s3 + $0x1468] sm:$0xff]
        %v2030 = vld [vmem:[%s3 + $0x1470] sm:$0xff]
        %v2031 = vld [vmem:[%s3 + $0x1478] sm:$0xff]
        %v2032 = vld [vmem:[%s3 + $0x1480] sm:$0xff]
        %v2033 = vld [vmem:[%s3 + $0x1488] sm:$0xff]
        %v2034 = vld [vmem:[%s3 + $0x1490] sm:$0xff]
        %v2035 = vld [vmem:[%s3 + $0x1498] sm:$0xff]
        %v2036 = vld [vmem:[%s3 + $0x14a0] sm:$0xff]
        %v2037 = vld [vmem:[%s3 + $0x14a8] sm:$0xff]
        %v2038 = vld [vmem:[%s3 + $0x14b0] sm:$0xff]
        %v2039 = vld [vmem:[%s3 + $0x14b8] sm:$0xff]
        %v2040 = vld [vmem:[%s3 + $0x14c0] sm:$0xff]
        %v2041 = vld [vmem:[%s3 + $0x14c8] sm:$0xff]
        %v2042 = vld [vmem:[%s3 + $0x14d0] sm:$0xff]
        %v2043 = vld [vmem:[%s3 + $0x14d8] sm:$0xff]
        %v2044 = vld [vmem:[%s3 + $0x14e0] sm:$0xff]
        %v2045 = vld [vmem:[%s3 + $0x14e8] sm:$0xff]
        %v2046 = vld [vmem:[%s3 + $0x14f0] sm:$0xff]
        %v2047 = vld [vmem:[%s3 + $0x14f8] sm:$0xff]
        %v2048 = vld [vmem:[%s3 + $0x1500] sm:$0xff]
        %v2049 = vld [vmem:[%s3 + $0x1508] sm:$0xff]
        %v2050 = vld [vmem:[%s3 + $0x1510] sm:$0xff]
        %v2051 = vld [vmem:[%s3 + $0x1518] sm:$0xff]
        %v2052 = vld [vmem:[%s3 + $0x1520] sm:$0xff]
        %v2053 = vld [vmem:[%s3 + $0x1528] sm:$0xff]
        %v2054 = vld [vmem:[%s3 + $0x1530] sm:$0xff]
        %v2055 = vld [vmem:[%s3 + $0x1538] sm:$0xff]
        %v2056 = vld [vmem:[%s3 + $0x1540] sm:$0xff]
        %v2057 = vld [vmem:[%s3 + $0x1548] sm:$0xff]
        %v2058 = vld [vmem:[%s3 + $0x1550] sm:$0xff]
        %v2059 = vld [vmem:[%s3 + $0x1558] sm:$0xff]
        %v2060 = vld [vmem:[%s3 + $0x1560] sm:$0xff]
        %v2061 = vld [vmem:[%s3 + $0x1568] sm:$0xff]
        %v2062 = vld [vmem:[%s3 + $0x1570] sm:$0xff]
        %v2063 = vld [vmem:[%s3 + $0x1578] sm:$0xff]
        %v2064 = vld [vmem:[%s3 + $0x1580] sm:$0xff]
        %v2065 = vld [vmem:[%s3 + $0x1588] sm:$0xff]
        %v2066 = vld [vmem:[%s3 + $0x1590] sm:$0xff]
        %v2067 = vld [vmem:[%s3 + $0x1598] sm:$0xff]
        %v2068 = vld [vmem:[%s3 + $0x15a0] sm:$0xff]
        %v2069 = vld [vmem:[%s3 + $0x15a8] sm:$0xff]
        %v2070 = vld [vmem:[%s3 + $0x15b0] sm:$0xff]
        %v2071 = vld [vmem:[%s3 + $0x15b8] sm:$0xff]
        %v2072 = vld [vmem:[%s3 + $0x15c0] sm:$0xff]
        %v2073 = vld [vmem:[%s3 + $0x15c8] sm:$0xff]
        %v2074 = vld [vmem:[%s3 + $0x15d0] sm:$0xff]
        %v2075 = vld [vmem:[%s3 + $0x15d8] sm:$0xff]
        %v2076 = vld [vmem:[%s3 + $0x15e0] sm:$0xff]
        %v2077 = vld [vmem:[%s3 + $0x15e8] sm:$0xff]
        %v2078 = vld [vmem:[%s3 + $0x15f0] sm:$0xff]
        %v2079 = vld [vmem:[%s3 + $0x15f8] sm:$0xff]
        %v2080 = vld [vmem:[%s3 + $0x1600] sm:$0xff]
        %v2081 = vld [vmem:[%s3 + $0x1608] sm:$0xff]
        %v2082 = vld [vmem:[%s3 + $0x1610] sm:$0xff]
        %v2083 = vld [vmem:[%s3 + $0x1618] sm:$0xff]
        %v2084 = vld [vmem:[%s3 + $0x1620] sm:$0xff]
        %v2085 = vld [vmem:[%s3 + $0x1628] sm:$0xff]
        %v2086 = vld [vmem:[%s3 + $0x1630] sm:$0xff]
        %v2087 = vld [vmem:[%s3 + $0x1638] sm:$0xff]
        %v2088 = vld [vmem:[%s3 + $0x1640] sm:$0xff]
        %v2089 = vld [vmem:[%s3 + $0x1648] sm:$0xff]
        %v2090 = vld [vmem:[%s3 + $0x1650] sm:$0xff]
        %v2091 = vld [vmem:[%s3 + $0x1658] sm:$0xff]
        %v2092 = vld [vmem:[%s3 + $0x1660] sm:$0xff]
        %v2093 = vld [vmem:[%s3 + $0x1668] sm:$0xff]
        %v2094 = vld [vmem:[%s3 + $0x1670] sm:$0xff]
        %v2095 = vld [vmem:[%s3 + $0x1678] sm:$0xff]
        %v2096 = vld [vmem:[%s4] sm:$0xf]
        %v2098 = vperm.slane %v2096, 0
        %v2099 = vperm.slane %v2096, 1
        %v2100 = vperm.slane %v2096, 2
        %v2101 = vperm.slane %v2096, 3
        %v2106 = vsel %vm316, %v1359, 0
        %v2108 = vsel %vm316, %v1365, 0
        %2110 = vmatpush.msra.mxu0 %v1436
        %2111 = vmatpush.msra.mxu0 %v1432
        %2112 = vmatpush.msra.mxu0 %v1428
        %2113 = vmatpush.msra.mxu0 %v1424
        %2114 = vmatpush.msra.mxu0 %v1420
        %2115 = vmatpush.msra.mxu0 %v1416
        %2116 = vmatpush.msra.mxu0 %v1412
        %2117 = vmatpush.msra.mxu0 %v1408
        %2118 = vmatpush.msra.mxu0 %v1404
        %2119 = vmatpush.msra.mxu0 %v1400
        %2120 = vmatpush.msra.mxu0 %v1396
        %2121 = vmatpush.msra.mxu0 %v1392
        %2122 = vmatpush.msra.mxu0 %v1388
        %2123 = vmatpush.msra.mxu0 %v1384
        %2124 = vmatpush.msra.mxu0 %v1380
        %2125 = vmatpush.msra.mxu0 %v1376
        %2126 = vmatmul.f32.gmra.mxu0 %v1198
        %v2127 = vpop.f32.mrf.mxu0
        %v2128 = vadd.f32 %v2098, %v2127
        %2129 = vmatmul.f32.gmra.mxu0 %v1201
        %v2130 = vpop.f32.mrf.mxu0
        %v2131 = vadd.f32 %v2098, %v2130
        %2132 = vdwg.mxu0
        %2133 = vmatpush.msra.mxu0 %v1500
        %2134 = vmatpush.msra.mxu0 %v1496
        %2135 = vmatpush.msra.mxu0 %v1492
        %2136 = vmatpush.msra.mxu0 %v1488
        %2137 = vmatpush.msra.mxu0 %v1484
        %2138 = vmatpush.msra.mxu0 %v1480
        %2139 = vmatpush.msra.mxu0 %v1476
        %2140 = vmatpush.msra.mxu0 %v1472
        %2141 = vmatpush.msra.mxu0 %v1468
        %2142 = vmatpush.msra.mxu0 %v1464
        %2143 = vmatpush.msra.mxu0 %v1460
        %2144 = vmatpush.msra.mxu0 %v1456
        %2145 = vmatpush.msra.mxu0 %v1452
        %2146 = vmatpush.msra.mxu0 %v1448
        %2147 = vmatpush.msra.mxu0 %v1444
        %2148 = vmatpush.msra.mxu0 %v1440
        %2149 = vmatmul.f32.gmra.mxu0 %v1199
        %v2150 = vpop.f32.mrf.mxu0
        %v2151 = vadd.f32 %v2128, %v2150
        %2152 = vmatmul.f32.gmra.mxu0 %v1202
        %v2153 = vpop.f32.mrf.mxu0
        %v2154 = vadd.f32 %v2131, %v2153
        %2155 = vdwg.mxu0
        %2156 = vmatpush.msra.mxu0 %v1564
        %2157 = vmatpush.msra.mxu0 %v1560
        %2158 = vmatpush.msra.mxu0 %v1556
        %2159 = vmatpush.msra.mxu0 %v1552
        %2160 = vmatpush.msra.mxu0 %v1548
        %2161 = vmatpush.msra.mxu0 %v1544
        %2162 = vmatpush.msra.mxu0 %v1540
        %2163 = vmatpush.msra.mxu0 %v1536
        %2164 = vmatpush.msra.mxu0 %v1532
        %2165 = vmatpush.msra.mxu0 %v1528
        %2166 = vmatpush.msra.mxu0 %v1524
        %2167 = vmatpush.msra.mxu0 %v1520
        %2168 = vmatpush.msra.mxu0 %v1516
        %2169 = vmatpush.msra.mxu0 %v1512
        %2170 = vmatpush.msra.mxu0 %v1508
        %2171 = vmatpush.msra.mxu0 %v1504
        %2172 = vmatmul.f32.gmra.mxu0 %v1370
        %v2173 = vpop.f32.mrf.mxu0
        %v2174 = vadd.f32 %v2151, %v2173
        %2175 = vmatmul.f32.gmra.mxu0 %v1371
        %v2176 = vpop.f32.mrf.mxu0
        %v2177 = vadd.f32 %v2154, %v2176
        %2178 = vdwg.mxu0
        %2179 = vmatpush.msra.mxu0 %v1628
        %2180 = vmatpush.msra.mxu0 %v1624
        %2181 = vmatpush.msra.mxu0 %v1620
        %2182 = vmatpush.msra.mxu0 %v1616
        %2183 = vmatpush.msra.mxu0 %v1612
        %2184 = vmatpush.msra.mxu0 %v1608
        %2185 = vmatpush.msra.mxu0 %v1604
        %2186 = vmatpush.msra.mxu0 %v1600
        %2187 = vmatpush.msra.mxu0 %v1596
        %2188 = vmatpush.msra.mxu0 %v1592
        %2189 = vmatpush.msra.mxu0 %v1588
        %2190 = vmatpush.msra.mxu0 %v1584
        %2191 = vmatpush.msra.mxu0 %v1580
        %2192 = vmatpush.msra.mxu0 %v1576
        %2193 = vmatpush.msra.mxu0 %v1572
        %2194 = vmatpush.msra.mxu0 %v1568
        %2195 = vmatmul.f32.gmra.mxu0 %v1255
        %v2196 = vpop.f32.mrf.mxu0
        %v2197 = vadd.f32 %v2174, %v2196
        %2198 = vmatmul.f32.gmra.mxu0 %v1257
        %v2199 = vpop.f32.mrf.mxu0
        %v2200 = vadd.f32 %v2177, %v2199
        %2201 = vdwg.mxu0
        %2202 = vmatpush.msra.mxu0 %v1692
        %2203 = vmatpush.msra.mxu0 %v1688
        %2204 = vmatpush.msra.mxu0 %v1684
        %2205 = vmatpush.msra.mxu0 %v1680
        %2206 = vmatpush.msra.mxu0 %v1676
        %2207 = vmatpush.msra.mxu0 %v1672
        %2208 = vmatpush.msra.mxu0 %v1668
        %2209 = vmatpush.msra.mxu0 %v1664
        %2210 = vmatpush.msra.mxu0 %v1660
        %2211 = vmatpush.msra.mxu0 %v1656
        %2212 = vmatpush.msra.mxu0 %v1652
        %2213 = vmatpush.msra.mxu0 %v1648
        %2214 = vmatpush.msra.mxu0 %v1644
        %2215 = vmatpush.msra.mxu0 %v1640
        %2216 = vmatpush.msra.mxu0 %v1636
        %2217 = vmatpush.msra.mxu0 %v1632
        %2218 = vmatmul.f32.gmra.mxu0 %v1372
        %v2219 = vpop.f32.mrf.mxu0
        %v2220 = vadd.f32 %v2197, %v2219
        %2221 = vmatmul.f32.gmra.mxu0 %v1373
        %v2222 = vpop.f32.mrf.mxu0
        %v2223 = vadd.f32 %v2200, %v2222
        %2224 = vdwg.mxu0
        %2225 = vmatpush.msra.mxu0 %v1756
        %2226 = vmatpush.msra.mxu0 %v1752
        %2227 = vmatpush.msra.mxu0 %v1748
        %2228 = vmatpush.msra.mxu0 %v1744
        %2229 = vmatpush.msra.mxu0 %v1740
        %2230 = vmatpush.msra.mxu0 %v1736
        %2231 = vmatpush.msra.mxu0 %v1732
        %2232 = vmatpush.msra.mxu0 %v1728
        %2233 = vmatpush.msra.mxu0 %v1724
        %2234 = vmatpush.msra.mxu0 %v1720
        %2235 = vmatpush.msra.mxu0 %v1716
        %2236 = vmatpush.msra.mxu0 %v1712
        %2237 = vmatpush.msra.mxu0 %v1708
        %2238 = vmatpush.msra.mxu0 %v1704
        %2239 = vmatpush.msra.mxu0 %v1700
        %2240 = vmatpush.msra.mxu0 %v1696
        %2241 = vmatmul.f32.gmra.mxu0 %v1292
        %v2242 = vpop.f32.mrf.mxu0
        %v2243 = vadd.f32 %v2220, %v2242
        %2244 = vmatmul.f32.gmra.mxu0 %v1294
        %v2245 = vpop.f32.mrf.mxu0
        %v2246 = vadd.f32 %v2223, %v2245
        %2247 = vdwg.mxu0
        %2248 = vmatpush.msra.mxu0 %v1820
        %2249 = vmatpush.msra.mxu0 %v1816
        %2250 = vmatpush.msra.mxu0 %v1812
        %2251 = vmatpush.msra.mxu0 %v1808
        %2252 = vmatpush.msra.mxu0 %v1804
        %2253 = vmatpush.msra.mxu0 %v1800
        %2254 = vmatpush.msra.mxu0 %v1796
        %2255 = vmatpush.msra.mxu0 %v1792
        %2256 = vmatpush.msra.mxu0 %v1788
        %2257 = vmatpush.msra.mxu0 %v1784
        %2258 = vmatpush.msra.mxu0 %v1780
        %2259 = vmatpush.msra.mxu0 %v1776
        %2260 = vmatpush.msra.mxu0 %v1772
        %2261 = vmatpush.msra.mxu0 %v1768
        %2262 = vmatpush.msra.mxu0 %v1764
        %2263 = vmatpush.msra.mxu0 %v1760
        %2264 = vmatmul.f32.gmra.mxu0 %v1374
        %v2265 = vpop.f32.mrf.mxu0
        %v2266 = vadd.f32 %v2243, %v2265
        %2267 = vmatmul.f32.gmra.mxu0 %v1375
        %v2268 = vpop.f32.mrf.mxu0
        %v2269 = vadd.f32 %v2246, %v2268
        %2270 = vdwg.mxu0
        %2271 = vmatpush.msra.mxu0 %v1884
        %2272 = vmatpush.msra.mxu0 %v1880
        %2273 = vmatpush.msra.mxu0 %v1876
        %2274 = vmatpush.msra.mxu0 %v1872
        %2275 = vmatpush.msra.mxu0 %v1868
        %2276 = vmatpush.msra.mxu0 %v1864
        %2277 = vmatpush.msra.mxu0 %v1860
        %2278 = vmatpush.msra.mxu0 %v1856
        %2279 = vmatpush.msra.mxu0 %v1852
        %2280 = vmatpush.msra.mxu0 %v1848
        %2281 = vmatpush.msra.mxu0 %v1844
        %2282 = vmatpush.msra.mxu0 %v1840
        %2283 = vmatpush.msra.mxu0 %v1836
        %2284 = vmatpush.msra.mxu0 %v1832
        %2285 = vmatpush.msra.mxu0 %v1828
        %2286 = vmatpush.msra.mxu0 %v1824
        %2287 = vmatmul.f32.gmra.mxu0 %v1335
        %v2288 = vpop.f32.mrf.mxu0
        %v2289 = vadd.f32 %v2266, %v2288
        %2290 = vmatmul.f32.gmra.mxu0 %v1337
        %v2291 = vpop.f32.mrf.mxu0
        %v2292 = vadd.f32 %v2269, %v2291
        %2293 = vdwg.mxu0
        %2294 = vmatpush.msra.mxu0 %v1948
        %2295 = vmatpush.msra.mxu0 %v1944
        %2296 = vmatpush.msra.mxu0 %v1940
        %2297 = vmatpush.msra.mxu0 %v1936
        %2298 = vmatpush.msra.mxu0 %v1932
        %2299 = vmatpush.msra.mxu0 %v1928
        %2300 = vmatpush.msra.mxu0 %v1924
        %2301 = vmatpush.msra.mxu0 %v1920
        %2302 = vmatpush.msra.mxu0 %v1916
        %2303 = vmatpush.msra.mxu0 %v1912
        %2304 = vmatpush.msra.mxu0 %v1908
        %2305 = vmatpush.msra.mxu0 %v1904
        %2306 = vmatpush.msra.mxu0 %v1900
        %2307 = vmatpush.msra.mxu0 %v1896
        %2308 = vmatpush.msra.mxu0 %v1892
        %2309 = vmatpush.msra.mxu0 %v1888
        %2310 = vmatmul.f32.gmra.mxu0 %v1336
        %v2311 = vpop.f32.mrf.mxu0
        %v2312 = vadd.f32 %v2289, %v2311
        %2313 = vmatmul.f32.gmra.mxu0 %v1338
        %v2314 = vpop.f32.mrf.mxu0
        %v2315 = vadd.f32 %v2292, %v2314
        %2316 = vdwg.mxu0
        %2317 = vmatpush.msra.mxu0 %v2012
        %2318 = vmatpush.msra.mxu0 %v2008
        %2319 = vmatpush.msra.mxu0 %v2004
        %2320 = vmatpush.msra.mxu0 %v2000
        %2321 = vmatpush.msra.mxu0 %v1996
        %2322 = vmatpush.msra.mxu0 %v1992
        %2323 = vmatpush.msra.mxu0 %v1988
        %2324 = vmatpush.msra.mxu0 %v1984
        %2325 = vmatpush.msra.mxu0 %v1980
        %2326 = vmatpush.msra.mxu0 %v1976
        %2327 = vmatpush.msra.mxu0 %v1972
        %2328 = vmatpush.msra.mxu0 %v1968
        %2329 = vmatpush.msra.mxu0 %v1964
        %2330 = vmatpush.msra.mxu0 %v1960
        %2331 = vmatpush.msra.mxu0 %v1956
        %2332 = vmatpush.msra.mxu0 %v1952
        %2333 = vmatmul.f32.gmra.mxu0 %v1353
        %v2334 = vpop.f32.mrf.mxu0
        %v2335 = vadd.f32 %v2312, %v2334
        %2336 = vmatmul.f32.gmra.mxu0 %v1361
        %v2337 = vpop.f32.mrf.mxu0
        %v2338 = vadd.f32 %v2315, %v2337
        %2339 = vdwg.mxu0
        %2340 = vmatpush.msra.mxu0 %v2076
        %2341 = vmatpush.msra.mxu0 %v2072
        %2342 = vmatpush.msra.mxu0 %v2068
        %2343 = vmatpush.msra.mxu0 %v2064
        %2344 = vmatpush.msra.mxu0 %v2060
        %2345 = vmatpush.msra.mxu0 %v2056
        %2346 = vmatpush.msra.mxu0 %v2052
        %2347 = vmatpush.msra.mxu0 %v2048
        %2348 = vmatpush.msra.mxu0 %v2044
        %2349 = vmatpush.msra.mxu0 %v2040
        %2350 = vmatpush.msra.mxu0 %v2036
        %2351 = vmatpush.msra.mxu0 %v2032
        %2352 = vmatpush.msra.mxu0 %v2028
        %2353 = vmatpush.msra.mxu0 %v2024
        %2354 = vmatpush.msra.mxu0 %v2020
        %2355 = vmatpush.msra.mxu0 %v2016
        %2356 = vmatmul.f32.gmra.mxu0 %v1356
        %v2357 = vpop.f32.mrf.mxu0
        %v2358 = vadd.f32 %v2335, %v2357
        %2359 = vmatmul.f32.gmra.mxu0 %v1363
        %v2360 = vpop.f32.mrf.mxu0
        %v2361 = vadd.f32 %v2338, %v2360
        %2362 = vdwg.mxu0
        %2363 = vmatpush.msra.mxu0 0.0
        %2364 = vmatpush.msra.mxu0 0.0
        %2365 = vmatpush.msra.mxu0 0.0
        %2366 = vmatpush.msra.mxu0 0.0
        %2367 = vmatpush.msra.mxu0 0.0
        %2368 = vmatpush.msra.mxu0 0.0
        %2369 = vmatpush.msra.mxu0 0.0
        %2370 = vmatpush.msra.mxu0 0.0
        %2371 = vmatpush.msra.mxu0 0.0
        %2372 = vmatpush.msra.mxu0 0.0
        %2373 = vmatpush.msra.mxu0 0.0
        %2374 = vmatpush.msra.mxu0 0.0
        %2375 = vmatpush.msra.mxu0 %v2092
        %2376 = vmatpush.msra.mxu0 %v2088
        %2377 = vmatpush.msra.mxu0 %v2084
        %2378 = vmatpush.msra.mxu0 %v2080
        %2379 = vmatmul.f32.gmra.mxu0 %v2106
        %v2380 = vpop.f32.mrf.mxu0
        %v2381 = vadd.f32 %v2358, %v2380
        %2382 = vmatmul.f32.gmra.mxu0 %v2108
        %v2383 = vpop.f32.mrf.mxu0
        %v2384 = vadd.f32 %v2361, %v2383
        %2385 = vdwg.mxu0
        %2386 = vmatpush.msra.mxu0 %v1437
        %2387 = vmatpush.msra.mxu0 %v1433
        %2388 = vmatpush.msra.mxu0 %v1429
        %2389 = vmatpush.msra.mxu0 %v1425
        %2390 = vmatpush.msra.mxu0 %v1421
        %2391 = vmatpush.msra.mxu0 %v1417
        %2392 = vmatpush.msra.mxu0 %v1413
        %2393 = vmatpush.msra.mxu0 %v1409
        %2394 = vmatpush.msra.mxu0 %v1405
        %2395 = vmatpush.msra.mxu0 %v1401
        %2396 = vmatpush.msra.mxu0 %v1397
        %2397 = vmatpush.msra.mxu0 %v1393
        %2398 = vmatpush.msra.mxu0 %v1389
        %2399 = vmatpush.msra.mxu0 %v1385
        %2400 = vmatpush.msra.mxu0 %v1381
        %2401 = vmatpush.msra.mxu0 %v1377
        %2402 = vmatmul.f32.gmra.mxu0 %v1198
        %v2403 = vpop.f32.mrf.mxu0
        %v2404 = vadd.f32 %v2099, %v2403
        %2405 = vmatmul.f32.gmra.mxu0 %v1201
        %v2406 = vpop.f32.mrf.mxu0
        %v2407 = vadd.f32 %v2099, %v2406
        %2408 = vdwg.mxu0
        %2409 = vmatpush.msra.mxu0 %v1501
        %2410 = vmatpush.msra.mxu0 %v1497
        %2411 = vmatpush.msra.mxu0 %v1493
        %2412 = vmatpush.msra.mxu0 %v1489
        %2413 = vmatpush.msra.mxu0 %v1485
        %2414 = vmatpush.msra.mxu0 %v1481
        %2415 = vmatpush.msra.mxu0 %v1477
        %2416 = vmatpush.msra.mxu0 %v1473
        %2417 = vmatpush.msra.mxu0 %v1469
        %2418 = vmatpush.msra.mxu0 %v1465
        %2419 = vmatpush.msra.mxu0 %v1461
        %2420 = vmatpush.msra.mxu0 %v1457
        %2421 = vmatpush.msra.mxu0 %v1453
        %2422 = vmatpush.msra.mxu0 %v1449
        %2423 = vmatpush.msra.mxu0 %v1445
        %2424 = vmatpush.msra.mxu0 %v1441
        %2425 = vmatmul.f32.gmra.mxu0 %v1199
        %v2426 = vpop.f32.mrf.mxu0
        %v2427 = vadd.f32 %v2404, %v2426
        %2428 = vmatmul.f32.gmra.mxu0 %v1202
        %v2429 = vpop.f32.mrf.mxu0
        %v2430 = vadd.f32 %v2407, %v2429
        %2431 = vdwg.mxu0
        %2432 = vmatpush.msra.mxu0 %v1565
        %2433 = vmatpush.msra.mxu0 %v1561
        %2434 = vmatpush.msra.mxu0 %v1557
        %2435 = vmatpush.msra.mxu0 %v1553
        %2436 = vmatpush.msra.mxu0 %v1549
        %2437 = vmatpush.msra.mxu0 %v1545
        %2438 = vmatpush.msra.mxu0 %v1541
        %2439 = vmatpush.msra.mxu0 %v1537
        %2440 = vmatpush.msra.mxu0 %v1533
        %2441 = vmatpush.msra.mxu0 %v1529
        %2442 = vmatpush.msra.mxu0 %v1525
        %2443 = vmatpush.msra.mxu0 %v1521
        %2444 = vmatpush.msra.mxu0 %v1517
        %2445 = vmatpush.msra.mxu0 %v1513
        %2446 = vmatpush.msra.mxu0 %v1509
        %2447 = vmatpush.msra.mxu0 %v1505
        %2448 = vmatmul.f32.gmra.mxu0 %v1370
        %v2449 = vpop.f32.mrf.mxu0
        %v2450 = vadd.f32 %v2427, %v2449
        %2451 = vmatmul.f32.gmra.mxu0 %v1371
        %v2452 = vpop.f32.mrf.mxu0
        %v2453 = vadd.f32 %v2430, %v2452
        %2454 = vdwg.mxu0
        %2455 = vmatpush.msra.mxu0 %v1629
        %2456 = vmatpush.msra.mxu0 %v1625
        %2457 = vmatpush.msra.mxu0 %v1621
        %2458 = vmatpush.msra.mxu0 %v1617
        %2459 = vmatpush.msra.mxu0 %v1613
        %2460 = vmatpush.msra.mxu0 %v1609
        %2461 = vmatpush.msra.mxu0 %v1605
        %2462 = vmatpush.msra.mxu0 %v1601
        %2463 = vmatpush.msra.mxu0 %v1597
        %2464 = vmatpush.msra.mxu0 %v1593
        %2465 = vmatpush.msra.mxu0 %v1589
        %2466 = vmatpush.msra.mxu0 %v1585
        %2467 = vmatpush.msra.mxu0 %v1581
        %2468 = vmatpush.msra.mxu0 %v1577
        %2469 = vmatpush.msra.mxu0 %v1573
        %2470 = vmatpush.msra.mxu0 %v1569
        %2471 = vmatmul.f32.gmra.mxu0 %v1255
        %v2472 = vpop.f32.mrf.mxu0
        %v2473 = vadd.f32 %v2450, %v2472
        %2474 = vmatmul.f32.gmra.mxu0 %v1257
        %v2475 = vpop.f32.mrf.mxu0
        %v2476 = vadd.f32 %v2453, %v2475
        %2477 = vdwg.mxu0
        %2478 = vmatpush.msra.mxu0 %v1693
        %2479 = vmatpush.msra.mxu0 %v1689
        %2480 = vmatpush.msra.mxu0 %v1685
        %2481 = vmatpush.msra.mxu0 %v1681
        %2482 = vmatpush.msra.mxu0 %v1677
        %2483 = vmatpush.msra.mxu0 %v1673
        %2484 = vmatpush.msra.mxu0 %v1669
        %2485 = vmatpush.msra.mxu0 %v1665
        %2486 = vmatpush.msra.mxu0 %v1661
        %2487 = vmatpush.msra.mxu0 %v1657
        %2488 = vmatpush.msra.mxu0 %v1653
        %2489 = vmatpush.msra.mxu0 %v1649
        %2490 = vmatpush.msra.mxu0 %v1645
        %2491 = vmatpush.msra.mxu0 %v1641
        %2492 = vmatpush.msra.mxu0 %v1637
        %2493 = vmatpush.msra.mxu0 %v1633
        %2494 = vmatmul.f32.gmra.mxu0 %v1372
        %v2495 = vpop.f32.mrf.mxu0
        %v2496 = vadd.f32 %v2473, %v2495
        %2497 = vmatmul.f32.gmra.mxu0 %v1373
        %v2498 = vpop.f32.mrf.mxu0
        %v2499 = vadd.f32 %v2476, %v2498
        %2500 = vdwg.mxu0
        %2501 = vmatpush.msra.mxu0 %v1757
        %2502 = vmatpush.msra.mxu0 %v1753
        %2503 = vmatpush.msra.mxu0 %v1749
        %2504 = vmatpush.msra.mxu0 %v1745
        %2505 = vmatpush.msra.mxu0 %v1741
        %2506 = vmatpush.msra.mxu0 %v1737
        %2507 = vmatpush.msra.mxu0 %v1733
        %2508 = vmatpush.msra.mxu0 %v1729
        %2509 = vmatpush.msra.mxu0 %v1725
        %2510 = vmatpush.msra.mxu0 %v1721
        %2511 = vmatpush.msra.mxu0 %v1717
        %2512 = vmatpush.msra.mxu0 %v1713
        %2513 = vmatpush.msra.mxu0 %v1709
        %2514 = vmatpush.msra.mxu0 %v1705
        %2515 = vmatpush.msra.mxu0 %v1701
        %2516 = vmatpush.msra.mxu0 %v1697
        %2517 = vmatmul.f32.gmra.mxu0 %v1292
        %v2518 = vpop.f32.mrf.mxu0
        %v2519 = vadd.f32 %v2496, %v2518
        %2520 = vmatmul.f32.gmra.mxu0 %v1294
        %v2521 = vpop.f32.mrf.mxu0
        %v2522 = vadd.f32 %v2499, %v2521
        %2523 = vdwg.mxu0
        %2524 = vmatpush.msra.mxu0 %v1821
        %2525 = vmatpush.msra.mxu0 %v1817
        %2526 = vmatpush.msra.mxu0 %v1813
        %2527 = vmatpush.msra.mxu0 %v1809
        %2528 = vmatpush.msra.mxu0 %v1805
        %2529 = vmatpush.msra.mxu0 %v1801
        %2530 = vmatpush.msra.mxu0 %v1797
        %2531 = vmatpush.msra.mxu0 %v1793
        %2532 = vmatpush.msra.mxu0 %v1789
        %2533 = vmatpush.msra.mxu0 %v1785
        %2534 = vmatpush.msra.mxu0 %v1781
        %2535 = vmatpush.msra.mxu0 %v1777
        %2536 = vmatpush.msra.mxu0 %v1773
        %2537 = vmatpush.msra.mxu0 %v1769
        %2538 = vmatpush.msra.mxu0 %v1765
        %2539 = vmatpush.msra.mxu0 %v1761
        %2540 = vmatmul.f32.gmra.mxu0 %v1374
        %v2541 = vpop.f32.mrf.mxu0
        %v2542 = vadd.f32 %v2519, %v2541
        %2543 = vmatmul.f32.gmra.mxu0 %v1375
        %v2544 = vpop.f32.mrf.mxu0
        %v2545 = vadd.f32 %v2522, %v2544
        %2546 = vdwg.mxu0
        %2547 = vmatpush.msra.mxu0 %v1885
        %2548 = vmatpush.msra.mxu0 %v1881
        %2549 = vmatpush.msra.mxu0 %v1877
        %2550 = vmatpush.msra.mxu0 %v1873
        %2551 = vmatpush.msra.mxu0 %v1869
        %2552 = vmatpush.msra.mxu0 %v1865
        %2553 = vmatpush.msra.mxu0 %v1861
        %2554 = vmatpush.msra.mxu0 %v1857
        %2555 = vmatpush.msra.mxu0 %v1853
        %2556 = vmatpush.msra.mxu0 %v1849
        %2557 = vmatpush.msra.mxu0 %v1845
        %2558 = vmatpush.msra.mxu0 %v1841
        %2559 = vmatpush.msra.mxu0 %v1837
        %2560 = vmatpush.msra.mxu0 %v1833
        %2561 = vmatpush.msra.mxu0 %v1829
        %2562 = vmatpush.msra.mxu0 %v1825
        %2563 = vmatmul.f32.gmra.mxu0 %v1335
        %v2564 = vpop.f32.mrf.mxu0
        %v2565 = vadd.f32 %v2542, %v2564
        %2566 = vmatmul.f32.gmra.mxu0 %v1337
        %v2567 = vpop.f32.mrf.mxu0
        %v2568 = vadd.f32 %v2545, %v2567
        %2569 = vdwg.mxu0
        %2570 = vmatpush.msra.mxu0 %v1949
        %2571 = vmatpush.msra.mxu0 %v1945
        %2572 = vmatpush.msra.mxu0 %v1941
        %2573 = vmatpush.msra.mxu0 %v1937
        %2574 = vmatpush.msra.mxu0 %v1933
        %2575 = vmatpush.msra.mxu0 %v1929
        %2576 = vmatpush.msra.mxu0 %v1925
        %2577 = vmatpush.msra.mxu0 %v1921
        %2578 = vmatpush.msra.mxu0 %v1917
        %2579 = vmatpush.msra.mxu0 %v1913
        %2580 = vmatpush.msra.mxu0 %v1909
        %2581 = vmatpush.msra.mxu0 %v1905
        %2582 = vmatpush.msra.mxu0 %v1901
        %2583 = vmatpush.msra.mxu0 %v1897
        %2584 = vmatpush.msra.mxu0 %v1893
        %2585 = vmatpush.msra.mxu0 %v1889
        %2586 = vmatmul.f32.gmra.mxu0 %v1336
        %v2587 = vpop.f32.mrf.mxu0
        %v2588 = vadd.f32 %v2565, %v2587
        %2589 = vmatmul.f32.gmra.mxu0 %v1338
        %v2590 = vpop.f32.mrf.mxu0
        %v2591 = vadd.f32 %v2568, %v2590
        %2592 = vdwg.mxu0
        %2593 = vmatpush.msra.mxu0 %v2013
        %2594 = vmatpush.msra.mxu0 %v2009
        %2595 = vmatpush.msra.mxu0 %v2005
        %2596 = vmatpush.msra.mxu0 %v2001
        %2597 = vmatpush.msra.mxu0 %v1997
        %2598 = vmatpush.msra.mxu0 %v1993
        %2599 = vmatpush.msra.mxu0 %v1989
        %2600 = vmatpush.msra.mxu0 %v1985
        %2601 = vmatpush.msra.mxu0 %v1981
        %2602 = vmatpush.msra.mxu0 %v1977
        %2603 = vmatpush.msra.mxu0 %v1973
        %2604 = vmatpush.msra.mxu0 %v1969
        %2605 = vmatpush.msra.mxu0 %v1965
        %2606 = vmatpush.msra.mxu0 %v1961
        %2607 = vmatpush.msra.mxu0 %v1957
        %2608 = vmatpush.msra.mxu0 %v1953
        %2609 = vmatmul.f32.gmra.mxu0 %v1353
        %v2610 = vpop.f32.mrf.mxu0
        %v2611 = vadd.f32 %v2588, %v2610
        %2612 = vmatmul.f32.gmra.mxu0 %v1361
        %v2613 = vpop.f32.mrf.mxu0
        %v2614 = vadd.f32 %v2591, %v2613
        %2615 = vdwg.mxu0
        %2616 = vmatpush.msra.mxu0 %v2077
        %2617 = vmatpush.msra.mxu0 %v2073
        %2618 = vmatpush.msra.mxu0 %v2069
        %2619 = vmatpush.msra.mxu0 %v2065
        %2620 = vmatpush.msra.mxu0 %v2061
        %2621 = vmatpush.msra.mxu0 %v2057
        %2622 = vmatpush.msra.mxu0 %v2053
        %2623 = vmatpush.msra.mxu0 %v2049
        %2624 = vmatpush.msra.mxu0 %v2045
        %2625 = vmatpush.msra.mxu0 %v2041
        %2626 = vmatpush.msra.mxu0 %v2037
        %2627 = vmatpush.msra.mxu0 %v2033
        %2628 = vmatpush.msra.mxu0 %v2029
        %2629 = vmatpush.msra.mxu0 %v2025
        %2630 = vmatpush.msra.mxu0 %v2021
        %2631 = vmatpush.msra.mxu0 %v2017
        %2632 = vmatmul.f32.gmra.mxu0 %v1356
        %v2633 = vpop.f32.mrf.mxu0
        %v2634 = vadd.f32 %v2611, %v2633
        %2635 = vmatmul.f32.gmra.mxu0 %v1363
        %v2636 = vpop.f32.mrf.mxu0
        %v2637 = vadd.f32 %v2614, %v2636
        %2638 = vdwg.mxu0
        %2639 = vmatpush.msra.mxu0 0.0
        %2640 = vmatpush.msra.mxu0 0.0
        %2641 = vmatpush.msra.mxu0 0.0
        %2642 = vmatpush.msra.mxu0 0.0
        %2643 = vmatpush.msra.mxu0 0.0
        %2644 = vmatpush.msra.mxu0 0.0
        %2645 = vmatpush.msra.mxu0 0.0
        %2646 = vmatpush.msra.mxu0 0.0
        %2647 = vmatpush.msra.mxu0 0.0
        %2648 = vmatpush.msra.mxu0 0.0
        %2649 = vmatpush.msra.mxu0 0.0
        %2650 = vmatpush.msra.mxu0 0.0
        %2651 = vmatpush.msra.mxu0 %v2093
        %2652 = vmatpush.msra.mxu0 %v2089
        %2653 = vmatpush.msra.mxu0 %v2085
        %2654 = vmatpush.msra.mxu0 %v2081
        %2655 = vmatmul.f32.gmra.mxu0 %v2106
        %v2656 = vpop.f32.mrf.mxu0
        %v2657 = vadd.f32 %v2634, %v2656
        %2658 = vmatmul.f32.gmra.mxu0 %v2108
        %v2659 = vpop.f32.mrf.mxu0
        %v2660 = vadd.f32 %v2637, %v2659
        %2661 = vdwg.mxu0
        %2662 = vmatpush.msra.mxu0 %v1438
        %2663 = vmatpush.msra.mxu0 %v1434
        %2664 = vmatpush.msra.mxu0 %v1430
        %2665 = vmatpush.msra.mxu0 %v1426
        %2666 = vmatpush.msra.mxu0 %v1422
        %2667 = vmatpush.msra.mxu0 %v1418
        %2668 = vmatpush.msra.mxu0 %v1414
        %2669 = vmatpush.msra.mxu0 %v1410
        %2670 = vmatpush.msra.mxu0 %v1406
        %2671 = vmatpush.msra.mxu0 %v1402
        %2672 = vmatpush.msra.mxu0 %v1398
        %2673 = vmatpush.msra.mxu0 %v1394
        %2674 = vmatpush.msra.mxu0 %v1390
        %2675 = vmatpush.msra.mxu0 %v1386
        %2676 = vmatpush.msra.mxu0 %v1382
        %2677 = vmatpush.msra.mxu0 %v1378
        %2678 = vmatmul.f32.gmra.mxu0 %v1198
        %v2679 = vpop.f32.mrf.mxu0
        %v2680 = vadd.f32 %v2100, %v2679
        %2681 = vmatmul.f32.gmra.mxu0 %v1201
        %v2682 = vpop.f32.mrf.mxu0
        %v2683 = vadd.f32 %v2100, %v2682
        %2684 = vdwg.mxu0
        %2685 = vmatpush.msra.mxu0 %v1502
        %2686 = vmatpush.msra.mxu0 %v1498
        %2687 = vmatpush.msra.mxu0 %v1494
        %2688 = vmatpush.msra.mxu0 %v1490
        %2689 = vmatpush.msra.mxu0 %v1486
        %2690 = vmatpush.msra.mxu0 %v1482
        %2691 = vmatpush.msra.mxu0 %v1478
        %2692 = vmatpush.msra.mxu0 %v1474
        %2693 = vmatpush.msra.mxu0 %v1470
        %2694 = vmatpush.msra.mxu0 %v1466
        %2695 = vmatpush.msra.mxu0 %v1462
        %2696 = vmatpush.msra.mxu0 %v1458
        %2697 = vmatpush.msra.mxu0 %v1454
        %2698 = vmatpush.msra.mxu0 %v1450
        %2699 = vmatpush.msra.mxu0 %v1446
        %2700 = vmatpush.msra.mxu0 %v1442
        %2701 = vmatmul.f32.gmra.mxu0 %v1199
        %v2702 = vpop.f32.mrf.mxu0
        %v2703 = vadd.f32 %v2680, %v2702
        %2704 = vmatmul.f32.gmra.mxu0 %v1202
        %v2705 = vpop.f32.mrf.mxu0
        %v2706 = vadd.f32 %v2683, %v2705
        %2707 = vdwg.mxu0
        %2708 = vmatpush.msra.mxu0 %v1566
        %2709 = vmatpush.msra.mxu0 %v1562
        %2710 = vmatpush.msra.mxu0 %v1558
        %2711 = vmatpush.msra.mxu0 %v1554
        %2712 = vmatpush.msra.mxu0 %v1550
        %2713 = vmatpush.msra.mxu0 %v1546
        %2714 = vmatpush.msra.mxu0 %v1542
        %2715 = vmatpush.msra.mxu0 %v1538
        %2716 = vmatpush.msra.mxu0 %v1534
        %2717 = vmatpush.msra.mxu0 %v1530
        %2718 = vmatpush.msra.mxu0 %v1526
        %2719 = vmatpush.msra.mxu0 %v1522
        %2720 = vmatpush.msra.mxu0 %v1518
        %2721 = vmatpush.msra.mxu0 %v1514
        %2722 = vmatpush.msra.mxu0 %v1510
        %2723 = vmatpush.msra.mxu0 %v1506
        %2724 = vmatmul.f32.gmra.mxu0 %v1370
        %v2725 = vpop.f32.mrf.mxu0
        %v2726 = vadd.f32 %v2703, %v2725
        %2727 = vmatmul.f32.gmra.mxu0 %v1371
        %v2728 = vpop.f32.mrf.mxu0
        %v2729 = vadd.f32 %v2706, %v2728
        %2730 = vdwg.mxu0
        %2731 = vmatpush.msra.mxu0 %v1630
        %2732 = vmatpush.msra.mxu0 %v1626
        %2733 = vmatpush.msra.mxu0 %v1622
        %2734 = vmatpush.msra.mxu0 %v1618
        %2735 = vmatpush.msra.mxu0 %v1614
        %2736 = vmatpush.msra.mxu0 %v1610
        %2737 = vmatpush.msra.mxu0 %v1606
        %2738 = vmatpush.msra.mxu0 %v1602
        %2739 = vmatpush.msra.mxu0 %v1598
        %2740 = vmatpush.msra.mxu0 %v1594
        %2741 = vmatpush.msra.mxu0 %v1590
        %2742 = vmatpush.msra.mxu0 %v1586
        %2743 = vmatpush.msra.mxu0 %v1582
        %2744 = vmatpush.msra.mxu0 %v1578
        %2745 = vmatpush.msra.mxu0 %v1574
        %2746 = vmatpush.msra.mxu0 %v1570
        %2747 = vmatmul.f32.gmra.mxu0 %v1255
        %v2748 = vpop.f32.mrf.mxu0
        %v2749 = vadd.f32 %v2726, %v2748
        %2750 = vmatmul.f32.gmra.mxu0 %v1257
        %v2751 = vpop.f32.mrf.mxu0
        %v2752 = vadd.f32 %v2729, %v2751
        %2753 = vdwg.mxu0
        %2754 = vmatpush.msra.mxu0 %v1694
        %2755 = vmatpush.msra.mxu0 %v1690
        %2756 = vmatpush.msra.mxu0 %v1686
        %2757 = vmatpush.msra.mxu0 %v1682
        %2758 = vmatpush.msra.mxu0 %v1678
        %2759 = vmatpush.msra.mxu0 %v1674
        %2760 = vmatpush.msra.mxu0 %v1670
        %2761 = vmatpush.msra.mxu0 %v1666
        %2762 = vmatpush.msra.mxu0 %v1662
        %2763 = vmatpush.msra.mxu0 %v1658
        %2764 = vmatpush.msra.mxu0 %v1654
        %2765 = vmatpush.msra.mxu0 %v1650
        %2766 = vmatpush.msra.mxu0 %v1646
        %2767 = vmatpush.msra.mxu0 %v1642
        %2768 = vmatpush.msra.mxu0 %v1638
        %2769 = vmatpush.msra.mxu0 %v1634
        %2770 = vmatmul.f32.gmra.mxu0 %v1372
        %v2771 = vpop.f32.mrf.mxu0
        %v2772 = vadd.f32 %v2749, %v2771
        %2773 = vmatmul.f32.gmra.mxu0 %v1373
        %v2774 = vpop.f32.mrf.mxu0
        %v2775 = vadd.f32 %v2752, %v2774
        %2776 = vdwg.mxu0
        %2777 = vmatpush.msra.mxu0 %v1758
        %2778 = vmatpush.msra.mxu0 %v1754
        %2779 = vmatpush.msra.mxu0 %v1750
        %2780 = vmatpush.msra.mxu0 %v1746
        %2781 = vmatpush.msra.mxu0 %v1742
        %2782 = vmatpush.msra.mxu0 %v1738
        %2783 = vmatpush.msra.mxu0 %v1734
        %2784 = vmatpush.msra.mxu0 %v1730
        %2785 = vmatpush.msra.mxu0 %v1726
        %2786 = vmatpush.msra.mxu0 %v1722
        %2787 = vmatpush.msra.mxu0 %v1718
        %2788 = vmatpush.msra.mxu0 %v1714
        %2789 = vmatpush.msra.mxu0 %v1710
        %2790 = vmatpush.msra.mxu0 %v1706
        %2791 = vmatpush.msra.mxu0 %v1702
        %2792 = vmatpush.msra.mxu0 %v1698
        %2793 = vmatmul.f32.gmra.mxu0 %v1292
        %v2794 = vpop.f32.mrf.mxu0
        %v2795 = vadd.f32 %v2772, %v2794
        %2796 = vmatmul.f32.gmra.mxu0 %v1294
        %v2797 = vpop.f32.mrf.mxu0
        %v2798 = vadd.f32 %v2775, %v2797
        %2799 = vdwg.mxu0
        %2800 = vmatpush.msra.mxu0 %v1822
        %2801 = vmatpush.msra.mxu0 %v1818
        %2802 = vmatpush.msra.mxu0 %v1814
        %2803 = vmatpush.msra.mxu0 %v1810
        %2804 = vmatpush.msra.mxu0 %v1806
        %2805 = vmatpush.msra.mxu0 %v1802
        %2806 = vmatpush.msra.mxu0 %v1798
        %2807 = vmatpush.msra.mxu0 %v1794
        %2808 = vmatpush.msra.mxu0 %v1790
        %2809 = vmatpush.msra.mxu0 %v1786
        %2810 = vmatpush.msra.mxu0 %v1782
        %2811 = vmatpush.msra.mxu0 %v1778
        %2812 = vmatpush.msra.mxu0 %v1774
        %2813 = vmatpush.msra.mxu0 %v1770
        %2814 = vmatpush.msra.mxu0 %v1766
        %2815 = vmatpush.msra.mxu0 %v1762
        %2816 = vmatmul.f32.gmra.mxu0 %v1374
        %v2817 = vpop.f32.mrf.mxu0
        %v2818 = vadd.f32 %v2795, %v2817
        %2819 = vmatmul.f32.gmra.mxu0 %v1375
        %v2820 = vpop.f32.mrf.mxu0
        %v2821 = vadd.f32 %v2798, %v2820
        %2822 = vdwg.mxu0
        %2823 = vmatpush.msra.mxu0 %v1886
        %2824 = vmatpush.msra.mxu0 %v1882
        %2825 = vmatpush.msra.mxu0 %v1878
        %2826 = vmatpush.msra.mxu0 %v1874
        %2827 = vmatpush.msra.mxu0 %v1870
        %2828 = vmatpush.msra.mxu0 %v1866
        %2829 = vmatpush.msra.mxu0 %v1862
        %2830 = vmatpush.msra.mxu0 %v1858
        %2831 = vmatpush.msra.mxu0 %v1854
        %2832 = vmatpush.msra.mxu0 %v1850
        %2833 = vmatpush.msra.mxu0 %v1846
        %2834 = vmatpush.msra.mxu0 %v1842
        %2835 = vmatpush.msra.mxu0 %v1838
        %2836 = vmatpush.msra.mxu0 %v1834
        %2837 = vmatpush.msra.mxu0 %v1830
        %2838 = vmatpush.msra.mxu0 %v1826
        %2839 = vmatmul.f32.gmra.mxu0 %v1335
        %v2840 = vpop.f32.mrf.mxu0
        %v2841 = vadd.f32 %v2818, %v2840
        %2842 = vmatmul.f32.gmra.mxu0 %v1337
        %v2843 = vpop.f32.mrf.mxu0
        %v2844 = vadd.f32 %v2821, %v2843
        %2845 = vdwg.mxu0
        %2846 = vmatpush.msra.mxu0 %v1950
        %2847 = vmatpush.msra.mxu0 %v1946
        %2848 = vmatpush.msra.mxu0 %v1942
        %2849 = vmatpush.msra.mxu0 %v1938
        %2850 = vmatpush.msra.mxu0 %v1934
        %2851 = vmatpush.msra.mxu0 %v1930
        %2852 = vmatpush.msra.mxu0 %v1926
        %2853 = vmatpush.msra.mxu0 %v1922
        %2854 = vmatpush.msra.mxu0 %v1918
        %2855 = vmatpush.msra.mxu0 %v1914
        %2856 = vmatpush.msra.mxu0 %v1910
        %2857 = vmatpush.msra.mxu0 %v1906
        %2858 = vmatpush.msra.mxu0 %v1902
        %2859 = vmatpush.msra.mxu0 %v1898
        %2860 = vmatpush.msra.mxu0 %v1894
        %2861 = vmatpush.msra.mxu0 %v1890
        %2862 = vmatmul.f32.gmra.mxu0 %v1336
        %v2863 = vpop.f32.mrf.mxu0
        %v2864 = vadd.f32 %v2841, %v2863
        %2865 = vmatmul.f32.gmra.mxu0 %v1338
        %v2866 = vpop.f32.mrf.mxu0
        %v2867 = vadd.f32 %v2844, %v2866
        %2868 = vdwg.mxu0
        %2869 = vmatpush.msra.mxu0 %v2014
        %2870 = vmatpush.msra.mxu0 %v2010
        %2871 = vmatpush.msra.mxu0 %v2006
        %2872 = vmatpush.msra.mxu0 %v2002
        %2873 = vmatpush.msra.mxu0 %v1998
        %2874 = vmatpush.msra.mxu0 %v1994
        %2875 = vmatpush.msra.mxu0 %v1990
        %2876 = vmatpush.msra.mxu0 %v1986
        %2877 = vmatpush.msra.mxu0 %v1982
        %2878 = vmatpush.msra.mxu0 %v1978
        %2879 = vmatpush.msra.mxu0 %v1974
        %2880 = vmatpush.msra.mxu0 %v1970
        %2881 = vmatpush.msra.mxu0 %v1966
        %2882 = vmatpush.msra.mxu0 %v1962
        %2883 = vmatpush.msra.mxu0 %v1958
        %2884 = vmatpush.msra.mxu0 %v1954
        %2885 = vmatmul.f32.gmra.mxu0 %v1353
        %v2886 = vpop.f32.mrf.mxu0
        %v2887 = vadd.f32 %v2864, %v2886
        %2888 = vmatmul.f32.gmra.mxu0 %v1361
        %v2889 = vpop.f32.mrf.mxu0
        %v2890 = vadd.f32 %v2867, %v2889
        %2891 = vdwg.mxu0
        %2892 = vmatpush.msra.mxu0 %v2078
        %2893 = vmatpush.msra.mxu0 %v2074
        %2894 = vmatpush.msra.mxu0 %v2070
        %2895 = vmatpush.msra.mxu0 %v2066
        %2896 = vmatpush.msra.mxu0 %v2062
        %2897 = vmatpush.msra.mxu0 %v2058
        %2898 = vmatpush.msra.mxu0 %v2054
        %2899 = vmatpush.msra.mxu0 %v2050
        %2900 = vmatpush.msra.mxu0 %v2046
        %2901 = vmatpush.msra.mxu0 %v2042
        %2902 = vmatpush.msra.mxu0 %v2038
        %2903 = vmatpush.msra.mxu0 %v2034
        %2904 = vmatpush.msra.mxu0 %v2030
        %2905 = vmatpush.msra.mxu0 %v2026
        %2906 = vmatpush.msra.mxu0 %v2022
        %2907 = vmatpush.msra.mxu0 %v2018
        %2908 = vmatmul.f32.gmra.mxu0 %v1356
        %v2909 = vpop.f32.mrf.mxu0
        %v2910 = vadd.f32 %v2887, %v2909
        %2911 = vmatmul.f32.gmra.mxu0 %v1363
        %v2912 = vpop.f32.mrf.mxu0
        %v2913 = vadd.f32 %v2890, %v2912
        %2914 = vdwg.mxu0
        %2915 = vmatpush.msra.mxu0 0.0
        %2916 = vmatpush.msra.mxu0 0.0
        %2917 = vmatpush.msra.mxu0 0.0
        %2918 = vmatpush.msra.mxu0 0.0
        %2919 = vmatpush.msra.mxu0 0.0
        %2920 = vmatpush.msra.mxu0 0.0
        %2921 = vmatpush.msra.mxu0 0.0
        %2922 = vmatpush.msra.mxu0 0.0
        %2923 = vmatpush.msra.mxu0 0.0
        %2924 = vmatpush.msra.mxu0 0.0
        %2925 = vmatpush.msra.mxu0 0.0
        %2926 = vmatpush.msra.mxu0 0.0
        %2927 = vmatpush.msra.mxu0 %v2094
        %2928 = vmatpush.msra.mxu0 %v2090
        %2929 = vmatpush.msra.mxu0 %v2086
        %2930 = vmatpush.msra.mxu0 %v2082
        %2931 = vmatmul.f32.gmra.mxu0 %v2106
        %v2932 = vpop.f32.mrf.mxu0
        %v2933 = vadd.f32 %v2910, %v2932
        %2934 = vmatmul.f32.gmra.mxu0 %v2108
        %v2935 = vpop.f32.mrf.mxu0
        %v2936 = vadd.f32 %v2913, %v2935
        %2937 = vdwg.mxu0
        %2938 = vmatpush.msra.mxu0 %v1439
        %2939 = vmatpush.msra.mxu0 %v1435
        %2940 = vmatpush.msra.mxu0 %v1431
        %2941 = vmatpush.msra.mxu0 %v1427
        %2942 = vmatpush.msra.mxu0 %v1423
        %2943 = vmatpush.msra.mxu0 %v1419
        %2944 = vmatpush.msra.mxu0 %v1415
        %2945 = vmatpush.msra.mxu0 %v1411
        %2946 = vmatpush.msra.mxu0 %v1407
        %2947 = vmatpush.msra.mxu0 %v1403
        %2948 = vmatpush.msra.mxu0 %v1399
        %2949 = vmatpush.msra.mxu0 %v1395
        %2950 = vmatpush.msra.mxu0 %v1391
        %2951 = vmatpush.msra.mxu0 %v1387
        %2952 = vmatpush.msra.mxu0 %v1383
        %2953 = vmatpush.msra.mxu0 %v1379
        %2954 = vmatmul.f32.gmra.mxu0 %v1198
        %v2955 = vpop.f32.mrf.mxu0
        %v2956 = vadd.f32 %v2101, %v2955
        %2957 = vmatmul.f32.gmra.mxu0 %v1201
        %v2958 = vpop.f32.mrf.mxu0
        %v2959 = vadd.f32 %v2101, %v2958
        %2960 = vdwg.mxu0
        %2961 = vmatpush.msra.mxu0 %v1503
        %2962 = vmatpush.msra.mxu0 %v1499
        %2963 = vmatpush.msra.mxu0 %v1495
        %2964 = vmatpush.msra.mxu0 %v1491
        %2965 = vmatpush.msra.mxu0 %v1487
        %2966 = vmatpush.msra.mxu0 %v1483
        %2967 = vmatpush.msra.mxu0 %v1479
        %2968 = vmatpush.msra.mxu0 %v1475
        %2969 = vmatpush.msra.mxu0 %v1471
        %2970 = vmatpush.msra.mxu0 %v1467
        %2971 = vmatpush.msra.mxu0 %v1463
        %2972 = vmatpush.msra.mxu0 %v1459
        %2973 = vmatpush.msra.mxu0 %v1455
        %2974 = vmatpush.msra.mxu0 %v1451
        %2975 = vmatpush.msra.mxu0 %v1447
        %2976 = vmatpush.msra.mxu0 %v1443
        %2977 = vmatmul.f32.gmra.mxu0 %v1199
        %v2978 = vpop.f32.mrf.mxu0
        %v2979 = vadd.f32 %v2956, %v2978
        %2980 = vmatmul.f32.gmra.mxu0 %v1202
        %v2981 = vpop.f32.mrf.mxu0
        %v2982 = vadd.f32 %v2959, %v2981
        %2983 = vdwg.mxu0
        %2984 = vmatpush.msra.mxu0 %v1567
        %2985 = vmatpush.msra.mxu0 %v1563
        %2986 = vmatpush.msra.mxu0 %v1559
        %2987 = vmatpush.msra.mxu0 %v1555
        %2988 = vmatpush.msra.mxu0 %v1551
        %2989 = vmatpush.msra.mxu0 %v1547
        %2990 = vmatpush.msra.mxu0 %v1543
        %2991 = vmatpush.msra.mxu0 %v1539
        %2992 = vmatpush.msra.mxu0 %v1535
        %2993 = vmatpush.msra.mxu0 %v1531
        %2994 = vmatpush.msra.mxu0 %v1527
        %2995 = vmatpush.msra.mxu0 %v1523
        %2996 = vmatpush.msra.mxu0 %v1519
        %2997 = vmatpush.msra.mxu0 %v1515
        %2998 = vmatpush.msra.mxu0 %v1511
        %2999 = vmatpush.msra.mxu0 %v1507
        %3000 = vmatmul.f32.gmra.mxu0 %v1370
        %v3001 = vpop.f32.mrf.mxu0
        %v3002 = vadd.f32 %v2979, %v3001
        %3003 = vmatmul.f32.gmra.mxu0 %v1371
        %v3004 = vpop.f32.mrf.mxu0
        %v3005 = vadd.f32 %v2982, %v3004
        %3006 = vdwg.mxu0
        %3007 = vmatpush.msra.mxu0 %v1631
        %3008 = vmatpush.msra.mxu0 %v1627
        %3009 = vmatpush.msra.mxu0 %v1623
        %3010 = vmatpush.msra.mxu0 %v1619
        %3011 = vmatpush.msra.mxu0 %v1615
        %3012 = vmatpush.msra.mxu0 %v1611
        %3013 = vmatpush.msra.mxu0 %v1607
        %3014 = vmatpush.msra.mxu0 %v1603
        %3015 = vmatpush.msra.mxu0 %v1599
        %3016 = vmatpush.msra.mxu0 %v1595
        %3017 = vmatpush.msra.mxu0 %v1591
        %3018 = vmatpush.msra.mxu0 %v1587
        %3019 = vmatpush.msra.mxu0 %v1583
        %3020 = vmatpush.msra.mxu0 %v1579
        %3021 = vmatpush.msra.mxu0 %v1575
        %3022 = vmatpush.msra.mxu0 %v1571
        %3023 = vmatmul.f32.gmra.mxu0 %v1255
        %v3024 = vpop.f32.mrf.mxu0
        %v3025 = vadd.f32 %v3002, %v3024
        %3026 = vmatmul.f32.gmra.mxu0 %v1257
        %v3027 = vpop.f32.mrf.mxu0
        %v3028 = vadd.f32 %v3005, %v3027
        %3029 = vdwg.mxu0
        %3030 = vmatpush.msra.mxu0 %v1695
        %3031 = vmatpush.msra.mxu0 %v1691
        %3032 = vmatpush.msra.mxu0 %v1687
        %3033 = vmatpush.msra.mxu0 %v1683
        %3034 = vmatpush.msra.mxu0 %v1679
        %3035 = vmatpush.msra.mxu0 %v1675
        %3036 = vmatpush.msra.mxu0 %v1671
        %3037 = vmatpush.msra.mxu0 %v1667
        %3038 = vmatpush.msra.mxu0 %v1663
        %3039 = vmatpush.msra.mxu0 %v1659
        %3040 = vmatpush.msra.mxu0 %v1655
        %3041 = vmatpush.msra.mxu0 %v1651
        %3042 = vmatpush.msra.mxu0 %v1647
        %3043 = vmatpush.msra.mxu0 %v1643
        %3044 = vmatpush.msra.mxu0 %v1639
        %3045 = vmatpush.msra.mxu0 %v1635
        %3046 = vmatmul.f32.gmra.mxu0 %v1372
        %v3047 = vpop.f32.mrf.mxu0
        %v3048 = vadd.f32 %v3025, %v3047
        %3049 = vmatmul.f32.gmra.mxu0 %v1373
        %v3050 = vpop.f32.mrf.mxu0
        %v3051 = vadd.f32 %v3028, %v3050
        %3052 = vdwg.mxu0
        %3053 = vmatpush.msra.mxu0 %v1759
        %3054 = vmatpush.msra.mxu0 %v1755
        %3055 = vmatpush.msra.mxu0 %v1751
        %3056 = vmatpush.msra.mxu0 %v1747
        %3057 = vmatpush.msra.mxu0 %v1743
        %3058 = vmatpush.msra.mxu0 %v1739
        %3059 = vmatpush.msra.mxu0 %v1735
        %3060 = vmatpush.msra.mxu0 %v1731
        %3061 = vmatpush.msra.mxu0 %v1727
        %3062 = vmatpush.msra.mxu0 %v1723
        %3063 = vmatpush.msra.mxu0 %v1719
        %3064 = vmatpush.msra.mxu0 %v1715
        %3065 = vmatpush.msra.mxu0 %v1711
        %3066 = vmatpush.msra.mxu0 %v1707
        %3067 = vmatpush.msra.mxu0 %v1703
        %3068 = vmatpush.msra.mxu0 %v1699
        %3069 = vmatmul.f32.gmra.mxu0 %v1292
        %v3070 = vpop.f32.mrf.mxu0
        %v3071 = vadd.f32 %v3048, %v3070
        %3072 = vmatmul.f32.gmra.mxu0 %v1294
        %v3073 = vpop.f32.mrf.mxu0
        %v3074 = vadd.f32 %v3051, %v3073
        %3075 = vdwg.mxu0
        %3076 = vmatpush.msra.mxu0 %v1823
        %3077 = vmatpush.msra.mxu0 %v1819
        %3078 = vmatpush.msra.mxu0 %v1815
        %3079 = vmatpush.msra.mxu0 %v1811
        %3080 = vmatpush.msra.mxu0 %v1807
        %3081 = vmatpush.msra.mxu0 %v1803
        %3082 = vmatpush.msra.mxu0 %v1799
        %3083 = vmatpush.msra.mxu0 %v1795
        %3084 = vmatpush.msra.mxu0 %v1791
        %3085 = vmatpush.msra.mxu0 %v1787
        %3086 = vmatpush.msra.mxu0 %v1783
        %3087 = vmatpush.msra.mxu0 %v1779
        %3088 = vmatpush.msra.mxu0 %v1775
        %3089 = vmatpush.msra.mxu0 %v1771
        %3090 = vmatpush.msra.mxu0 %v1767
        %3091 = vmatpush.msra.mxu0 %v1763
        %3092 = vmatmul.f32.gmra.mxu0 %v1374
        %v3093 = vpop.f32.mrf.mxu0
        %v3094 = vadd.f32 %v3071, %v3093
        %3095 = vmatmul.f32.gmra.mxu0 %v1375
        %v3096 = vpop.f32.mrf.mxu0
        %v3097 = vadd.f32 %v3074, %v3096
        %3098 = vdwg.mxu0
        %3099 = vmatpush.msra.mxu0 %v1887
        %3100 = vmatpush.msra.mxu0 %v1883
        %3101 = vmatpush.msra.mxu0 %v1879
        %3102 = vmatpush.msra.mxu0 %v1875
        %3103 = vmatpush.msra.mxu0 %v1871
        %3104 = vmatpush.msra.mxu0 %v1867
        %3105 = vmatpush.msra.mxu0 %v1863
        %3106 = vmatpush.msra.mxu0 %v1859
        %3107 = vmatpush.msra.mxu0 %v1855
        %3108 = vmatpush.msra.mxu0 %v1851
        %3109 = vmatpush.msra.mxu0 %v1847
        %3110 = vmatpush.msra.mxu0 %v1843
        %3111 = vmatpush.msra.mxu0 %v1839
        %3112 = vmatpush.msra.mxu0 %v1835
        %3113 = vmatpush.msra.mxu0 %v1831
        %3114 = vmatpush.msra.mxu0 %v1827
        %3115 = vmatmul.f32.gmra.mxu0 %v1335
        %v3116 = vpop.f32.mrf.mxu0
        %v3117 = vadd.f32 %v3094, %v3116
        %3118 = vmatmul.f32.gmra.mxu0 %v1337
        %v3119 = vpop.f32.mrf.mxu0
        %v3120 = vadd.f32 %v3097, %v3119
        %3121 = vdwg.mxu0
        %3122 = vmatpush.msra.mxu0 %v1951
        %3123 = vmatpush.msra.mxu0 %v1947
        %3124 = vmatpush.msra.mxu0 %v1943
        %3125 = vmatpush.msra.mxu0 %v1939
        %3126 = vmatpush.msra.mxu0 %v1935
        %3127 = vmatpush.msra.mxu0 %v1931
        %3128 = vmatpush.msra.mxu0 %v1927
        %3129 = vmatpush.msra.mxu0 %v1923
        %3130 = vmatpush.msra.mxu0 %v1919
        %3131 = vmatpush.msra.mxu0 %v1915
        %3132 = vmatpush.msra.mxu0 %v1911
        %3133 = vmatpush.msra.mxu0 %v1907
        %3134 = vmatpush.msra.mxu0 %v1903
        %3135 = vmatpush.msra.mxu0 %v1899
        %3136 = vmatpush.msra.mxu0 %v1895
        %3137 = vmatpush.msra.mxu0 %v1891
        %3138 = vmatmul.f32.gmra.mxu0 %v1336
        %v3139 = vpop.f32.mrf.mxu0
        %v3140 = vadd.f32 %v3117, %v3139
        %3141 = vmatmul.f32.gmra.mxu0 %v1338
        %v3142 = vpop.f32.mrf.mxu0
        %v3143 = vadd.f32 %v3120, %v3142
        %3144 = vdwg.mxu0
        %3145 = vmatpush.msra.mxu0 %v2015
        %3146 = vmatpush.msra.mxu0 %v2011
        %3147 = vmatpush.msra.mxu0 %v2007
        %3148 = vmatpush.msra.mxu0 %v2003
        %3149 = vmatpush.msra.mxu0 %v1999
        %3150 = vmatpush.msra.mxu0 %v1995
        %3151 = vmatpush.msra.mxu0 %v1991
        %3152 = vmatpush.msra.mxu0 %v1987
        %3153 = vmatpush.msra.mxu0 %v1983
        %3154 = vmatpush.msra.mxu0 %v1979
        %3155 = vmatpush.msra.mxu0 %v1975
        %3156 = vmatpush.msra.mxu0 %v1971
        %3157 = vmatpush.msra.mxu0 %v1967
        %3158 = vmatpush.msra.mxu0 %v1963
        %3159 = vmatpush.msra.mxu0 %v1959
        %3160 = vmatpush.msra.mxu0 %v1955
        %3161 = vmatmul.f32.gmra.mxu0 %v1353
        %v3162 = vpop.f32.mrf.mxu0
        %v3163 = vadd.f32 %v3140, %v3162
        %3164 = vmatmul.f32.gmra.mxu0 %v1361
        %v3165 = vpop.f32.mrf.mxu0
        %v3166 = vadd.f32 %v3143, %v3165
        %3167 = vdwg.mxu0
        %3168 = vmatpush.msra.mxu0 %v2079
        %3169 = vmatpush.msra.mxu0 %v2075
        %3170 = vmatpush.msra.mxu0 %v2071
        %3171 = vmatpush.msra.mxu0 %v2067
        %3172 = vmatpush.msra.mxu0 %v2063
        %3173 = vmatpush.msra.mxu0 %v2059
        %3174 = vmatpush.msra.mxu0 %v2055
        %3175 = vmatpush.msra.mxu0 %v2051
        %3176 = vmatpush.msra.mxu0 %v2047
        %3177 = vmatpush.msra.mxu0 %v2043
        %3178 = vmatpush.msra.mxu0 %v2039
        %3179 = vmatpush.msra.mxu0 %v2035
        %3180 = vmatpush.msra.mxu0 %v2031
        %3181 = vmatpush.msra.mxu0 %v2027
        %3182 = vmatpush.msra.mxu0 %v2023
        %3183 = vmatpush.msra.mxu0 %v2019
        %3184 = vmatmul.f32.gmra.mxu0 %v1356
        %v3185 = vpop.f32.mrf.mxu0
        %v3186 = vadd.f32 %v3163, %v3185
        %3187 = vmatmul.f32.gmra.mxu0 %v1363
        %v3188 = vpop.f32.mrf.mxu0
        %v3189 = vadd.f32 %v3166, %v3188
        %3190 = vdwg.mxu0
        %3191 = vmatpush.msra.mxu0 0.0
        %3192 = vmatpush.msra.mxu0 0.0
        %3193 = vmatpush.msra.mxu0 0.0
        %3194 = vmatpush.msra.mxu0 0.0
        %3195 = vmatpush.msra.mxu0 0.0
        %3196 = vmatpush.msra.mxu0 0.0
        %3197 = vmatpush.msra.mxu0 0.0
        %3198 = vmatpush.msra.mxu0 0.0
        %3199 = vmatpush.msra.mxu0 0.0
        %3200 = vmatpush.msra.mxu0 0.0
        %3201 = vmatpush.msra.mxu0 0.0
        %3202 = vmatpush.msra.mxu0 0.0
        %3203 = vmatpush.msra.mxu0 %v2095
        %3204 = vmatpush.msra.mxu0 %v2091
        %3205 = vmatpush.msra.mxu0 %v2087
        %3206 = vmatpush.msra.mxu0 %v2083
        %3207 = vmatmul.f32.gmra.mxu0 %v2106
        %v3208 = vpop.f32.mrf.mxu0
        %v3209 = vadd.f32 %v3186, %v3208
        %3210 = vmatmul.f32.gmra.mxu0 %v2108
        %v3211 = vpop.f32.mrf.mxu0
        %v3212 = vadd.f32 %v3189, %v3211
        %3213 = vdwg.mxu0
        %v3214 = vmax.f32 %v2381, 0.0
        %v3215 = vmax.f32 %v2657, 0.0
        %v3216 = vmax.f32 %v2933, 0.0
        %v3217 = vmax.f32 %v3209, 0.0
        %v3218 = vmax.f32 %v2384, 0.0
        %v3219 = vmax.f32 %v2660, 0.0
        %v3220 = vmax.f32 %v2936, 0.0
        %v3221 = vmax.f32 %v3212, 0.0
        %v3226 = vrot.slane %v3214, 1
        %v3227 = vrot.slane %v3215, 1
        %v3228 = vrot.slane %v3216, 1
        %v3229 = vrot.slane %v3217, 1
        %v3234 = vmax.f32 %v3214, %v3226
        %v3235 = vmax.f32 %v3215, %v3227
        %v3236 = vmax.f32 %v3216, %v3228
        %v3237 = vmax.f32 %v3217, %v3229
        %v3242 = vrot.slane %v3218, 1
        %v3243 = vrot.slane %v3219, 1
        %v3244 = vrot.slane %v3220, 1
        %v3245 = vrot.slane %v3221, 1
        %v3250 = vmax.f32 %v3218, %v3242
        %v3251 = vmax.f32 %v3219, %v3243
        %v3252 = vmax.f32 %v3220, %v3244
        %v3253 = vmax.f32 %v3221, %v3245
        %v3258 = vrot.slane %v3234, 1
        %v3259 = vrot.slane %v3235, 1
        %v3260 = vrot.slane %v3236, 1
        %v3261 = vrot.slane %v3237, 1
        %v3266 = vrot.slane %v3234, 2
        %v3267 = vrot.slane %v3235, 2
        %v3268 = vrot.slane %v3236, 2
        %v3269 = vrot.slane %v3237, 2
        %v3274 = vrot.slane %v3234, 3
        %v3275 = vrot.slane %v3235, 3
        %v3276 = vrot.slane %v3236, 3
        %v3277 = vrot.slane %v3237, 3
        %v3286 = vrot.slane %v3250, 4
        %v3287 = vrot.slane %v3251, 4
        %v3288 = vrot.slane %v3252, 4
        %v3289 = vrot.slane %v3253, 4
        %v3294 = vrot.slane %v3250, 5
        %v3295 = vrot.slane %v3251, 5
        %v3296 = vrot.slane %v3252, 5
        %v3297 = vrot.slane %v3253, 5
        %v3302 = vrot.slane %v3250, 6
        %v3303 = vrot.slane %v3251, 6
        %v3304 = vrot.slane %v3252, 6
        %v3305 = vrot.slane %v3253, 6
        %v3310 = vsel %vm955, %v3234, %v3258
        %v3311 = vsel %vm955, %v3235, %v3259
        %v3312 = vsel %vm955, %v3236, %v3260
        %v3313 = vsel %vm955, %v3237, %v3261
        %v3314 = vsel %vm960, %v3310, %v3266
        %v3315 = vsel %vm960, %v3311, %v3267
        %v3316 = vsel %vm960, %v3312, %v3268
        %v3317 = vsel %vm960, %v3313, %v3269
        %v3318 = vsel %vm965, %v3314, %v3274
        %v3319 = vsel %vm965, %v3315, %v3275
        %v3320 = vsel %vm965, %v3316, %v3276
        %v3321 = vsel %vm965, %v3317, %v3277
        %v3322 = vsel %vm970, %v3318, %v3286
        %v3323 = vsel %vm970, %v3319, %v3287
        %v3324 = vsel %vm970, %v3320, %v3288
        %v3325 = vsel %vm970, %v3321, %v3289
        %v3326 = vsel %vm975, %v3322, %v3294
        %v3327 = vsel %vm975, %v3323, %v3295
        %v3328 = vsel %vm975, %v3324, %v3296
        %v3329 = vsel %vm975, %v3325, %v3297
        %v3330 = vsel %vm980, %v3326, %v3302
        %v3331 = vsel %vm980, %v3327, %v3303
        %v3332 = vsel %vm980, %v3328, %v3304
        %v3333 = vsel %vm980, %v3329, %v3305
        %3335 = vrot.lane.b32.xlu0 %v3330, 96
        %v3336 = vpop.permute.xlu0 %3335
        %v3338 = vmax.f32 %v3330, %v3336
        %3340 = vrot.lane.b32.xlu0 %v3331, 96
        %v3341 = vpop.permute.xlu0 %3340
        %v3343 = vmax.f32 %v3331, %v3341
        %3345 = vrot.lane.b32.xlu0 %v3332, 96
        %v3346 = vpop.permute.xlu0 %3345
        %v3348 = vmax.f32 %v3332, %v3346
        %3350 = vrot.lane.b32.xlu0 %v3333, 96
        %v3351 = vpop.permute.xlu0 %3350
        %v3353 = vmax.f32 %v3333, %v3351
        %3355 = vrot.lane.b32.xlu0 %v3338, 96
        %v3356 = vpop.permute.xlu0 %3355
        %3359 = vrot.lane.b32.xlu0 %v3343, 64
        %v3360 = vpop.permute.xlu0 %3359
        %3362 = vrot.lane.b32.xlu0 %v3343, 32
        %v3363 = vpop.permute.xlu0 %3362
        %3366 = vrot.lane.b32.xlu0 %v3348, 96
        %v3367 = vpop.permute.xlu0 %3366
        %3370 = vrot.lane.b32.xlu0 %v3353, 64
        %v3371 = vpop.permute.xlu0 %3370
        %v3373 = vsel %vm316, %v3338, %v3356
        %v3374 = vsel %vm419, %v3373, %v3360
        %v3375 = vsel %vm424, %v3374, %v3363
        %v3376 = vsel %vm316, %v3348, %v3367
        %v3377 = vsel %vm419, %v3376, %v3371
        %3378 = vst [vmem:[%s315] sm:$0x7f] %v3375
        %vm3379 = vcmask 784384
        %3380 = vst.msk [vmem:[%s315 + $0x8] sm:$0x7f] %vm3379, %v3377
        %v3381 = vld [vmem:[%s6] sm:$0x1]
        %v3382 = vld [vmem:[%s5] sm:$0xff]
        %v3383 = vld [vmem:[%s5 + $0x8] sm:$0xff]
        %v3384 = vld [vmem:[%s5 + $0x10] sm:$0xff]
        %v3385 = vld [vmem:[%s5 + $0x18] sm:$0xff]
        %v3386 = vld [vmem:[%s5 + $0x20] sm:$0xff]
        %v3387 = vld [vmem:[%s5 + $0x28] sm:$0xff]
        %v3388 = vld [vmem:[%s5 + $0x30] sm:$0xff]
        %v3389 = vld [vmem:[%s5 + $0x38] sm:$0xff]
        %v3390 = vld [vmem:[%s5 + $0x40] sm:$0xff]
        %v3391 = vld [vmem:[%s5 + $0x48] sm:$0xff]
        %v3392 = vld [vmem:[%s5 + $0x50] sm:$0xff]
        %v3393 = vld [vmem:[%s5 + $0x58] sm:$0xff]
        %v3394 = vld [vmem:[%s5 + $0x60] sm:$0xff]
        %v3395 = vld [vmem:[%s5 + $0x68] sm:$0xff]
        %v3396 = vld [vmem:[%s5 + $0x70] sm:$0xff]
        %v3397 = vld [vmem:[%s5 + $0x78] sm:$0xff]
        %v3398 = vld [vmem:[%s5 + $0x80] sm:$0xff]
        %v3399 = vld [vmem:[%s5 + $0x88] sm:$0xff]
        %v3400 = vld [vmem:[%s5 + $0x90] sm:$0xff]
        %v3401 = vld [vmem:[%s5 + $0x98] sm:$0xff]
        %v3402 = vld [vmem:[%s5 + $0xa0] sm:$0xff]
        %v3403 = vld [vmem:[%s5 + $0xa8] sm:$0xff]
        %v3404 = vld [vmem:[%s5 + $0xb0] sm:$0xff]
        %v3405 = vld [vmem:[%s5 + $0xb8] sm:$0xff]
        %v3406 = vld [vmem:[%s5 + $0xc0] sm:$0xff]
        %v3407 = vld [vmem:[%s5 + $0xc8] sm:$0xff]
        %v3408 = vld [vmem:[%s5 + $0xd0] sm:$0xff]
        %v3409 = vld [vmem:[%s5 + $0xd8] sm:$0xff]
        %v3411 = vsel %vm424, %v3377, 0
        %3413 = vmatpush.msra.mxu0 %v3397
        %3414 = vmatpush.msra.mxu0 %v3396
        %3415 = vmatpush.msra.mxu0 %v3395
        %3416 = vmatpush.msra.mxu0 %v3394
        %3417 = vmatpush.msra.mxu0 %v3393
        %3418 = vmatpush.msra.mxu0 %v3392
        %3419 = vmatpush.msra.mxu0 %v3391
        %3420 = vmatpush.msra.mxu0 %v3390
        %3421 = vmatpush.msra.mxu0 %v3389
        %3422 = vmatpush.msra.mxu0 %v3388
        %3423 = vmatpush.msra.mxu0 %v3387
        %3424 = vmatpush.msra.mxu0 %v3386
        %3425 = vmatpush.msra.mxu0 %v3385
        %3426 = vmatpush.msra.mxu0 %v3384
        %3427 = vmatpush.msra.mxu0 %v3383
        %3428 = vmatpush.msra.mxu0 %v3382
        %3429 = vmatmul.f32.gmra.mxu0 %v3375
        %v3430 = vpop.f32.mrf.mxu0
        %v3431 = vadd.f32 0.0, %v3430
        %3432 = vdwg.mxu0
        %3433 = vmatpush.msra.mxu0 0.0
        %3434 = vmatpush.msra.mxu0 0.0
        %3435 = vmatpush.msra.mxu0 0.0
        %3436 = vmatpush.msra.mxu0 0.0
        %3437 = vmatpush.msra.mxu0 %v3409
        %3438 = vmatpush.msra.mxu0 %v3408
        %3439 = vmatpush.msra.mxu0 %v3407
        %3440 = vmatpush.msra.mxu0 %v3406
        %3441 = vmatpush.msra.mxu0 %v3405
        %3442 = vmatpush.msra.mxu0 %v3404
        %3443 = vmatpush.msra.mxu0 %v3403
        %3444 = vmatpush.msra.mxu0 %v3402
        %3445 = vmatpush.msra.mxu0 %v3401
        %3446 = vmatpush.msra.mxu0 %v3400
        %3447 = vmatpush.msra.mxu0 %v3399
        %3448 = vmatpush.msra.mxu0 %v3398
        %3449 = vmatmul.f32.gmra.mxu0 %v3411
        %v3450 = vpop.f32.mrf.mxu0
        %v3451 = vadd.f32 %v3431, %v3450
        %3452 = vdwg.mxu0
        %v3453 = vadd.f32 %v3381, %v3451
        %v3454 = vld [vmem:[%s5 + $0xe0] sm:$0xff]
        %v3455 = vld [vmem:[%s5 + $0xe8] sm:$0xff]
        %v3456 = vld [vmem:[%s5 + $0xf0] sm:$0xff]
        %v3457 = vld [vmem:[%s5 + $0xf8] sm:$0xff]
        %v3458 = vld [vmem:[%s5 + $0x100] sm:$0xff]
        %v3459 = vld [vmem:[%s5 + $0x108] sm:$0xff]
        %v3460 = vld [vmem:[%s5 + $0x110] sm:$0xff]
        %v3461 = vld [vmem:[%s5 + $0x118] sm:$0xff]
        %v3462 = vld [vmem:[%s5 + $0x120] sm:$0xff]
        %v3463 = vld [vmem:[%s5 + $0x128] sm:$0xff]
        %v3464 = vld [vmem:[%s5 + $0x130] sm:$0xff]
        %v3465 = vld [vmem:[%s5 + $0x138] sm:$0xff]
        %v3466 = vld [vmem:[%s5 + $0x140] sm:$0xff]
        %v3467 = vld [vmem:[%s5 + $0x148] sm:$0xff]
        %v3468 = vld [vmem:[%s5 + $0x150] sm:$0xff]
        %v3469 = vld [vmem:[%s5 + $0x158] sm:$0xff]
        %v3470 = vld [vmem:[%s5 + $0x160] sm:$0xff]
        %v3471 = vld [vmem:[%s5 + $0x168] sm:$0xff]
        %v3472 = vld [vmem:[%s5 + $0x170] sm:$0xff]
        %v3473 = vld [vmem:[%s5 + $0x178] sm:$0xff]
        %v3474 = vld [vmem:[%s5 + $0x180] sm:$0xff]
        %v3475 = vld [vmem:[%s5 + $0x188] sm:$0xff]
        %v3476 = vld [vmem:[%s5 + $0x190] sm:$0xff]
        %v3477 = vld [vmem:[%s5 + $0x198] sm:$0xff]
        %v3478 = vld [vmem:[%s5 + $0x1a0] sm:$0xff]
        %v3479 = vld [vmem:[%s5 + $0x1a8] sm:$0xff]
        %v3480 = vld [vmem:[%s5 + $0x1b0] sm:$0xff]
        %v3481 = vld [vmem:[%s5 + $0x1b8] sm:$0xff]
        %v3483 = vrot.slane %v3375, 1
        %v3484 = vrot.slane %v3377, 1
        %v3486 = vsel %vm424, %v3484, 0
        %3488 = vmatpush.msra.mxu0 %v3469
        %3489 = vmatpush.msra.mxu0 %v3468
        %3490 = vmatpush.msra.mxu0 %v3467
        %3491 = vmatpush.msra.mxu0 %v3466
        %3492 = vmatpush.msra.mxu0 %v3465
        %3493 = vmatpush.msra.mxu0 %v3464
        %3494 = vmatpush.msra.mxu0 %v3463
        %3495 = vmatpush.msra.mxu0 %v3462
        %3496 = vmatpush.msra.mxu0 %v3461
        %3497 = vmatpush.msra.mxu0 %v3460
        %3498 = vmatpush.msra.mxu0 %v3459
        %3499 = vmatpush.msra.mxu0 %v3458
        %3500 = vmatpush.msra.mxu0 %v3457
        %3501 = vmatpush.msra.mxu0 %v3456
        %3502 = vmatpush.msra.mxu0 %v3455
        %3503 = vmatpush.msra.mxu0 %v3454
        %3504 = vmatmul.f32.gmra.mxu0 %v3483
        %v3505 = vpop.f32.mrf.mxu0
        %v3506 = vadd.f32 0.0, %v3505
        %3507 = vdwg.mxu0
        %3508 = vmatpush.msra.mxu0 0.0
        %3509 = vmatpush.msra.mxu0 0.0
        %3510 = vmatpush.msra.mxu0 0.0
        %3511 = vmatpush.msra.mxu0 0.0
        %3512 = vmatpush.msra.mxu0 %v3481
        %3513 = vmatpush.msra.mxu0 %v3480
        %3514 = vmatpush.msra.mxu0 %v3479
        %3515 = vmatpush.msra.mxu0 %v3478
        %3516 = vmatpush.msra.mxu0 %v3477
        %3517 = vmatpush.msra.mxu0 %v3476
        %3518 = vmatpush.msra.mxu0 %v3475
        %3519 = vmatpush.msra.mxu0 %v3474
        %3520 = vmatpush.msra.mxu0 %v3473
        %3521 = vmatpush.msra.mxu0 %v3472
        %3522 = vmatpush.msra.mxu0 %v3471
        %3523 = vmatpush.msra.mxu0 %v3470
        %3524 = vmatmul.f32.gmra.mxu0 %v3486
        %v3525 = vpop.f32.mrf.mxu0
        %v3526 = vadd.f32 %v3506, %v3525
        %3527 = vdwg.mxu0
        %v3528 = vadd.f32 %v3453, %v3526
        %v3529 = vld [vmem:[%s5 + $0x1c0] sm:$0xff]
        %v3530 = vld [vmem:[%s5 + $0x1c8] sm:$0xff]
        %v3531 = vld [vmem:[%s5 + $0x1d0] sm:$0xff]
        %v3532 = vld [vmem:[%s5 + $0x1d8] sm:$0xff]
        %v3533 = vld [vmem:[%s5 + $0x1e0] sm:$0xff]
        %v3534 = vld [vmem:[%s5 + $0x1e8] sm:$0xff]
        %v3535 = vld [vmem:[%s5 + $0x1f0] sm:$0xff]
        %v3536 = vld [vmem:[%s5 + $0x1f8] sm:$0xff]
        %v3537 = vld [vmem:[%s5 + $0x200] sm:$0xff]
        %v3538 = vld [vmem:[%s5 + $0x208] sm:$0xff]
        %v3539 = vld [vmem:[%s5 + $0x210] sm:$0xff]
        %v3540 = vld [vmem:[%s5 + $0x218] sm:$0xff]
        %v3541 = vld [vmem:[%s5 + $0x220] sm:$0xff]
        %v3542 = vld [vmem:[%s5 + $0x228] sm:$0xff]
        %v3543 = vld [vmem:[%s5 + $0x230] sm:$0xff]
        %v3544 = vld [vmem:[%s5 + $0x238] sm:$0xff]
        %v3545 = vld [vmem:[%s5 + $0x240] sm:$0xff]
        %v3546 = vld [vmem:[%s5 + $0x248] sm:$0xff]
        %v3547 = vld [vmem:[%s5 + $0x250] sm:$0xff]
        %v3548 = vld [vmem:[%s5 + $0x258] sm:$0xff]
        %v3549 = vld [vmem:[%s5 + $0x260] sm:$0xff]
        %v3550 = vld [vmem:[%s5 + $0x268] sm:$0xff]
        %v3551 = vld [vmem:[%s5 + $0x270] sm:$0xff]
        %v3552 = vld [vmem:[%s5 + $0x278] sm:$0xff]
        %v3553 = vld [vmem:[%s5 + $0x280] sm:$0xff]
        %v3554 = vld [vmem:[%s5 + $0x288] sm:$0xff]
        %v3555 = vld [vmem:[%s5 + $0x290] sm:$0xff]
        %v3556 = vld [vmem:[%s5 + $0x298] sm:$0xff]
        %v3557 = vrot.slane %v3375, 2
        %v3558 = vrot.slane %v3377, 2
        %v3560 = vsel %vm424, %v3558, 0
        %3562 = vmatpush.msra.mxu0 %v3544
        %3563 = vmatpush.msra.mxu0 %v3543
        %3564 = vmatpush.msra.mxu0 %v3542
        %3565 = vmatpush.msra.mxu0 %v3541
        %3566 = vmatpush.msra.mxu0 %v3540
        %3567 = vmatpush.msra.mxu0 %v3539
        %3568 = vmatpush.msra.mxu0 %v3538
        %3569 = vmatpush.msra.mxu0 %v3537
        %3570 = vmatpush.msra.mxu0 %v3536
        %3571 = vmatpush.msra.mxu0 %v3535
        %3572 = vmatpush.msra.mxu0 %v3534
        %3573 = vmatpush.msra.mxu0 %v3533
        %3574 = vmatpush.msra.mxu0 %v3532
        %3575 = vmatpush.msra.mxu0 %v3531
        %3576 = vmatpush.msra.mxu0 %v3530
        %3577 = vmatpush.msra.mxu0 %v3529
        %3578 = vmatmul.f32.gmra.mxu0 %v3557
        %v3579 = vpop.f32.mrf.mxu0
        %v3580 = vadd.f32 0.0, %v3579
        %3581 = vdwg.mxu0
        %3582 = vmatpush.msra.mxu0 0.0
        %3583 = vmatpush.msra.mxu0 0.0
        %3584 = vmatpush.msra.mxu0 0.0
        %3585 = vmatpush.msra.mxu0 0.0
        %3586 = vmatpush.msra.mxu0 %v3556
        %3587 = vmatpush.msra.mxu0 %v3555
        %3588 = vmatpush.msra.mxu0 %v3554
        %3589 = vmatpush.msra.mxu0 %v3553
        %3590 = vmatpush.msra.mxu0 %v3552
        %3591 = vmatpush.msra.mxu0 %v3551
        %3592 = vmatpush.msra.mxu0 %v3550
        %3593 = vmatpush.msra.mxu0 %v3549
        %3594 = vmatpush.msra.mxu0 %v3548
        %3595 = vmatpush.msra.mxu0 %v3547
        %3596 = vmatpush.msra.mxu0 %v3546
        %3597 = vmatpush.msra.mxu0 %v3545
        %3598 = vmatmul.f32.gmra.mxu0 %v3560
        %v3599 = vpop.f32.mrf.mxu0
        %v3600 = vadd.f32 %v3580, %v3599
        %3601 = vdwg.mxu0
        %v3602 = vadd.f32 %v3528, %v3600
        %v3603 = vld [vmem:[%s5 + $0x2a0] sm:$0xff]
        %v3604 = vld [vmem:[%s5 + $0x2a8] sm:$0xff]
        %v3605 = vld [vmem:[%s5 + $0x2b0] sm:$0xff]
        %v3606 = vld [vmem:[%s5 + $0x2b8] sm:$0xff]
        %v3607 = vld [vmem:[%s5 + $0x2c0] sm:$0xff]
        %v3608 = vld [vmem:[%s5 + $0x2c8] sm:$0xff]
        %v3609 = vld [vmem:[%s5 + $0x2d0] sm:$0xff]
        %v3610 = vld [vmem:[%s5 + $0x2d8] sm:$0xff]
        %v3611 = vld [vmem:[%s5 + $0x2e0] sm:$0xff]
        %v3612 = vld [vmem:[%s5 + $0x2e8] sm:$0xff]
        %v3613 = vld [vmem:[%s5 + $0x2f0] sm:$0xff]
        %v3614 = vld [vmem:[%s5 + $0x2f8] sm:$0xff]
        %v3615 = vld [vmem:[%s5 + $0x300] sm:$0xff]
        %v3616 = vld [vmem:[%s5 + $0x308] sm:$0xff]
        %v3617 = vld [vmem:[%s5 + $0x310] sm:$0xff]
        %v3618 = vld [vmem:[%s5 + $0x318] sm:$0xff]
        %v3619 = vld [vmem:[%s5 + $0x320] sm:$0xff]
        %v3620 = vld [vmem:[%s5 + $0x328] sm:$0xff]
        %v3621 = vld [vmem:[%s5 + $0x330] sm:$0xff]
        %v3622 = vld [vmem:[%s5 + $0x338] sm:$0xff]
        %v3623 = vld [vmem:[%s5 + $0x340] sm:$0xff]
        %v3624 = vld [vmem:[%s5 + $0x348] sm:$0xff]
        %v3625 = vld [vmem:[%s5 + $0x350] sm:$0xff]
        %v3626 = vld [vmem:[%s5 + $0x358] sm:$0xff]
        %v3627 = vld [vmem:[%s5 + $0x360] sm:$0xff]
        %v3628 = vld [vmem:[%s5 + $0x368] sm:$0xff]
        %v3629 = vld [vmem:[%s5 + $0x370] sm:$0xff]
        %v3630 = vld [vmem:[%s5 + $0x378] sm:$0xff]
        %v3631 = vrot.slane %v3375, 3
        %v3632 = vrot.slane %v3377, 3
        %v3634 = vsel %vm424, %v3632, 0
        %3636 = vmatpush.msra.mxu0 %v3618
        %3637 = vmatpush.msra.mxu0 %v3617
        %3638 = vmatpush.msra.mxu0 %v3616
        %3639 = vmatpush.msra.mxu0 %v3615
        %3640 = vmatpush.msra.mxu0 %v3614
        %3641 = vmatpush.msra.mxu0 %v3613
        %3642 = vmatpush.msra.mxu0 %v3612
        %3643 = vmatpush.msra.mxu0 %v3611
        %3644 = vmatpush.msra.mxu0 %v3610
        %3645 = vmatpush.msra.mxu0 %v3609
        %3646 = vmatpush.msra.mxu0 %v3608
        %3647 = vmatpush.msra.mxu0 %v3607
        %3648 = vmatpush.msra.mxu0 %v3606
        %3649 = vmatpush.msra.mxu0 %v3605
        %3650 = vmatpush.msra.mxu0 %v3604
        %3651 = vmatpush.msra.mxu0 %v3603
        %3652 = vmatmul.f32.gmra.mxu0 %v3631
        %v3653 = vpop.f32.mrf.mxu0
        %v3654 = vadd.f32 0.0, %v3653
        %3655 = vdwg.mxu0
        %3656 = vmatpush.msra.mxu0 0.0
        %3657 = vmatpush.msra.mxu0 0.0
        %3658 = vmatpush.msra.mxu0 0.0
        %3659 = vmatpush.msra.mxu0 0.0
        %3660 = vmatpush.msra.mxu0 %v3630
        %3661 = vmatpush.msra.mxu0 %v3629
        %3662 = vmatpush.msra.mxu0 %v3628
        %3663 = vmatpush.msra.mxu0 %v3627
        %3664 = vmatpush.msra.mxu0 %v3626
        %3665 = vmatpush.msra.mxu0 %v3625
        %3666 = vmatpush.msra.mxu0 %v3624
        %3667 = vmatpush.msra.mxu0 %v3623
        %3668 = vmatpush.msra.mxu0 %v3622
        %3669 = vmatpush.msra.mxu0 %v3621
        %3670 = vmatpush.msra.mxu0 %v3620
        %3671 = vmatpush.msra.mxu0 %v3619
        %3672 = vmatmul.f32.gmra.mxu0 %v3634
        %v3673 = vpop.f32.mrf.mxu0
        %v3674 = vadd.f32 %v3654, %v3673
        %3675 = vdwg.mxu0
        %v3676 = vadd.f32 %v3602, %v3674
        %v3677 = vld [vmem:[%s5 + $0x380] sm:$0xff]
        %v3678 = vld [vmem:[%s5 + $0x388] sm:$0xff]
        %v3679 = vld [vmem:[%s5 + $0x390] sm:$0xff]
        %v3680 = vld [vmem:[%s5 + $0x398] sm:$0xff]
        %v3681 = vld [vmem:[%s5 + $0x3a0] sm:$0xff]
        %v3682 = vld [vmem:[%s5 + $0x3a8] sm:$0xff]
        %v3683 = vld [vmem:[%s5 + $0x3b0] sm:$0xff]
        %v3684 = vld [vmem:[%s5 + $0x3b8] sm:$0xff]
        %v3685 = vld [vmem:[%s5 + $0x3c0] sm:$0xff]
        %v3686 = vld [vmem:[%s5 + $0x3c8] sm:$0xff]
        %v3687 = vld [vmem:[%s5 + $0x3d0] sm:$0xff]
        %v3688 = vld [vmem:[%s5 + $0x3d8] sm:$0xff]
        %v3689 = vld [vmem:[%s5 + $0x3e0] sm:$0xff]
        %v3690 = vld [vmem:[%s5 + $0x3e8] sm:$0xff]
        %v3691 = vld [vmem:[%s5 + $0x3f0] sm:$0xff]
        %v3692 = vld [vmem:[%s5 + $0x3f8] sm:$0xff]
        %v3693 = vld [vmem:[%s5 + $0x400] sm:$0xff]
        %v3694 = vld [vmem:[%s5 + $0x408] sm:$0xff]
        %v3695 = vld [vmem:[%s5 + $0x410] sm:$0xff]
        %v3696 = vld [vmem:[%s5 + $0x418] sm:$0xff]
        %v3697 = vld [vmem:[%s5 + $0x420] sm:$0xff]
        %v3698 = vld [vmem:[%s5 + $0x428] sm:$0xff]
        %v3699 = vld [vmem:[%s5 + $0x430] sm:$0xff]
        %v3700 = vld [vmem:[%s5 + $0x438] sm:$0xff]
        %v3701 = vld [vmem:[%s5 + $0x440] sm:$0xff]
        %v3702 = vld [vmem:[%s5 + $0x448] sm:$0xff]
        %v3703 = vld [vmem:[%s5 + $0x450] sm:$0xff]
        %v3704 = vld [vmem:[%s5 + $0x458] sm:$0xff]
        %v3705 = vrot.slane %v3375, 4
        %v3706 = vrot.slane %v3377, 4
        %v3708 = vsel %vm424, %v3706, 0
        %3710 = vmatpush.msra.mxu0 %v3692
        %3711 = vmatpush.msra.mxu0 %v3691
        %3712 = vmatpush.msra.mxu0 %v3690
        %3713 = vmatpush.msra.mxu0 %v3689
        %3714 = vmatpush.msra.mxu0 %v3688
        %3715 = vmatpush.msra.mxu0 %v3687
        %3716 = vmatpush.msra.mxu0 %v3686
        %3717 = vmatpush.msra.mxu0 %v3685
        %3718 = vmatpush.msra.mxu0 %v3684
        %3719 = vmatpush.msra.mxu0 %v3683
        %3720 = vmatpush.msra.mxu0 %v3682
        %3721 = vmatpush.msra.mxu0 %v3681
        %3722 = vmatpush.msra.mxu0 %v3680
        %3723 = vmatpush.msra.mxu0 %v3679
        %3724 = vmatpush.msra.mxu0 %v3678
        %3725 = vmatpush.msra.mxu0 %v3677
        %3726 = vmatmul.f32.gmra.mxu0 %v3705
        %v3727 = vpop.f32.mrf.mxu0
        %v3728 = vadd.f32 0.0, %v3727
        %3729 = vdwg.mxu0
        %3730 = vmatpush.msra.mxu0 0.0
        %3731 = vmatpush.msra.mxu0 0.0
        %3732 = vmatpush.msra.mxu0 0.0
        %3733 = vmatpush.msra.mxu0 0.0
        %3734 = vmatpush.msra.mxu0 %v3704
        %3735 = vmatpush.msra.mxu0 %v3703
        %3736 = vmatpush.msra.mxu0 %v3702
        %3737 = vmatpush.msra.mxu0 %v3701
        %3738 = vmatpush.msra.mxu0 %v3700
        %3739 = vmatpush.msra.mxu0 %v3699
        %3740 = vmatpush.msra.mxu0 %v3698
        %3741 = vmatpush.msra.mxu0 %v3697
        %3742 = vmatpush.msra.mxu0 %v3696
        %3743 = vmatpush.msra.mxu0 %v3695
        %3744 = vmatpush.msra.mxu0 %v3694
        %3745 = vmatpush.msra.mxu0 %v3693
        %3746 = vmatmul.f32.gmra.mxu0 %v3708
        %v3747 = vpop.f32.mrf.mxu0
        %v3748 = vadd.f32 %v3728, %v3747
        %3749 = vdwg.mxu0
        %v3750 = vadd.f32 %v3676, %v3748
        %v3751 = vld [vmem:[%s5 + $0x460] sm:$0xff]
        %v3752 = vld [vmem:[%s5 + $0x468] sm:$0xff]
        %v3753 = vld [vmem:[%s5 + $0x470] sm:$0xff]
        %v3754 = vld [vmem:[%s5 + $0x478] sm:$0xff]
        %v3755 = vld [vmem:[%s5 + $0x480] sm:$0xff]
        %v3756 = vld [vmem:[%s5 + $0x488] sm:$0xff]
        %v3757 = vld [vmem:[%s5 + $0x490] sm:$0xff]
        %v3758 = vld [vmem:[%s5 + $0x498] sm:$0xff]
        %v3759 = vld [vmem:[%s5 + $0x4a0] sm:$0xff]
        %v3760 = vld [vmem:[%s5 + $0x4a8] sm:$0xff]
        %v3761 = vld [vmem:[%s5 + $0x4b0] sm:$0xff]
        %v3762 = vld [vmem:[%s5 + $0x4b8] sm:$0xff]
        %v3763 = vld [vmem:[%s5 + $0x4c0] sm:$0xff]
        %v3764 = vld [vmem:[%s5 + $0x4c8] sm:$0xff]
        %v3765 = vld [vmem:[%s5 + $0x4d0] sm:$0xff]
        %v3766 = vld [vmem:[%s5 + $0x4d8] sm:$0xff]
        %v3767 = vld [vmem:[%s5 + $0x4e0] sm:$0xff]
        %v3768 = vld [vmem:[%s5 + $0x4e8] sm:$0xff]
        %v3769 = vld [vmem:[%s5 + $0x4f0] sm:$0xff]
        %v3770 = vld [vmem:[%s5 + $0x4f8] sm:$0xff]
        %v3771 = vld [vmem:[%s5 + $0x500] sm:$0xff]
        %v3772 = vld [vmem:[%s5 + $0x508] sm:$0xff]
        %v3773 = vld [vmem:[%s5 + $0x510] sm:$0xff]
        %v3774 = vld [vmem:[%s5 + $0x518] sm:$0xff]
        %v3775 = vld [vmem:[%s5 + $0x520] sm:$0xff]
        %v3776 = vld [vmem:[%s5 + $0x528] sm:$0xff]
        %v3777 = vld [vmem:[%s5 + $0x530] sm:$0xff]
        %v3778 = vld [vmem:[%s5 + $0x538] sm:$0xff]
        %v3779 = vrot.slane %v3375, 5
        %v3780 = vrot.slane %v3377, 5
        %v3782 = vsel %vm424, %v3780, 0
        %3784 = vmatpush.msra.mxu0 %v3766
        %3785 = vmatpush.msra.mxu0 %v3765
        %3786 = vmatpush.msra.mxu0 %v3764
        %3787 = vmatpush.msra.mxu0 %v3763
        %3788 = vmatpush.msra.mxu0 %v3762
        %3789 = vmatpush.msra.mxu0 %v3761
        %3790 = vmatpush.msra.mxu0 %v3760
        %3791 = vmatpush.msra.mxu0 %v3759
        %3792 = vmatpush.msra.mxu0 %v3758
        %3793 = vmatpush.msra.mxu0 %v3757
        %3794 = vmatpush.msra.mxu0 %v3756
        %3795 = vmatpush.msra.mxu0 %v3755
        %3796 = vmatpush.msra.mxu0 %v3754
        %3797 = vmatpush.msra.mxu0 %v3753
        %3798 = vmatpush.msra.mxu0 %v3752
        %3799 = vmatpush.msra.mxu0 %v3751
        %3800 = vmatmul.f32.gmra.mxu0 %v3779
        %v3801 = vpop.f32.mrf.mxu0
        %v3802 = vadd.f32 0.0, %v3801
        %3803 = vdwg.mxu0
        %3804 = vmatpush.msra.mxu0 0.0
        %3805 = vmatpush.msra.mxu0 0.0
        %3806 = vmatpush.msra.mxu0 0.0
        %3807 = vmatpush.msra.mxu0 0.0
        %3808 = vmatpush.msra.mxu0 %v3778
        %3809 = vmatpush.msra.mxu0 %v3777
        %3810 = vmatpush.msra.mxu0 %v3776
        %3811 = vmatpush.msra.mxu0 %v3775
        %3812 = vmatpush.msra.mxu0 %v3774
        %3813 = vmatpush.msra.mxu0 %v3773
        %3814 = vmatpush.msra.mxu0 %v3772
        %3815 = vmatpush.msra.mxu0 %v3771
        %3816 = vmatpush.msra.mxu0 %v3770
        %3817 = vmatpush.msra.mxu0 %v3769
        %3818 = vmatpush.msra.mxu0 %v3768
        %3819 = vmatpush.msra.mxu0 %v3767
        %3820 = vmatmul.f32.gmra.mxu0 %v3782
        %v3821 = vpop.f32.mrf.mxu0
        %v3822 = vadd.f32 %v3802, %v3821
        %3823 = vdwg.mxu0
        %v3824 = vadd.f32 %v3750, %v3822
        %v3825 = vld [vmem:[%s5 + $0x540] sm:$0xff]
        %v3826 = vld [vmem:[%s5 + $0x548] sm:$0xff]
        %v3827 = vld [vmem:[%s5 + $0x550] sm:$0xff]
        %v3828 = vld [vmem:[%s5 + $0x558] sm:$0xff]
        %v3829 = vld [vmem:[%s5 + $0x560] sm:$0xff]
        %v3830 = vld [vmem:[%s5 + $0x568] sm:$0xff]
        %v3831 = vld [vmem:[%s5 + $0x570] sm:$0xff]
        %v3832 = vld [vmem:[%s5 + $0x578] sm:$0xff]
        %v3833 = vld [vmem:[%s5 + $0x580] sm:$0xff]
        %v3834 = vld [vmem:[%s5 + $0x588] sm:$0xff]
        %v3835 = vld [vmem:[%s5 + $0x590] sm:$0xff]
        %v3836 = vld [vmem:[%s5 + $0x598] sm:$0xff]
        %v3837 = vld [vmem:[%s5 + $0x5a0] sm:$0xff]
        %v3838 = vld [vmem:[%s5 + $0x5a8] sm:$0xff]
        %v3839 = vld [vmem:[%s5 + $0x5b0] sm:$0xff]
        %v3840 = vld [vmem:[%s5 + $0x5b8] sm:$0xff]
        %v3841 = vld [vmem:[%s5 + $0x5c0] sm:$0xff]
        %v3842 = vld [vmem:[%s5 + $0x5c8] sm:$0xff]
        %v3843 = vld [vmem:[%s5 + $0x5d0] sm:$0xff]
        %v3844 = vld [vmem:[%s5 + $0x5d8] sm:$0xff]
        %v3845 = vld [vmem:[%s5 + $0x5e0] sm:$0xff]
        %v3846 = vld [vmem:[%s5 + $0x5e8] sm:$0xff]
        %v3847 = vld [vmem:[%s5 + $0x5f0] sm:$0xff]
        %v3848 = vld [vmem:[%s5 + $0x5f8] sm:$0xff]
        %v3849 = vld [vmem:[%s5 + $0x600] sm:$0xff]
        %v3850 = vld [vmem:[%s5 + $0x608] sm:$0xff]
        %v3851 = vld [vmem:[%s5 + $0x610] sm:$0xff]
        %v3852 = vld [vmem:[%s5 + $0x618] sm:$0xff]
        %v3853 = vrot.slane %v3375, 6
        %v3854 = vrot.slane %v3377, 6
        %v3856 = vsel %vm424, %v3854, 0
        %3858 = vmatpush.msra.mxu0 %v3840
        %3859 = vmatpush.msra.mxu0 %v3839
        %3860 = vmatpush.msra.mxu0 %v3838
        %3861 = vmatpush.msra.mxu0 %v3837
        %3862 = vmatpush.msra.mxu0 %v3836
        %3863 = vmatpush.msra.mxu0 %v3835
        %3864 = vmatpush.msra.mxu0 %v3834
        %3865 = vmatpush.msra.mxu0 %v3833
        %3866 = vmatpush.msra.mxu0 %v3832
        %3867 = vmatpush.msra.mxu0 %v3831
        %3868 = vmatpush.msra.mxu0 %v3830
        %3869 = vmatpush.msra.mxu0 %v3829
        %3870 = vmatpush.msra.mxu0 %v3828
        %3871 = vmatpush.msra.mxu0 %v3827
        %3872 = vmatpush.msra.mxu0 %v3826
        %3873 = vmatpush.msra.mxu0 %v3825
        %3874 = vmatmul.f32.gmra.mxu0 %v3853
        %v3875 = vpop.f32.mrf.mxu0
        %v3876 = vadd.f32 0.0, %v3875
        %3877 = vdwg.mxu0
        %3878 = vmatpush.msra.mxu0 0.0
        %3879 = vmatpush.msra.mxu0 0.0
        %3880 = vmatpush.msra.mxu0 0.0
        %3881 = vmatpush.msra.mxu0 0.0
        %3882 = vmatpush.msra.mxu0 %v3852
        %3883 = vmatpush.msra.mxu0 %v3851
        %3884 = vmatpush.msra.mxu0 %v3850
        %3885 = vmatpush.msra.mxu0 %v3849
        %3886 = vmatpush.msra.mxu0 %v3848
        %3887 = vmatpush.msra.mxu0 %v3847
        %3888 = vmatpush.msra.mxu0 %v3846
        %3889 = vmatpush.msra.mxu0 %v3845
        %3890 = vmatpush.msra.mxu0 %v3844
        %3891 = vmatpush.msra.mxu0 %v3843
        %3892 = vmatpush.msra.mxu0 %v3842
        %3893 = vmatpush.msra.mxu0 %v3841
        %3894 = vmatmul.f32.gmra.mxu0 %v3856
        %v3895 = vpop.f32.mrf.mxu0
        %v3896 = vadd.f32 %v3876, %v3895
        %3897 = vdwg.mxu0
        %v3898 = vadd.f32 %v3824, %v3896
        %vm3899 = vcmask 73728
        %3900 = vst.msk [vmem:[%s298] sm:$0x1] %vm3899, %v3898
        %s3901 = sand.u32 %s183, 1
        %s3902 = scalar_lea.sflag [#allocation5], %s3901
        %s3903 = sand.u32 %s183, 1
        %s3904 = scalar_lea.vmem [#allocation4], %s3903
        %p3905 = scmp.lt.s32.totalorder %s23, 1
        %s3906 = scalar_select %p3905, %s23, 1
        %s3907 = smul.addr %s3906, 2
        %s3908 = smul.addr %s3907, 8
        %s3909 = scalar_lea.vmem %s8, %s3908
        // Predicated region
        $region49: #{cnn_forward.1} parent=47 // pred_check
          %p3910 = pneg %p193
        $region50: #{cnn_forward.1} parent=47 // pred_check_branch
          %3912 = sbr.rel (%p3910) target = $region52
        $region51: #{cnn_forward.1} parent=47 // pred_region
          %3914 = vsyncadd %s3902, 0
          %s3915 = scalar_lea.hbm %s7, %s23
          %s3917 = sshll.u32 %s3904, 4
          %s3918 = int_to_ptr.vmem [resolvable:$true] %s3917
          %s3919 = sshll.u32 %s3915, 4
          %s3920 = int_to_ptr.hbm [resolvable:$true] %s3919
          %3922 = dma.vmem_to_hbm [thread:$0]  %s3918, 16, %s3920, %s3902
        $region52: #{cnn_forward.1} parent=47 // pred_fallthru
          _
        // Predicated region
        $region53: #{cnn_forward.1} parent=47 // pred_check
          %p3923 = pneg %p219
        $region54: #{cnn_forward.1} parent=47 // pred_check_branch
          %3925 = sbr.rel (%p3923) target = $region56
        $region55: #{cnn_forward.1} parent=47 // pred_region
          _
        $region56: #{cnn_forward.1} parent=47 // pred_fallthru
          _
      $region48: #{cnn_forward.1} parent=5 // pred_fallthru
        _
      %p3926 = scmp.le.s32.totalorder 2, %s18
      // Predicated region
      $region57: #{cnn_forward.1} parent=5 // pred_check
        %p3927 = pneg %p3926
      $region58: #{cnn_forward.1} parent=5 // pred_check_branch
        %3929 = sbr.rel (%p3927) target = $region60
      $region59: #{cnn_forward.1} parent=5 // pred_region
        %s3930 = ssub.s32 %s18, 2
        // Predicated region
        $region61: #{cnn_forward.1} parent=59 // pred_check
          %p3931 = pneg %p199
        $region62: #{cnn_forward.1} parent=59 // pred_check_branch
          %3933 = sbr.rel (%p3931) target = $region64
        $region63: #{cnn_forward.1} parent=59 // pred_region
          %s3934 = sand.u32 %s184, 1
          %s3935 = scalar_lea.sflag [#allocation5], %s3934
          %s3936 = sand.u32 %s184, 1
          %s3937 = scalar_lea.vmem [#allocation4], %s3936
          %3939 = dma.done %s3935, 16
        $region64: #{cnn_forward.1} parent=59 // pred_fallthru
          _
        // Predicated region
        $region65: #{cnn_forward.1} parent=59 // pred_check
          %p3940 = pneg %p225
        $region66: #{cnn_forward.1} parent=59 // pred_check_branch
          %3942 = sbr.rel (%p3940) target = $region68
        $region67: #{cnn_forward.1} parent=59 // pred_region
          %p3943 = scmp.lt.s32.totalorder %s24, 1
          %s3944 = scalar_select %p3943, %s24, 1
          %s3945 = smul.addr %s3944, 2
          %s3946 = smul.addr %s3945, 8
          %s3947 = scalar_lea.vmem %s8, %s3946
        $region68: #{cnn_forward.1} parent=59 // pred_fallthru
          _
      $region60: #{cnn_forward.1} parent=5 // pred_fallthru
        _
    $region6: #{cnn_forward.1} parent=1 // loop_footer
      %s22 = sadd.s32 1, %s18
    $region7: #{cnn_forward.1} parent=1 // loop_footer_branch
      %17 = sbr.rel target = $region3
    $region8: #{cnn_forward.1} parent=1 // loop_exit
      _
    %3948 = vsyncpa [#allocation5], 1
    %s3949 = scalar_lea.sflag [#allocation5], 1
    %3950 = vsyncpa %s3949, 1

</llo_original>
